<compile_context>
chip_gen: v6e
topology: v6e:2x2x1
jax: 0.10.0
libtpu: 0.0.40
codegen_flags: <defaults>
</compile_context>

<pallas_src>
import functools

import jax
import jax.numpy as jnp
from jax.experimental import pallas as pl
from jax.experimental.pallas import tpu as pltpu


# ----------------------------------------------------------------------------
# Fused kernel: one grid step == one batch image, channel-major (C, N) tiles.
# ----------------------------------------------------------------------------
def _ms_ssa_kernel(x_ref, wqkv_ref, bqkv_ref, mask_ref, wproj_ref, bproj_ref,
                   o_ref, vspk_ref, sin_sc, satt_sc,
                   *, T, C, N, chunk_size, tau, v_th, attn_v_th):
    f32 = jnp.float32
    inv_tau = 1.0 / tau

    # ---- Stage 1: shortcut LIF over T (hard reset, decay_input). Spikes are parked
    #      in a (C, T*N) VMEM scratch so the q/k/v conv is one lane-dense matmul. ----
    v_mem = jnp.zeros((C, N), f32)
    for t in range(T):                       # T static & small -> unrolled recurrence
        xt = x_ref[t, 0]                     # (C, N)
        v_mem = v_mem + (xt - v_mem) * inv_tau
        spk = (v_mem >= v_th).astype(f32)
        v_mem = v_mem * (1.0 - spk)
        sin_sc[:, t * N:(t + 1) * N] = spk

    # ---- Stage 2: fused q/k/v 1x1 conv (+folded BN): ONE (3C,C)@(C,T*N) matmul. ----
    y = jnp.dot(wqkv_ref[...], sin_sc[...], preferred_element_type=f32)
    y = y + bqkv_ref[...]                    # (3C, T*N); bias broadcast once

    # ---- Stage 3: per chunk: q/k/v LIF -> STAtten -> attn LIF (t order preserved). --
    v_qkv = jnp.zeros((3 * C, N), f32)       # q/k/v LIFs share tau/v_th -> joint slab
    v_att = jnp.zeros((C, N), f32)
    for c0 in range(0, T, chunk_size):
        spikes = []
        for dt in range(chunk_size):
            t = c0 + dt
            yt = y[:, t * N:(t + 1) * N]
            v_qkv = v_qkv + (yt - v_qkv) * inv_tau
            s = (v_qkv >= v_th).astype(f32)
            v_qkv = v_qkv * (1.0 - s)
            spikes.append(s)
            vspk_ref[t, 0] = s[2 * C:, :]    # v-branch spikes (module return value)

        # Full-channel K V^T summed over the chunk (channels on both axes).  With the
        # block-diagonal mask*scaling this is exactly per-head attention: masked
        # cross-head entries only ever multiply q by 0.
        m = jnp.zeros((C, C), f32)
        for dt in range(chunk_size):
            k_s = spikes[dt][C:2 * C, :]     # (C, N), sublane-aligned slices
            v_s = spikes[dt][2 * C:, :]
            m = m + jax.lax.dot_general(      # m[d,c] += sum_n v[d,n]*k[c,n]
                v_s, k_s, (((1,), (1,)), ((), ())), preferred_element_type=f32)
        a_t = m * mask_ref[...]              # (scaling * blockdiag(K^T V))^T, (C, C)

        for dt in range(chunk_size):
            t = c0 + dt
            q_s = spikes[dt][:C, :]
            att = jnp.dot(a_t, q_s, preferred_element_type=f32)     # (C, N)
            # attn LIF (v_th = 0.5)
            v_att = v_att + (att - v_att) * inv_tau
            sa = (v_att >= attn_v_th).astype(f32)
            v_att = v_att * (1.0 - sa)
            satt_sc[:, t * N:(t + 1) * N] = sa

    # ---- Stage 4: proj 1x1 conv (+bias, folded BN) as ONE matmul, then residual. ----
    yp = jnp.dot(wproj_ref[...], satt_sc[...], preferred_element_type=f32)
    yp = yp + bproj_ref[...]                 # (C, T*N)
    for t in range(T):
        o_ref[t, 0] = yp[:, t * N:(t + 1) * N] + x_ref[t, 0]   # identity = raw input


# ----------------------------------------------------------------------------
# Forward pass (attention_mode='STAtten', dvs=False)
# ----------------------------------------------------------------------------
def ms_ssa_conv_forward(x_nchw, params, *, num_heads=8, chunk_size=2):
    T, B, C, H, W = x_nchw.shape
    assert C % num_heads == 0 and T % chunk_size == 0
    N = H * W
    head_dim = C // num_heads

    x4 = x_nchw.reshape(T, B, C, N)          # free reshape: H,W contiguous
    scaling = 1.0 / H                        # dvs=False branch of the reference

    # Precomputed block-diagonal (per-head) mask * scaling, symmetric (C, C) constant.
    hid = jnp.arange(C) // head_dim
    mask = (hid[:, None] == hid[None, :]).astype(jnp.float32) * scaling

    kernel = functools.partial(
        _ms_ssa_kernel, T=T, C=C, N=N, chunk_size=chunk_size,
        tau=2.0, v_th=1.0, attn_v_th=0.5)

    x_out4, v4 = pl.pallas_call(
        kernel,
        out_shape=(jax.ShapeDtypeStruct((T, B, C, N), jnp.float32),
                   jax.ShapeDtypeStruct((T, B, C, N), jnp.float32)),
        grid=(B,),
        in_specs=[
            pl.BlockSpec((T, 1, C, N), lambda b: (0, b, 0, 0)),   # x (NCHW, per batch)
            pl.BlockSpec((3 * C, C), lambda b: (0, 0)),           # W_qkv (BN folded)
            pl.BlockSpec((3 * C, 1), lambda b: (0, 0)),           # b_qkv
            pl.BlockSpec((C, C), lambda b: (0, 0)),               # blockdiag mask*scale
            pl.BlockSpec((C, C), lambda b: (0, 0)),               # W_proj (BN folded)
            pl.BlockSpec((C, 1), lambda b: (0, 0)),               # b_proj
        ],
        out_specs=(
            pl.BlockSpec((T, 1, C, N), lambda b: (0, b, 0, 0)),   # x_out (NCHW)
            pl.BlockSpec((T, 1, C, N), lambda b: (0, b, 0, 0)),   # v spikes (NCHW)
        ),
        scratch_shapes=[
            pltpu.VMEM((C, T * N), jnp.float32),   # shortcut-LIF spikes (all T)
            pltpu.VMEM((C, T * N), jnp.float32),   # attn-LIF spikes (all T)
        ],
        compiler_params=pltpu.CompilerParams(dimension_semantics=("parallel",)),
    )(x4, params["qkv_w"], params["qkv_b"], mask, params["proj_w"], params["proj_b"])

    x_out = x_out4.reshape(T, B, C, H, W)
    # Reference `v` layout: (T, B, heads, N, head_dim); v4 is (T, B, C, N) channel-major.
    v_out = jnp.transpose(v4.reshape(T, B, num_heads, head_dim, N), (0, 1, 2, 4, 3))
    return x_out, v_out, None  # (x, v, hook)


# ----------------------------------------------------------------------------
# Parameter construction (mirrors nn.Conv2d(1x1) + BatchNorm2d in eval mode).
# BN scale is folded into the conv weight rows (channel-major: y = (s*W) @ x + b).
# ----------------------------------------------------------------------------
def fold_bn(gamma, beta, mean, var, eps=1e-5, conv_bias=None):
    scale = gamma / jnp.sqrt(var + eps)
    bias = beta - mean * scale
    if conv_bias is not None:
        bias = bias + conv_bias * scale
    return scale, bias


def make_params(key, dim):
    def branch(k, has_conv_bias):
        ks = jax.random.split(k, 6)
        w = jax.random.normal(ks[0], (dim, dim), jnp.float32) * 0.3
        gamma = 1.0 + 0.1 * jax.random.normal(ks[1], (dim,), jnp.float32)
        beta = 0.1 * jax.random.normal(ks[2], (dim,), jnp.float32)
        mean = 0.05 * jax.random.normal(ks[3], (dim,), jnp.float32)
        var = 0.9 + 0.1 * jnp.abs(jax.random.normal(ks[4], (dim,), jnp.float32))
        cb = 0.1 * jax.random.normal(ks[5], (dim,), jnp.float32) if has_conv_bias else None
        scale, bias = fold_bn(gamma, beta, mean, var, conv_bias=cb)
        return w * scale[:, None], bias

    kq, kk, kv, kp = jax.random.split(key, 4)
    wq, bq = branch(kq, False)
    wk, bk = branch(kk, False)
    wv, bv = branch(kv, False)
    wp, bp = branch(kp, True)   # proj_conv has a bias
    # TODO(synk): talking_heads Conv1d + talking_heads_lif exist in __init__ but are
    # only exercised in the SDT branch; not needed for attention_mode='STAtten'.
    return {
        "qkv_w": jnp.concatenate([wq, wk, wv], axis=0),            # (3C, C) f32
        "qkv_b": jnp.concatenate([bq, bk, bv], axis=0)[:, None],   # (3C, 1) f32
        "proj_w": wp,                                              # (C, C)  f32
        "proj_b": bp[:, None],                                     # (C, 1)  f32
    }


if __name__ == "__main__":
    T, B, C, H, W = 4, 2, 32, 8, 8
    num_heads, chunk_size = 8, 2

    key = jax.random.PRNGKey(0)
    k_x, k_p = jax.random.split(key)
    x = 2.0 * jax.random.normal(k_x, (T, B, C, H, W), jnp.float32)
    params = make_params(k_p, C)

    fwd = jax.jit(functools.partial(ms_ssa_conv_forward, num_heads=num_heads,
                                    chunk_size=chunk_size))
    x_out, v_out, _ = fwd(x, params)
    jax.block_until_ready((x_out, v_out))

    assert x_out.shape == (T, B, C, H, W)
    assert v_out.shape == (T, B, num_heads, H * W, C // num_heads)
    assert bool(jnp.all(jnp.isfinite(x_out)))
    print("KERNEL_OK")
</pallas_src>

<mosaic_0001>
module attributes {stable_mosaic.version = 11 : i64} {
  func.func @_ms_ssa_kernel(%arg0: i32, %arg1: memref<4x1x32x64xf32, #tpu.memory_space<vmem>>, %arg2: memref<96x32xf32, #tpu.memory_space<vmem>>, %arg3: memref<96x1xf32, #tpu.memory_space<vmem>>, %arg4: memref<32x32xf32, #tpu.memory_space<vmem>>, %arg5: memref<32x32xf32, #tpu.memory_space<vmem>>, %arg6: memref<32x1xf32, #tpu.memory_space<vmem>>, %arg7: memref<4x1x32x64xf32, #tpu.memory_space<vmem>>, %arg8: memref<4x1x32x64xf32, #tpu.memory_space<vmem>>, %arg9: memref<32x256xf32, #tpu.memory_space<vmem>>, %arg10: memref<32x256xf32, #tpu.memory_space<vmem>>) attributes {dimension_semantics = [#tpu.dimension_semantics<parallel>], iteration_bounds = array<i64: 2>, scalar_prefetch = 0 : i64, scratch_operands = 2 : i64, tpu.core_type = #tpu.core_type<tc>, window_params = [{transform_indices = @transform_0, window_bounds = array<i64: 4, 1, 32, 64>}, {pipeline_mode = #tpu.pipeline_mode<synchronous>, transform_indices = @transform_1, window_bounds = array<i64: 96, 32>}, {pipeline_mode = #tpu.pipeline_mode<synchronous>, transform_indices = @transform_2, window_bounds = array<i64: 96, 1>}, {pipeline_mode = #tpu.pipeline_mode<synchronous>, transform_indices = @transform_3, window_bounds = array<i64: 32, 32>}, {pipeline_mode = #tpu.pipeline_mode<synchronous>, transform_indices = @transform_4, window_bounds = array<i64: 32, 32>}, {pipeline_mode = #tpu.pipeline_mode<synchronous>, transform_indices = @transform_5, window_bounds = array<i64: 32, 1>}, {transform_indices = @transform_6, window_bounds = array<i64: 4, 1, 32, 64>}, {transform_indices = @transform_7, window_bounds = array<i64: 4, 1, 32, 64>}]} {
    %cst = arith.constant 0.000000e+00 : f32
    %0 = vector.broadcast %cst : f32 to vector<32x64xf32>
    %c0 = arith.constant 0 : index
    %c0_0 = arith.constant 0 : index
    %c0_1 = arith.constant 0 : index
    %c0_2 = arith.constant 0 : index
    %1 = vector.load %arg1[%c0, %c0_0, %c0_1, %c0_2] : memref<4x1x32x64xf32, #tpu.memory_space<vmem>>, vector<1x1x32x64xf32>
    %2 = vector.shape_cast %1 : vector<1x1x32x64xf32> to vector<32x64xf32>
    %3 = arith.subf %2, %0 : vector<32x64xf32>
    %cst_3 = arith.constant 5.000000e-01 : f32
    %4 = vector.broadcast %cst_3 : f32 to vector<32x64xf32>
    %5 = arith.mulf %3, %4 : vector<32x64xf32>
    %6 = arith.addf %0, %5 : vector<32x64xf32>
    %cst_4 = arith.constant 1.000000e+00 : f32
    %7 = vector.broadcast %cst_4 : f32 to vector<32x64xf32>
    %8 = arith.cmpf oge, %6, %7 : vector<32x64xf32>
    %9 = arith.extui %8 : vector<32x64xi1> to vector<32x64xi32>
    %10 = arith.sitofp %9 : vector<32x64xi32> to vector<32x64xf32>
    %cst_5 = arith.constant 1.000000e+00 : f32
    %11 = vector.broadcast %cst_5 : f32 to vector<32x64xf32>
    %12 = arith.subf %11, %10 : vector<32x64xf32>
    %13 = arith.mulf %6, %12 : vector<32x64xf32>
    %c0_6 = arith.constant 0 : index
    %c0_7 = arith.constant 0 : index
    %14 = vector.load %arg9[%c0_6, %c0_7] : memref<32x256xf32, #tpu.memory_space<vmem>>, vector<32x64xf32>
    tpu.vector_store %arg9[%c0_6, %c0_7], %10 {strides = array<i32>} : memref<32x256xf32, #tpu.memory_space<vmem>>, vector<32x64xf32>,
    %c1 = arith.constant 1 : index
    %c0_8 = arith.constant 0 : index
    %c0_9 = arith.constant 0 : index
    %c0_10 = arith.constant 0 : index
    %15 = vector.load %arg1[%c1, %c0_8, %c0_9, %c0_10] : memref<4x1x32x64xf32, #tpu.memory_space<vmem>>, vector<1x1x32x64xf32>
    %16 = vector.shape_cast %15 : vector<1x1x32x64xf32> to vector<32x64xf32>
    %17 = arith.subf %16, %13 : vector<32x64xf32>
    %cst_11 = arith.constant 5.000000e-01 : f32
    %18 = vector.broadcast %cst_11 : f32 to vector<32x64xf32>
    %19 = arith.mulf %17, %18 : vector<32x64xf32>
    %20 = arith.addf %13, %19 : vector<32x64xf32>
    %cst_12 = arith.constant 1.000000e+00 : f32
    %21 = vector.broadcast %cst_12 : f32 to vector<32x64xf32>
    %22 = arith.cmpf oge, %20, %21 : vector<32x64xf32>
    %23 = arith.extui %22 : vector<32x64xi1> to vector<32x64xi32>
    %24 = arith.sitofp %23 : vector<32x64xi32> to vector<32x64xf32>
    %cst_13 = arith.constant 1.000000e+00 : f32
    %25 = vector.broadcast %cst_13 : f32 to vector<32x64xf32>
    %26 = arith.subf %25, %24 : vector<32x64xf32>
    %27 = arith.mulf %20, %26 : vector<32x64xf32>
    %c0_14 = arith.constant 0 : index
    %c64 = arith.constant 64 : index
    %28 = vector.load %arg9[%c0_14, %c64] : memref<32x256xf32, #tpu.memory_space<vmem>>, vector<32x64xf32>
    tpu.vector_store %arg9[%c0_14, %c64], %24 {strides = array<i32>} : memref<32x256xf32, #tpu.memory_space<vmem>>, vector<32x64xf32>,
    %c2 = arith.constant 2 : index
    %c0_15 = arith.constant 0 : index
    %c0_16 = arith.constant 0 : index
    %c0_17 = arith.constant 0 : index
    %29 = vector.load %arg1[%c2, %c0_15, %c0_16, %c0_17] : memref<4x1x32x64xf32, #tpu.memory_space<vmem>>, vector<1x1x32x64xf32>
    %30 = vector.shape_cast %29 : vector<1x1x32x64xf32> to vector<32x64xf32>
    %31 = arith.subf %30, %27 : vector<32x64xf32>
    %cst_18 = arith.constant 5.000000e-01 : f32
    %32 = vector.broadcast %cst_18 : f32 to vector<32x64xf32>
    %33 = arith.mulf %31, %32 : vector<32x64xf32>
    %34 = arith.addf %27, %33 : vector<32x64xf32>
    %cst_19 = arith.constant 1.000000e+00 : f32
    %35 = vector.broadcast %cst_19 : f32 to vector<32x64xf32>
    %36 = arith.cmpf oge, %34, %35 : vector<32x64xf32>
    %37 = arith.extui %36 : vector<32x64xi1> to vector<32x64xi32>
    %38 = arith.sitofp %37 : vector<32x64xi32> to vector<32x64xf32>
    %cst_20 = arith.constant 1.000000e+00 : f32
    %39 = vector.broadcast %cst_20 : f32 to vector<32x64xf32>
    %40 = arith.subf %39, %38 : vector<32x64xf32>
    %41 = arith.mulf %34, %40 : vector<32x64xf32>
    %c0_21 = arith.constant 0 : index
    %c128 = arith.constant 128 : index
    %42 = vector.load %arg9[%c0_21, %c128] : memref<32x256xf32, #tpu.memory_space<vmem>>, vector<32x64xf32>
    tpu.vector_store %arg9[%c0_21, %c128], %38 {strides = array<i32>} : memref<32x256xf32, #tpu.memory_space<vmem>>, vector<32x64xf32>,
    %c3 = arith.constant 3 : index
    %c0_22 = arith.constant 0 : index
    %c0_23 = arith.constant 0 : index
    %c0_24 = arith.constant 0 : index
    %43 = vector.load %arg1[%c3, %c0_22, %c0_23, %c0_24] : memref<4x1x32x64xf32, #tpu.memory_space<vmem>>, vector<1x1x32x64xf32>
    %44 = vector.shape_cast %43 : vector<1x1x32x64xf32> to vector<32x64xf32>
    %45 = arith.subf %44, %41 : vector<32x64xf32>
    %cst_25 = arith.constant 5.000000e-01 : f32
    %46 = vector.broadcast %cst_25 : f32 to vector<32x64xf32>
    %47 = arith.mulf %45, %46 : vector<32x64xf32>
    %48 = arith.addf %41, %47 : vector<32x64xf32>
    %cst_26 = arith.constant 1.000000e+00 : f32
    %49 = vector.broadcast %cst_26 : f32 to vector<32x64xf32>
    %50 = arith.cmpf oge, %48, %49 : vector<32x64xf32>
    %51 = arith.extui %50 : vector<32x64xi1> to vector<32x64xi32>
    %52 = arith.sitofp %51 : vector<32x64xi32> to vector<32x64xf32>
    %c0_27 = arith.constant 0 : index
    %c192 = arith.constant 192 : index
    %53 = vector.load %arg9[%c0_27, %c192] : memref<32x256xf32, #tpu.memory_space<vmem>>, vector<32x64xf32>
    tpu.vector_store %arg9[%c0_27, %c192], %52 {strides = array<i32>} : memref<32x256xf32, #tpu.memory_space<vmem>>, vector<32x64xf32>,
    %c0_28 = arith.constant 0 : index
    %c0_29 = arith.constant 0 : index
    %54 = vector.load %arg2[%c0_28, %c0_29] : memref<96x32xf32, #tpu.memory_space<vmem>>, vector<96x32xf32>
    %c0_30 = arith.constant 0 : index
    %c0_31 = arith.constant 0 : index
    %55 = vector.load %arg9[%c0_30, %c0_31] : memref<32x256xf32, #tpu.memory_space<vmem>>, vector<32x256xf32>
    %cst_32 = arith.constant dense<0.000000e+00> : vector<96x256xf32>
    %56 = tpu.matmul %54, %55, %cst_32 {dimension_numbers = #tpu.dot_dimension_numbers<[1], [0], [0], [1], [0, 0, 1, 1], [], []>} : vector<96x32xf32>, vector<32x256xf32>, vector<96x256xf32> -> vector<96x256xf32>
    %c0_33 = arith.constant 0 : index
    %c0_34 = arith.constant 0 : index
    %57 = vector.load %arg3[%c0_33, %c0_34] : memref<96x1xf32, #tpu.memory_space<vmem>>, vector<96x1xf32>
    %58 = vector.broadcast %57 : vector<96x1xf32> to vector<96x256xf32>
    %59 = arith.addf %56, %58 : vector<96x256xf32>
    %cst_35 = arith.constant 0.000000e+00 : f32
    %60 = vector.broadcast %cst_35 : f32 to vector<96x64xf32>
    %cst_36 = arith.constant 0.000000e+00 : f32
    %61 = vector.broadcast %cst_36 : f32 to vector<32x64xf32>
    %62 = vector.extract_strided_slice %59 {offsets = [0, 0], sizes = [96, 64], strides = [1, 1]} : vector<96x256xf32> to vector<96x64xf32>
    %63 = arith.subf %62, %60 : vector<96x64xf32>
    %cst_37 = arith.constant 5.000000e-01 : f32
    %64 = vector.broadcast %cst_37 : f32 to vector<96x64xf32>
    %65 = arith.mulf %63, %64 : vector<96x64xf32>
    %66 = arith.addf %60, %65 : vector<96x64xf32>
    %cst_38 = arith.constant 1.000000e+00 : f32
    %67 = vector.broadcast %cst_38 : f32 to vector<96x64xf32>
    %68 = arith.cmpf oge, %66, %67 : vector<96x64xf32>
    %69 = arith.extui %68 : vector<96x64xi1> to vector<96x64xi32>
    %70 = arith.sitofp %69 : vector<96x64xi32> to vector<96x64xf32>
    %cst_39 = arith.constant 1.000000e+00 : f32
    %71 = vector.broadcast %cst_39 : f32 to vector<96x64xf32>
    %72 = arith.subf %71, %70 : vector<96x64xf32>
    %73 = arith.mulf %66, %72 : vector<96x64xf32>
    %74 = vector.extract_strided_slice %70 {offsets = [64, 0], sizes = [32, 64], strides = [1, 1]} : vector<96x64xf32> to vector<32x64xf32>
    %c0_40 = arith.constant 0 : index
    %c0_41 = arith.constant 0 : index
    %c0_42 = arith.constant 0 : index
    %c0_43 = arith.constant 0 : index
    %75 = vector.load %arg8[%c0_40, %c0_41, %c0_42, %c0_43] : memref<4x1x32x64xf32, #tpu.memory_space<vmem>>, vector<1x1x32x64xf32>
    %76 = vector.shape_cast %75 : vector<1x1x32x64xf32> to vector<32x64xf32>
    %77 = vector.shape_cast %74 : vector<32x64xf32> to vector<1x1x32x64xf32>
    tpu.vector_store %arg8[%c0_40, %c0_41, %c0_42, %c0_43], %77 {strides = array<i32>} : memref<4x1x32x64xf32, #tpu.memory_space<vmem>>, vector<1x1x32x64xf32>,
    %78 = vector.extract_strided_slice %59 {offsets = [0, 64], sizes = [96, 64], strides = [1, 1]} : vector<96x256xf32> to vector<96x64xf32>
    %79 = arith.subf %78, %73 : vector<96x64xf32>
    %cst_44 = arith.constant 5.000000e-01 : f32
    %80 = vector.broadcast %cst_44 : f32 to vector<96x64xf32>
    %81 = arith.mulf %79, %80 : vector<96x64xf32>
    %82 = arith.addf %73, %81 : vector<96x64xf32>
    %cst_45 = arith.constant 1.000000e+00 : f32
    %83 = vector.broadcast %cst_45 : f32 to vector<96x64xf32>
    %84 = arith.cmpf oge, %82, %83 : vector<96x64xf32>
    %85 = arith.extui %84 : vector<96x64xi1> to vector<96x64xi32>
    %86 = arith.sitofp %85 : vector<96x64xi32> to vector<96x64xf32>
    %cst_46 = arith.constant 1.000000e+00 : f32
    %87 = vector.broadcast %cst_46 : f32 to vector<96x64xf32>
    %88 = arith.subf %87, %86 : vector<96x64xf32>
    %89 = arith.mulf %82, %88 : vector<96x64xf32>
    %90 = vector.extract_strided_slice %86 {offsets = [64, 0], sizes = [32, 64], strides = [1, 1]} : vector<96x64xf32> to vector<32x64xf32>
    %c1_47 = arith.constant 1 : index
    %c0_48 = arith.constant 0 : index
    %c0_49 = arith.constant 0 : index
    %c0_50 = arith.constant 0 : index
    %91 = vector.load %arg8[%c1_47, %c0_48, %c0_49, %c0_50] : memref<4x1x32x64xf32, #tpu.memory_space<vmem>>, vector<1x1x32x64xf32>
    %92 = vector.shape_cast %91 : vector<1x1x32x64xf32> to vector<32x64xf32>
    %93 = vector.shape_cast %90 : vector<32x64xf32> to vector<1x1x32x64xf32>
    tpu.vector_store %arg8[%c1_47, %c0_48, %c0_49, %c0_50], %93 {strides = array<i32>} : memref<4x1x32x64xf32, #tpu.memory_space<vmem>>, vector<1x1x32x64xf32>,
    %cst_51 = arith.constant 0.000000e+00 : f32
    %94 = vector.broadcast %cst_51 : f32 to vector<32x32xf32>
    %95 = vector.extract_strided_slice %70 {offsets = [32, 0], sizes = [32, 64], strides = [1, 1]} : vector<96x64xf32> to vector<32x64xf32>
    %96 = vector.extract_strided_slice %70 {offsets = [64, 0], sizes = [32, 64], strides = [1, 1]} : vector<96x64xf32> to vector<32x64xf32>
    %cst_52 = arith.constant dense<0.000000e+00> : vector<32x32xf32>
    %97 = tpu.matmul %96, %95, %cst_52 {dimension_numbers = #tpu.dot_dimension_numbers<[1], [1], [0], [0], [0, 0, 1, 0], [], []>} : vector<32x64xf32>, vector<32x64xf32>, vector<32x32xf32> -> vector<32x32xf32>
    %98 = arith.addf %94, %97 : vector<32x32xf32>
    %99 = vector.extract_strided_slice %86 {offsets = [32, 0], sizes = [32, 64], strides = [1, 1]} : vector<96x64xf32> to vector<32x64xf32>
    %100 = vector.extract_strided_slice %86 {offsets = [64, 0], sizes = [32, 64], strides = [1, 1]} : vector<96x64xf32> to vector<32x64xf32>
    %cst_53 = arith.constant dense<0.000000e+00> : vector<32x32xf32>
    %101 = tpu.matmul %100, %99, %cst_53 {dimension_numbers = #tpu.dot_dimension_numbers<[1], [1], [0], [0], [0, 0, 1, 0], [], []>} : vector<32x64xf32>, vector<32x64xf32>, vector<32x32xf32> -> vector<32x32xf32>
    %102 = arith.addf %98, %101 : vector<32x32xf32>
    %c0_54 = arith.constant 0 : index
    %c0_55 = arith.constant 0 : index
    %103 = vector.load %arg4[%c0_54, %c0_55] : memref<32x32xf32, #tpu.memory_space<vmem>>, vector<32x32xf32>
    %104 = arith.mulf %102, %103 : vector<32x32xf32>
    %105 = vector.extract_strided_slice %70 {offsets = [0, 0], sizes = [32, 64], strides = [1, 1]} : vector<96x64xf32> to vector<32x64xf32>
    %cst_56 = arith.constant dense<0.000000e+00> : vector<32x64xf32>
    %106 = tpu.matmul %104, %105, %cst_56 {dimension_numbers = #tpu.dot_dimension_numbers<[1], [0], [0], [1], [0, 0, 1, 1], [], []>} : vector<32x32xf32>, vector<32x64xf32>, vector<32x64xf32> -> vector<32x64xf32>
    %107 = arith.subf %106, %61 : vector<32x64xf32>
    %cst_57 = arith.constant 5.000000e-01 : f32
    %108 = vector.broadcast %cst_57 : f32 to vector<32x64xf32>
    %109 = arith.mulf %107, %108 : vector<32x64xf32>
    %110 = arith.addf %61, %109 : vector<32x64xf32>
    %cst_58 = arith.constant 5.000000e-01 : f32
    %111 = vector.broadcast %cst_58 : f32 to vector<32x64xf32>
    %112 = arith.cmpf oge, %110, %111 : vector<32x64xf32>
    %113 = arith.extui %112 : vector<32x64xi1> to vector<32x64xi32>
    %114 = arith.sitofp %113 : vector<32x64xi32> to vector<32x64xf32>
    %cst_59 = arith.constant 1.000000e+00 : f32
    %115 = vector.broadcast %cst_59 : f32 to vector<32x64xf32>
    %116 = arith.subf %115, %114 : vector<32x64xf32>
    %117 = arith.mulf %110, %116 : vector<32x64xf32>
    %c0_60 = arith.constant 0 : index
    %c0_61 = arith.constant 0 : index
    %118 = vector.load %arg10[%c0_60, %c0_61] : memref<32x256xf32, #tpu.memory_space<vmem>>, vector<32x64xf32>
    tpu.vector_store %arg10[%c0_60, %c0_61], %114 {strides = array<i32>} : memref<32x256xf32, #tpu.memory_space<vmem>>, vector<32x64xf32>,
    %119 = vector.extract_strided_slice %86 {offsets = [0, 0], sizes = [32, 64], strides = [1, 1]} : vector<96x64xf32> to vector<32x64xf32>
    %cst_62 = arith.constant dense<0.000000e+00> : vector<32x64xf32>
    %120 = tpu.matmul %104, %119, %cst_62 {dimension_numbers = #tpu.dot_dimension_numbers<[1], [0], [0], [1], [0, 0, 1, 1], [], []>} : vector<32x32xf32>, vector<32x64xf32>, vector<32x64xf32> -> vector<32x64xf32>
    %121 = arith.subf %120, %117 : vector<32x64xf32>
    %cst_63 = arith.constant 5.000000e-01 : f32
    %122 = vector.broadcast %cst_63 : f32 to vector<32x64xf32>
    %123 = arith.mulf %121, %122 : vector<32x64xf32>
    %124 = arith.addf %117, %123 : vector<32x64xf32>
    %cst_64 = arith.constant 5.000000e-01 : f32
    %125 = vector.broadcast %cst_64 : f32 to vector<32x64xf32>
    %126 = arith.cmpf oge, %124, %125 : vector<32x64xf32>
    %127 = arith.extui %126 : vector<32x64xi1> to vector<32x64xi32>
    %128 = arith.sitofp %127 : vector<32x64xi32> to vector<32x64xf32>
    %cst_65 = arith.constant 1.000000e+00 : f32
    %129 = vector.broadcast %cst_65 : f32 to vector<32x64xf32>
    %130 = arith.subf %129, %128 : vector<32x64xf32>
    %131 = arith.mulf %124, %130 : vector<32x64xf32>
    %c0_66 = arith.constant 0 : index
    %c64_67 = arith.constant 64 : index
    %132 = vector.load %arg10[%c0_66, %c64_67] : memref<32x256xf32, #tpu.memory_space<vmem>>, vector<32x64xf32>
    tpu.vector_store %arg10[%c0_66, %c64_67], %128 {strides = array<i32>} : memref<32x256xf32, #tpu.memory_space<vmem>>, vector<32x64xf32>,
    %133 = vector.extract_strided_slice %59 {offsets = [0, 128], sizes = [96, 64], strides = [1, 1]} : vector<96x256xf32> to vector<96x64xf32>
    %134 = arith.subf %133, %89 : vector<96x64xf32>
    %cst_68 = arith.constant 5.000000e-01 : f32
    %135 = vector.broadcast %cst_68 : f32 to vector<96x64xf32>
    %136 = arith.mulf %134, %135 : vector<96x64xf32>
    %137 = arith.addf %89, %136 : vector<96x64xf32>
    %cst_69 = arith.constant 1.000000e+00 : f32
    %138 = vector.broadcast %cst_69 : f32 to vector<96x64xf32>
    %139 = arith.cmpf oge, %137, %138 : vector<96x64xf32>
    %140 = arith.extui %139 : vector<96x64xi1> to vector<96x64xi32>
    %141 = arith.sitofp %140 : vector<96x64xi32> to vector<96x64xf32>
    %cst_70 = arith.constant 1.000000e+00 : f32
    %142 = vector.broadcast %cst_70 : f32 to vector<96x64xf32>
    %143 = arith.subf %142, %141 : vector<96x64xf32>
    %144 = arith.mulf %137, %143 : vector<96x64xf32>
    %145 = vector.extract_strided_slice %141 {offsets = [64, 0], sizes = [32, 64], strides = [1, 1]} : vector<96x64xf32> to vector<32x64xf32>
    %c2_71 = arith.constant 2 : index
    %c0_72 = arith.constant 0 : index
    %c0_73 = arith.constant 0 : index
    %c0_74 = arith.constant 0 : index
    %146 = vector.load %arg8[%c2_71, %c0_72, %c0_73, %c0_74] : memref<4x1x32x64xf32, #tpu.memory_space<vmem>>, vector<1x1x32x64xf32>
    %147 = vector.shape_cast %146 : vector<1x1x32x64xf32> to vector<32x64xf32>
    %148 = vector.shape_cast %145 : vector<32x64xf32> to vector<1x1x32x64xf32>
    tpu.vector_store %arg8[%c2_71, %c0_72, %c0_73, %c0_74], %148 {strides = array<i32>} : memref<4x1x32x64xf32, #tpu.memory_space<vmem>>, vector<1x1x32x64xf32>,
    %149 = vector.extract_strided_slice %59 {offsets = [0, 192], sizes = [96, 64], strides = [1, 1]} : vector<96x256xf32> to vector<96x64xf32>
    %150 = arith.subf %149, %144 : vector<96x64xf32>
    %cst_75 = arith.constant 5.000000e-01 : f32
    %151 = vector.broadcast %cst_75 : f32 to vector<96x64xf32>
    %152 = arith.mulf %150, %151 : vector<96x64xf32>
    %153 = arith.addf %144, %152 : vector<96x64xf32>
    %cst_76 = arith.constant 1.000000e+00 : f32
    %154 = vector.broadcast %cst_76 : f32 to vector<96x64xf32>
    %155 = arith.cmpf oge, %153, %154 : vector<96x64xf32>
    %156 = arith.extui %155 : vector<96x64xi1> to vector<96x64xi32>
    %157 = arith.sitofp %156 : vector<96x64xi32> to vector<96x64xf32>
    %158 = vector.extract_strided_slice %157 {offsets = [64, 0], sizes = [32, 64], strides = [1, 1]} : vector<96x64xf32> to vector<32x64xf32>
    %c3_77 = arith.constant 3 : index
    %c0_78 = arith.constant 0 : index
    %c0_79 = arith.constant 0 : index
    %c0_80 = arith.constant 0 : index
    %159 = vector.load %arg8[%c3_77, %c0_78, %c0_79, %c0_80] : memref<4x1x32x64xf32, #tpu.memory_space<vmem>>, vector<1x1x32x64xf32>
    %160 = vector.shape_cast %159 : vector<1x1x32x64xf32> to vector<32x64xf32>
    %161 = vector.shape_cast %158 : vector<32x64xf32> to vector<1x1x32x64xf32>
    tpu.vector_store %arg8[%c3_77, %c0_78, %c0_79, %c0_80], %161 {strides = array<i32>} : memref<4x1x32x64xf32, #tpu.memory_space<vmem>>, vector<1x1x32x64xf32>,
    %cst_81 = arith.constant 0.000000e+00 : f32
    %162 = vector.broadcast %cst_81 : f32 to vector<32x32xf32>
    %163 = vector.extract_strided_slice %141 {offsets = [32, 0], sizes = [32, 64], strides = [1, 1]} : vector<96x64xf32> to vector<32x64xf32>
    %164 = vector.extract_strided_slice %141 {offsets = [64, 0], sizes = [32, 64], strides = [1, 1]} : vector<96x64xf32> to vector<32x64xf32>
    %cst_82 = arith.constant dense<0.000000e+00> : vector<32x32xf32>
    %165 = tpu.matmul %164, %163, %cst_82 {dimension_numbers = #tpu.dot_dimension_numbers<[1], [1], [0], [0], [0, 0, 1, 0], [], []>} : vector<32x64xf32>, vector<32x64xf32>, vector<32x32xf32> -> vector<32x32xf32>
    %166 = arith.addf %162, %165 : vector<32x32xf32>
    %167 = vector.extract_strided_slice %157 {offsets = [32, 0], sizes = [32, 64], strides = [1, 1]} : vector<96x64xf32> to vector<32x64xf32>
    %168 = vector.extract_strided_slice %157 {offsets = [64, 0], sizes = [32, 64], strides = [1, 1]} : vector<96x64xf32> to vector<32x64xf32>
    %cst_83 = arith.constant dense<0.000000e+00> : vector<32x32xf32>
    %169 = tpu.matmul %168, %167, %cst_83 {dimension_numbers = #tpu.dot_dimension_numbers<[1], [1], [0], [0], [0, 0, 1, 0], [], []>} : vector<32x64xf32>, vector<32x64xf32>, vector<32x32xf32> -> vector<32x32xf32>
    %170 = arith.addf %166, %169 : vector<32x32xf32>
    %c0_84 = arith.constant 0 : index
    %c0_85 = arith.constant 0 : index
    %171 = vector.load %arg4[%c0_84, %c0_85] : memref<32x32xf32, #tpu.memory_space<vmem>>, vector<32x32xf32>
    %172 = arith.mulf %170, %171 : vector<32x32xf32>
    %173 = vector.extract_strided_slice %141 {offsets = [0, 0], sizes = [32, 64], strides = [1, 1]} : vector<96x64xf32> to vector<32x64xf32>
    %cst_86 = arith.constant dense<0.000000e+00> : vector<32x64xf32>
    %174 = tpu.matmul %172, %173, %cst_86 {dimension_numbers = #tpu.dot_dimension_numbers<[1], [0], [0], [1], [0, 0, 1, 1], [], []>} : vector<32x32xf32>, vector<32x64xf32>, vector<32x64xf32> -> vector<32x64xf32>
    %175 = arith.subf %174, %131 : vector<32x64xf32>
    %cst_87 = arith.constant 5.000000e-01 : f32
    %176 = vector.broadcast %cst_87 : f32 to vector<32x64xf32>
    %177 = arith.mulf %175, %176 : vector<32x64xf32>
    %178 = arith.addf %131, %177 : vector<32x64xf32>
    %cst_88 = arith.constant 5.000000e-01 : f32
    %179 = vector.broadcast %cst_88 : f32 to vector<32x64xf32>
    %180 = arith.cmpf oge, %178, %179 : vector<32x64xf32>
    %181 = arith.extui %180 : vector<32x64xi1> to vector<32x64xi32>
    %182 = arith.sitofp %181 : vector<32x64xi32> to vector<32x64xf32>
    %cst_89 = arith.constant 1.000000e+00 : f32
    %183 = vector.broadcast %cst_89 : f32 to vector<32x64xf32>
    %184 = arith.subf %183, %182 : vector<32x64xf32>
    %185 = arith.mulf %178, %184 : vector<32x64xf32>
    %c0_90 = arith.constant 0 : index
    %c128_91 = arith.constant 128 : index
    %186 = vector.load %arg10[%c0_90, %c128_91] : memref<32x256xf32, #tpu.memory_space<vmem>>, vector<32x64xf32>
    tpu.vector_store %arg10[%c0_90, %c128_91], %182 {strides = array<i32>} : memref<32x256xf32, #tpu.memory_space<vmem>>, vector<32x64xf32>,
    %187 = vector.extract_strided_slice %157 {offsets = [0, 0], sizes = [32, 64], strides = [1, 1]} : vector<96x64xf32> to vector<32x64xf32>
    %cst_92 = arith.constant dense<0.000000e+00> : vector<32x64xf32>
    %188 = tpu.matmul %172, %187, %cst_92 {dimension_numbers = #tpu.dot_dimension_numbers<[1], [0], [0], [1], [0, 0, 1, 1], [], []>} : vector<32x32xf32>, vector<32x64xf32>, vector<32x64xf32> -> vector<32x64xf32>
    %189 = arith.subf %188, %185 : vector<32x64xf32>
    %cst_93 = arith.constant 5.000000e-01 : f32
    %190 = vector.broadcast %cst_93 : f32 to vector<32x64xf32>
    %191 = arith.mulf %189, %190 : vector<32x64xf32>
    %192 = arith.addf %185, %191 : vector<32x64xf32>
    %cst_94 = arith.constant 5.000000e-01 : f32
    %193 = vector.broadcast %cst_94 : f32 to vector<32x64xf32>
    %194 = arith.cmpf oge, %192, %193 : vector<32x64xf32>
    %195 = arith.extui %194 : vector<32x64xi1> to vector<32x64xi32>
    %196 = arith.sitofp %195 : vector<32x64xi32> to vector<32x64xf32>
    %c0_95 = arith.constant 0 : index
    %c192_96 = arith.constant 192 : index
    %197 = vector.load %arg10[%c0_95, %c192_96] : memref<32x256xf32, #tpu.memory_space<vmem>>, vector<32x64xf32>
    tpu.vector_store %arg10[%c0_95, %c192_96], %196 {strides = array<i32>} : memref<32x256xf32, #tpu.memory_space<vmem>>, vector<32x64xf32>,
    %c0_97 = arith.constant 0 : index
    %c0_98 = arith.constant 0 : index
    %198 = vector.load %arg5[%c0_97, %c0_98] : memref<32x32xf32, #tpu.memory_space<vmem>>, vector<32x32xf32>
    %c0_99 = arith.constant 0 : index
    %c0_100 = arith.constant 0 : index
    %199 = vector.load %arg10[%c0_99, %c0_100] : memref<32x256xf32, #tpu.memory_space<vmem>>, vector<32x256xf32>
    %cst_101 = arith.constant dense<0.000000e+00> : vector<32x256xf32>
    %200 = tpu.matmul %198, %199, %cst_101 {dimension_numbers = #tpu.dot_dimension_numbers<[1], [0], [0], [1], [0, 0, 1, 1], [], []>} : vector<32x32xf32>, vector<32x256xf32>, vector<32x256xf32> -> vector<32x256xf32>
    %c0_102 = arith.constant 0 : index
    %c0_103 = arith.constant 0 : index
    %201 = vector.load %arg6[%c0_102, %c0_103] : memref<32x1xf32, #tpu.memory_space<vmem>>, vector<32x1xf32>
    %202 = vector.broadcast %201 : vector<32x1xf32> to vector<32x256xf32>
    %203 = arith.addf %200, %202 : vector<32x256xf32>
    %204 = vector.extract_strided_slice %203 {offsets = [0, 0], sizes = [32, 64], strides = [1, 1]} : vector<32x256xf32> to vector<32x64xf32>
    %c0_104 = arith.constant 0 : index
    %c0_105 = arith.constant 0 : index
    %c0_106 = arith.constant 0 : index
    %c0_107 = arith.constant 0 : index
    %205 = vector.load %arg1[%c0_104, %c0_105, %c0_106, %c0_107] : memref<4x1x32x64xf32, #tpu.memory_space<vmem>>, vector<1x1x32x64xf32>
    %206 = vector.shape_cast %205 : vector<1x1x32x64xf32> to vector<32x64xf32>
    %207 = arith.addf %204, %206 : vector<32x64xf32>
    %c0_108 = arith.constant 0 : index
    %c0_109 = arith.constant 0 : index
    %c0_110 = arith.constant 0 : index
    %c0_111 = arith.constant 0 : index
    %208 = vector.load %arg7[%c0_108, %c0_109, %c0_110, %c0_111] : memref<4x1x32x64xf32, #tpu.memory_space<vmem>>, vector<1x1x32x64xf32>
    %209 = vector.shape_cast %208 : vector<1x1x32x64xf32> to vector<32x64xf32>
    %210 = vector.shape_cast %207 : vector<32x64xf32> to vector<1x1x32x64xf32>
    tpu.vector_store %arg7[%c0_108, %c0_109, %c0_110, %c0_111], %210 {strides = array<i32>} : memref<4x1x32x64xf32, #tpu.memory_space<vmem>>, vector<1x1x32x64xf32>,
    %211 = vector.extract_strided_slice %203 {offsets = [0, 64], sizes = [32, 64], strides = [1, 1]} : vector<32x256xf32> to vector<32x64xf32>
    %c1_112 = arith.constant 1 : index
    %c0_113 = arith.constant 0 : index
    %c0_114 = arith.constant 0 : index
    %c0_115 = arith.constant 0 : index
    %212 = vector.load %arg1[%c1_112, %c0_113, %c0_114, %c0_115] : memref<4x1x32x64xf32, #tpu.memory_space<vmem>>, vector<1x1x32x64xf32>
    %213 = vector.shape_cast %212 : vector<1x1x32x64xf32> to vector<32x64xf32>
    %214 = arith.addf %211, %213 : vector<32x64xf32>
    %c1_116 = arith.constant 1 : index
    %c0_117 = arith.constant 0 : index
    %c0_118 = arith.constant 0 : index
    %c0_119 = arith.constant 0 : index
    %215 = vector.load %arg7[%c1_116, %c0_117, %c0_118, %c0_119] : memref<4x1x32x64xf32, #tpu.memory_space<vmem>>, vector<1x1x32x64xf32>
    %216 = vector.shape_cast %215 : vector<1x1x32x64xf32> to vector<32x64xf32>
    %217 = vector.shape_cast %214 : vector<32x64xf32> to vector<1x1x32x64xf32>
    tpu.vector_store %arg7[%c1_116, %c0_117, %c0_118, %c0_119], %217 {strides = array<i32>} : memref<4x1x32x64xf32, #tpu.memory_space<vmem>>, vector<1x1x32x64xf32>,
    %218 = vector.extract_strided_slice %203 {offsets = [0, 128], sizes = [32, 64], strides = [1, 1]} : vector<32x256xf32> to vector<32x64xf32>
    %c2_120 = arith.constant 2 : index
    %c0_121 = arith.constant 0 : index
    %c0_122 = arith.constant 0 : index
    %c0_123 = arith.constant 0 : index
    %219 = vector.load %arg1[%c2_120, %c0_121, %c0_122, %c0_123] : memref<4x1x32x64xf32, #tpu.memory_space<vmem>>, vector<1x1x32x64xf32>
    %220 = vector.shape_cast %219 : vector<1x1x32x64xf32> to vector<32x64xf32>
    %221 = arith.addf %218, %220 : vector<32x64xf32>
    %c2_124 = arith.constant 2 : index
    %c0_125 = arith.constant 0 : index
    %c0_126 = arith.constant 0 : index
    %c0_127 = arith.constant 0 : index
    %222 = vector.load %arg7[%c2_124, %c0_125, %c0_126, %c0_127] : memref<4x1x32x64xf32, #tpu.memory_space<vmem>>, vector<1x1x32x64xf32>
    %223 = vector.shape_cast %222 : vector<1x1x32x64xf32> to vector<32x64xf32>
    %224 = vector.shape_cast %221 : vector<32x64xf32> to vector<1x1x32x64xf32>
    tpu.vector_store %arg7[%c2_124, %c0_125, %c0_126, %c0_127], %224 {strides = array<i32>} : memref<4x1x32x64xf32, #tpu.memory_space<vmem>>, vector<1x1x32x64xf32>,
    %225 = vector.extract_strided_slice %203 {offsets = [0, 192], sizes = [32, 64], strides = [1, 1]} : vector<32x256xf32> to vector<32x64xf32>
    %c3_128 = arith.constant 3 : index
    %c0_129 = arith.constant 0 : index
    %c0_130 = arith.constant 0 : index
    %c0_131 = arith.constant 0 : index
    %226 = vector.load %arg1[%c3_128, %c0_129, %c0_130, %c0_131] : memref<4x1x32x64xf32, #tpu.memory_space<vmem>>, vector<1x1x32x64xf32>
    %227 = vector.shape_cast %226 : vector<1x1x32x64xf32> to vector<32x64xf32>
    %228 = arith.addf %225, %227 : vector<32x64xf32>
    %c3_132 = arith.constant 3 : index
    %c0_133 = arith.constant 0 : index
    %c0_134 = arith.constant 0 : index
    %c0_135 = arith.constant 0 : index
    %229 = vector.load %arg7[%c3_132, %c0_133, %c0_134, %c0_135] : memref<4x1x32x64xf32, #tpu.memory_space<vmem>>, vector<1x1x32x64xf32>
    %230 = vector.shape_cast %229 : vector<1x1x32x64xf32> to vector<32x64xf32>
    %231 = vector.shape_cast %228 : vector<32x64xf32> to vector<1x1x32x64xf32>
    tpu.vector_store %arg7[%c3_132, %c0_133, %c0_134, %c0_135], %231 {strides = array<i32>} : memref<4x1x32x64xf32, #tpu.memory_space<vmem>>, vector<1x1x32x64xf32>,
    return
  }
  func.func @transform_0(%arg0: i32) -> (i32, i32, i32, i32) {
    %c0_i32 = arith.constant 0 : i32
    %c0_i32_0 = arith.constant 0 : i32
    %c0_i32_1 = arith.constant 0 : i32
    %c0_i32_2 = arith.constant 0 : i32
    return %c0_i32, %arg0, %c0_i32_0, %c0_i32_1 : i32, i32, i32, i32
  }
  func.func @transform_1(%arg0: i32) -> (i32, i32) {
    %c0_i32 = arith.constant 0 : i32
    %c0_i32_0 = arith.constant 0 : i32
    %c0_i32_1 = arith.constant 0 : i32
    return %c0_i32, %c0_i32_0 : i32, i32
  }
  func.func @transform_2(%arg0: i32) -> (i32, i32) {
    %c0_i32 = arith.constant 0 : i32
    %c0_i32_0 = arith.constant 0 : i32
    %c0_i32_1 = arith.constant 0 : i32
    return %c0_i32, %c0_i32_0 : i32, i32
  }
  func.func @transform_3(%arg0: i32) -> (i32, i32) {
    %c0_i32 = arith.constant 0 : i32
    %c0_i32_0 = arith.constant 0 : i32
    %c0_i32_1 = arith.constant 0 : i32
    return %c0_i32, %c0_i32_0 : i32, i32
  }
  func.func @transform_4(%arg0: i32) -> (i32, i32) {
    %c0_i32 = arith.constant 0 : i32
    %c0_i32_0 = arith.constant 0 : i32
    %c0_i32_1 = arith.constant 0 : i32
    return %c0_i32, %c0_i32_0 : i32, i32
  }
  func.func @transform_5(%arg0: i32) -> (i32, i32) {
    %c0_i32 = arith.constant 0 : i32
    %c0_i32_0 = arith.constant 0 : i32
    %c0_i32_1 = arith.constant 0 : i32
    return %c0_i32, %c0_i32_0 : i32, i32
  }
  func.func @transform_6(%arg0: i32) -> (i32, i32, i32, i32) {
    %c0_i32 = arith.constant 0 : i32
    %c0_i32_0 = arith.constant 0 : i32
    %c0_i32_1 = arith.constant 0 : i32
    %c0_i32_2 = arith.constant 0 : i32
    return %c0_i32, %arg0, %c0_i32_0, %c0_i32_1 : i32, i32, i32, i32
  }
  func.func @transform_7(%arg0: i32) -> (i32, i32, i32, i32) {
    %c0_i32 = arith.constant 0 : i32
    %c0_i32_0 = arith.constant 0 : i32
    %c0_i32_1 = arith.constant 0 : i32
    %c0_i32_2 = arith.constant 0 : i32
    return %c0_i32, %arg0, %c0_i32_0, %c0_i32_1 : i32, i32, i32, i32
  }
}

</mosaic_0001>

<llo_original>
// kernel: ms_ssa_conv_forward.1
$region0: #{ms_ssa_conv_forward.1}
  #allocation0 [shape = 'u32[]', space=smem, size = 0x4, offset = 0x4, fixed_abs, tag = 'smem constant byte address 0x4 - core index']
  #allocation1 [shape = 'u32[144,128]{1,0:T(1,128)}', space=vmem, size = 0x12000, scoped, tag = 'internal scratch']
  #allocation2 [shape = 'f32[32,256]{1,0:T(8,128)}', space=vmem, size = 0x8000, scoped, tag = 'scratch operand']
  #allocation3 [shape = 'f32[32,256]{1,0:T(8,128)}', space=vmem, size = 0x8000, scoped, tag = 'scratch operand']
  #allocation8 [shape = 's32[]', space=sflag, size = 0x4, offset = 0, fixed_abs, tag = 'sflag constant byte address 0x0 - dummy sync flag']
  %s0 = inlined_call_operand.vmem [shape: f32[4,2,32,64], index: 0, kind: input, shape index: {}]
  %s1 = inlined_call_operand.vmem [shape: f32[96,32], index: 1, kind: input, shape index: {}]
  %s2 = inlined_call_operand.vmem [shape: f32[96,1], index: 2, kind: input, shape index: {}]
  %s3 = inlined_call_operand.vmem [shape: f32[32,32], index: 3, kind: input, shape index: {}]
  %s4 = inlined_call_operand.vmem [shape: f32[32,32], index: 4, kind: input, shape index: {}]
  %s5 = inlined_call_operand.vmem [shape: f32[32,1], index: 5, kind: input, shape index: {}]
  %s6 = inlined_call_operand.vmem [shape: f32[4,2,32,64], index: 6, kind: output, shape index: {0}]
  %s7 = inlined_call_operand.hbm [shape: f32[4,2,32,64], index: 7, kind: output, shape index: {1}]
  %8 = xla_tuple %s6, %s7
  %s9 = sld [smem:[#allocation0]]
  $region137: #{ms_ssa_conv_forward.1} parent=0
    _
  %s11 = ssub.s32 1, %s9
  %s12 = scalar_select 0, %s11, %s9
  $region1: #{ms_ssa_conv_forward.1} parent=0
    #allocation4 [shape = 'u8[131072]{0}', space=vmem, size = 0x20000, scoped, tag = 'input window, operand 0']
    #allocation5 [shape = 'u8[131072]{0}', space=vmem, size = 0x20000, scoped, tag = 'output window, operand 0']
    #allocation6 [shape = 'u8[131072]{0}', space=vmem, size = 0x20000, scoped, tag = 'output window, operand 1']
    #allocation7 [shape = 's32[2]{0}', space=sflag, size = 0x8, scoped, tag = 'scoped memory for ms_ssa_conv_forward.1']
    %13 = vsyncpa [#allocation7], 0
    %s14 = scalar_lea.sflag [#allocation7], 1
    %15 = vsyncpa %s14, 0
    loop: start=0, step=1, limit=4
    $region2: #{ms_ssa_conv_forward.1} parent=1 // loop_pre_header
      _
    $region3: #{ms_ssa_conv_forward.1} parent=1 // loop_header
      %s17 = sphi 0, %s21
      %p18 = scmp.ge.s32.totalorder %s17, 4
      %s27 = sphi 0, %s29
      %s30 = sphi 0, %s27
      %s31 = sphi 0, %s30
      %s47 = sphi 0, %s31
      %s51 = sphi 0, %s51
      %s53 = sphi 0, %s51
      %s54 = sphi 0, %s53
      %s68 = sphi 0, %s54
      %s72 = sphi 0, %s72
      %s74 = sphi 0, %s72
      %s75 = sphi 0, %s74
      %s89 = sphi 0, %s75
      %s93 = sphi 0, %s93
      %s95 = sphi 0, %s93
      %s96 = sphi 0, %s95
      %s110 = sphi 0, %s96
      %s114 = sphi 0, %s114
      %s116 = sphi 0, %s114
      %s117 = sphi 0, %s116
      %s131 = sphi 0, %s117
      %s135 = sphi 0, %s135
      %s137 = sphi 0, %s135
      %s138 = sphi 0, %s137
      %s152 = sphi 0, %s138
      %s158 = sphi 0, %s160
      %s161 = sphi 0, %s158
      %s162 = sphi 0, %s161
      %s178 = sphi 0, %s162
      %s184 = sphi 0, %s186
      %s187 = sphi 0, %s184
      %s188 = sphi 0, %s187
      %s204 = sphi 0, %s188
    $region4: #{ms_ssa_conv_forward.1} parent=1 // loop_header_branch
      %20 = sbr.rel (%p18) target = $region8
    $region5: #{ms_ssa_conv_forward.1} parent=1 // loop_body
      %s22 = ssub.s32 %s17, 1
      %s23 = ssub.s32 %s17, 2
      %s24 = sadd.s32 %s17, 1
      %s25 = ssub.s32 %s17, %s24
      %p26 = scmp.eq.s32.totalorder %s25, 0
      %s28 = sadd.s32 %s27, 1
      %s29 = scalar_select %p26, %s27, %s28
      %p32 = pneg %p26
      %p33 = scmp.eq.s32.totalorder %s17, 1
      %p34 = por %p32, %p33
      %p35 = scmp.ne.s32.totalorder %s27, %s30
      %p36 = scmp.eq.s32.totalorder %s17, 0
      %p37 = por %p35, %p36
      %p38 = scmp.ne.s32.totalorder %s27, %s30
      %p39 = scmp.eq.s32.totalorder %s22, 1
      %p40 = por %p38, %p39
      %p41 = scmp.ne.s32.totalorder %s30, %s31
      %p42 = scmp.eq.s32.totalorder %s22, 0
      %p43 = por %p41, %p42
      %p44 = scmp.ne.s32.totalorder %s30, %s31
      %p45 = scmp.eq.s32.totalorder %s23, 1
      %p46 = por %p44, %p45
      %p48 = scmp.ne.s32.totalorder %s31, %s47
      %p49 = scmp.eq.s32.totalorder %s23, 0
      %p50 = por %p48, %p49
      %s52 = sadd.s32 %s51, 1
      %p55 = scmp.eq.s32.totalorder %s17, 1
      %p56 = scmp.ne.s32.totalorder %s51, %s53
      %p57 = scmp.eq.s32.totalorder %s17, 0
      %p58 = por %p56, %p57
      %p59 = scmp.ne.s32.totalorder %s51, %s53
      %p60 = scmp.eq.s32.totalorder %s22, 1
      %p61 = por %p59, %p60
      %p62 = scmp.ne.s32.totalorder %s53, %s54
      %p63 = scmp.eq.s32.totalorder %s22, 0
      %p64 = por %p62, %p63
      %p65 = scmp.ne.s32.totalorder %s53, %s54
      %p66 = scmp.eq.s32.totalorder %s23, 1
      %p67 = por %p65, %p66
      %p69 = scmp.ne.s32.totalorder %s54, %s68
      %p70 = scmp.eq.s32.totalorder %s23, 0
      %p71 = por %p69, %p70
      %s73 = sadd.s32 %s72, 1
      %p76 = scmp.eq.s32.totalorder %s17, 1
      %p77 = scmp.ne.s32.totalorder %s72, %s74
      %p78 = scmp.eq.s32.totalorder %s17, 0
      %p79 = por %p77, %p78
      %p80 = scmp.ne.s32.totalorder %s72, %s74
      %p81 = scmp.eq.s32.totalorder %s22, 1
      %p82 = por %p80, %p81
      %p83 = scmp.ne.s32.totalorder %s74, %s75
      %p84 = scmp.eq.s32.totalorder %s22, 0
      %p85 = por %p83, %p84
      %p86 = scmp.ne.s32.totalorder %s74, %s75
      %p87 = scmp.eq.s32.totalorder %s23, 1
      %p88 = por %p86, %p87
      %p90 = scmp.ne.s32.totalorder %s75, %s89
      %p91 = scmp.eq.s32.totalorder %s23, 0
      %p92 = por %p90, %p91
      %s94 = sadd.s32 %s93, 1
      %p97 = scmp.eq.s32.totalorder %s17, 1
      %p98 = scmp.ne.s32.totalorder %s93, %s95
      %p99 = scmp.eq.s32.totalorder %s17, 0
      %p100 = por %p98, %p99
      %p101 = scmp.ne.s32.totalorder %s93, %s95
      %p102 = scmp.eq.s32.totalorder %s22, 1
      %p103 = por %p101, %p102
      %p104 = scmp.ne.s32.totalorder %s95, %s96
      %p105 = scmp.eq.s32.totalorder %s22, 0
      %p106 = por %p104, %p105
      %p107 = scmp.ne.s32.totalorder %s95, %s96
      %p108 = scmp.eq.s32.totalorder %s23, 1
      %p109 = por %p107, %p108
      %p111 = scmp.ne.s32.totalorder %s96, %s110
      %p112 = scmp.eq.s32.totalorder %s23, 0
      %p113 = por %p111, %p112
      %s115 = sadd.s32 %s114, 1
      %p118 = scmp.eq.s32.totalorder %s17, 1
      %p119 = scmp.ne.s32.totalorder %s114, %s116
      %p120 = scmp.eq.s32.totalorder %s17, 0
      %p121 = por %p119, %p120
      %p122 = scmp.ne.s32.totalorder %s114, %s116
      %p123 = scmp.eq.s32.totalorder %s22, 1
      %p124 = por %p122, %p123
      %p125 = scmp.ne.s32.totalorder %s116, %s117
      %p126 = scmp.eq.s32.totalorder %s22, 0
      %p127 = por %p125, %p126
      %p128 = scmp.ne.s32.totalorder %s116, %s117
      %p129 = scmp.eq.s32.totalorder %s23, 1
      %p130 = por %p128, %p129
      %p132 = scmp.ne.s32.totalorder %s117, %s131
      %p133 = scmp.eq.s32.totalorder %s23, 0
      %p134 = por %p132, %p133
      %s136 = sadd.s32 %s135, 1
      %p139 = scmp.eq.s32.totalorder %s17, 1
      %p140 = scmp.ne.s32.totalorder %s135, %s137
      %p141 = scmp.eq.s32.totalorder %s17, 0
      %p142 = por %p140, %p141
      %p143 = scmp.ne.s32.totalorder %s135, %s137
      %p144 = scmp.eq.s32.totalorder %s22, 1
      %p145 = por %p143, %p144
      %p146 = scmp.ne.s32.totalorder %s137, %s138
      %p147 = scmp.eq.s32.totalorder %s22, 0
      %p148 = por %p146, %p147
      %p149 = scmp.ne.s32.totalorder %s137, %s138
      %p150 = scmp.eq.s32.totalorder %s23, 1
      %p151 = por %p149, %p150
      %p153 = scmp.ne.s32.totalorder %s138, %s152
      %p154 = scmp.eq.s32.totalorder %s23, 0
      %p155 = por %p153, %p154
      %s156 = ssub.s32 %s17, %s24
      %p157 = scmp.eq.s32.totalorder %s156, 0
      %s159 = sadd.s32 %s158, 1
      %s160 = scalar_select %p157, %s158, %s159
      %p163 = pneg %p157
      %p164 = scmp.eq.s32.totalorder %s17, 1
      %p165 = por %p163, %p164
      %p166 = scmp.ne.s32.totalorder %s158, %s161
      %p167 = scmp.eq.s32.totalorder %s17, 0
      %p168 = por %p166, %p167
      %p169 = scmp.ne.s32.totalorder %s158, %s161
      %p170 = scmp.eq.s32.totalorder %s22, 1
      %p171 = por %p169, %p170
      %p172 = scmp.ne.s32.totalorder %s161, %s162
      %p173 = scmp.eq.s32.totalorder %s22, 0
      %p174 = por %p172, %p173
      %p175 = scmp.ne.s32.totalorder %s161, %s162
      %p176 = scmp.eq.s32.totalorder %s23, 1
      %p177 = por %p175, %p176
      %p179 = scmp.ne.s32.totalorder %s162, %s178
      %p180 = scmp.eq.s32.totalorder %s23, 0
      %p181 = por %p179, %p180
      %s182 = ssub.s32 %s17, %s24
      %p183 = scmp.eq.s32.totalorder %s182, 0
      %s185 = sadd.s32 %s184, 1
      %s186 = scalar_select %p183, %s184, %s185
      %p189 = pneg %p183
      %p190 = scmp.eq.s32.totalorder %s17, 1
      %p191 = por %p189, %p190
      %p192 = scmp.ne.s32.totalorder %s184, %s187
      %p193 = scmp.eq.s32.totalorder %s17, 0
      %p194 = por %p192, %p193
      %p195 = scmp.ne.s32.totalorder %s184, %s187
      %p196 = scmp.eq.s32.totalorder %s22, 1
      %p197 = por %p195, %p196
      %p198 = scmp.ne.s32.totalorder %s187, %s188
      %p199 = scmp.eq.s32.totalorder %s22, 0
      %p200 = por %p198, %p199
      %p201 = scmp.ne.s32.totalorder %s187, %s188
      %p202 = scmp.eq.s32.totalorder %s23, 1
      %p203 = por %p201, %p202
      %p205 = scmp.ne.s32.totalorder %s188, %s204
      %p206 = scmp.eq.s32.totalorder %s23, 0
      %p207 = por %p205, %p206
      %p208 = scmp.le.s32.totalorder 1, %s17
      %p209 = scmp.lt.s32.totalorder %s17, 3
      %p210 = pnand %p208, %p209
      %p211 = pneg %p210
      // Predicated region
      $region9: #{ms_ssa_conv_forward.1} parent=5 // pred_check
        _
      $region10: #{ms_ssa_conv_forward.1} parent=5 // pred_check_branch
        %213 = sbr.rel (%p210) target = $region12
      $region11: #{ms_ssa_conv_forward.1} parent=5 // pred_region
        %s214 = ssub.s32 %s17, 1
        // Predicated region
        $region13: #{ms_ssa_conv_forward.1} parent=11 // pred_check
          %p215 = pneg %p64
        $region14: #{ms_ssa_conv_forward.1} parent=11 // pred_check_branch
          %217 = sbr.rel (%p215) target = $region16
        $region15: #{ms_ssa_conv_forward.1} parent=11 // pred_region
          _
        $region16: #{ms_ssa_conv_forward.1} parent=11 // pred_fallthru
          _
        // Predicated region
        $region17: #{ms_ssa_conv_forward.1} parent=11 // pred_check
          %p218 = pneg %p85
        $region18: #{ms_ssa_conv_forward.1} parent=11 // pred_check_branch
          %220 = sbr.rel (%p218) target = $region20
        $region19: #{ms_ssa_conv_forward.1} parent=11 // pred_region
          _
        $region20: #{ms_ssa_conv_forward.1} parent=11 // pred_fallthru
          _
        // Predicated region
        $region21: #{ms_ssa_conv_forward.1} parent=11 // pred_check
          %p221 = pneg %p106
        $region22: #{ms_ssa_conv_forward.1} parent=11 // pred_check_branch
          %223 = sbr.rel (%p221) target = $region24
        $region23: #{ms_ssa_conv_forward.1} parent=11 // pred_region
          _
        $region24: #{ms_ssa_conv_forward.1} parent=11 // pred_fallthru
          _
        // Predicated region
        $region25: #{ms_ssa_conv_forward.1} parent=11 // pred_check
          %p224 = pneg %p127
        $region26: #{ms_ssa_conv_forward.1} parent=11 // pred_check_branch
          %226 = sbr.rel (%p224) target = $region28
        $region27: #{ms_ssa_conv_forward.1} parent=11 // pred_region
          _
        $region28: #{ms_ssa_conv_forward.1} parent=11 // pred_fallthru
          _
        // Predicated region
        $region29: #{ms_ssa_conv_forward.1} parent=11 // pred_check
          %p227 = pneg %p148
        $region30: #{ms_ssa_conv_forward.1} parent=11 // pred_check_branch
          %229 = sbr.rel (%p227) target = $region32
        $region31: #{ms_ssa_conv_forward.1} parent=11 // pred_region
          _
        $region32: #{ms_ssa_conv_forward.1} parent=11 // pred_fallthru
          _
      $region12: #{ms_ssa_conv_forward.1} parent=5 // pred_fallthru
        _
      %p230 = scmp.lt.s32.totalorder %s17, 2
      // Predicated region
      $region33: #{ms_ssa_conv_forward.1} parent=5 // pred_check
        %p231 = pneg %p230
      $region34: #{ms_ssa_conv_forward.1} parent=5 // pred_check_branch
        %233 = sbr.rel (%p231) target = $region36
      $region35: #{ms_ssa_conv_forward.1} parent=5 // pred_region
        // Predicated region
        $region37: #{ms_ssa_conv_forward.1} parent=35 // pred_check
          %p234 = pneg %p37
        $region38: #{ms_ssa_conv_forward.1} parent=35 // pred_check_branch
          %236 = sbr.rel (%p234) target = $region40
        $region39: #{ms_ssa_conv_forward.1} parent=35 // pred_region
          %s237 = sand.u32 %s27, 1
          %s238 = sand.u32 %s27, 1
          %s239 = smul.addr %s238, 128
          %s240 = scalar_lea.vmem [#allocation4], %s239
          %s241 = smul.addr %s17, 4
          %s242 = smul.addr %s241, 8
          %s243 = scalar_lea.vmem %s0, %s242
          // Predicated region
          $region41: #{ms_ssa_conv_forward.1} parent=39 // pred_check
            _
          $region42: #{ms_ssa_conv_forward.1} parent=39 // pred_check_branch
            %245 = sbr.rel (0) target = $region44
          $region43: #{ms_ssa_conv_forward.1} parent=39 // pred_region
            // Predicated region
            $region45: #{ms_ssa_conv_forward.1} parent=43 // pred_check
              _
            $region46: #{ms_ssa_conv_forward.1} parent=43 // pred_check_branch
              %247 = sbr.rel (0) target = $region48
            $region47: #{ms_ssa_conv_forward.1} parent=43 // pred_region
              // Predicated region
              $region60: #{ms_ssa_conv_forward.1} parent=47 // pred_check
                _
              $region61: #{ms_ssa_conv_forward.1} parent=47 // pred_check_branch
                %293 = sbr.rel (0) target = $region63
              $region62: #{ms_ssa_conv_forward.1} parent=47 // pred_region
                loop: start=0, step=1, limit=1
                $region64: #{ms_ssa_conv_forward.1} parent=62 // loop_pre_header
                  _
                $region65: #{ms_ssa_conv_forward.1} parent=62 // loop_header
                  %s295 = sphi 0, %s299
                  %p296 = scmp.ge.s32.totalorder %s295, 1
                  %s300 = sphi %s243, %s243
                  %s301 = sphi %s240, %s240
                $region66: #{ms_ssa_conv_forward.1} parent=62 // loop_header_branch
                  %298 = sbr.rel (%p296) target = $region70
                $region67: #{ms_ssa_conv_forward.1} parent=62 // loop_body
                  %v302 = vld [vmem:[%s300] sm:$0xff]
                  %303 = vst [vmem:[%s301] sm:$0xff] %v302
                  %v304 = vld [vmem:[%s300 + $0x8] sm:$0xff]
                  %305 = vst [vmem:[%s301 + $0x8] sm:$0xff] %v304
                  %v306 = vld [vmem:[%s300 + $0x10] sm:$0xff]
                  %307 = vst [vmem:[%s301 + $0x10] sm:$0xff] %v306
                  %v308 = vld [vmem:[%s300 + $0x18] sm:$0xff]
                  %309 = vst [vmem:[%s301 + $0x18] sm:$0xff] %v308
                  %v310 = vld [vmem:[%s300 + $0x40] sm:$0xff]
                  %311 = vst [vmem:[%s301 + $0x20] sm:$0xff] %v310
                  %v312 = vld [vmem:[%s300 + $0x48] sm:$0xff]
                  %313 = vst [vmem:[%s301 + $0x28] sm:$0xff] %v312
                  %v314 = vld [vmem:[%s300 + $0x50] sm:$0xff]
                  %315 = vst [vmem:[%s301 + $0x30] sm:$0xff] %v314
                  %v316 = vld [vmem:[%s300 + $0x58] sm:$0xff]
                  %317 = vst [vmem:[%s301 + $0x38] sm:$0xff] %v316
                  %v318 = vld [vmem:[%s300 + $0x80] sm:$0xff]
                  %319 = vst [vmem:[%s301 + $0x40] sm:$0xff] %v318
                  %v320 = vld [vmem:[%s300 + $0x88] sm:$0xff]
                  %321 = vst [vmem:[%s301 + $0x48] sm:$0xff] %v320
                  %v322 = vld [vmem:[%s300 + $0x90] sm:$0xff]
                  %323 = vst [vmem:[%s301 + $0x50] sm:$0xff] %v322
                  %v324 = vld [vmem:[%s300 + $0x98] sm:$0xff]
                  %325 = vst [vmem:[%s301 + $0x58] sm:$0xff] %v324
                  %v326 = vld [vmem:[%s300 + $0xc0] sm:$0xff]
                  %327 = vst [vmem:[%s301 + $0x60] sm:$0xff] %v326
                  %v328 = vld [vmem:[%s300 + $0xc8] sm:$0xff]
                  %329 = vst [vmem:[%s301 + $0x68] sm:$0xff] %v328
                  %v330 = vld [vmem:[%s300 + $0xd0] sm:$0xff]
                  %331 = vst [vmem:[%s301 + $0x70] sm:$0xff] %v330
                  %v332 = vld [vmem:[%s300 + $0xd8] sm:$0xff]
                  %333 = vst [vmem:[%s301 + $0x78] sm:$0xff] %v332
                $region68: #{ms_ssa_conv_forward.1} parent=62 // loop_footer
                  %s299 = sadd.s32 1, %s295
                $region69: #{ms_ssa_conv_forward.1} parent=62 // loop_footer_branch
                  %294 = sbr.rel target = $region65
                $region70: #{ms_ssa_conv_forward.1} parent=62 // loop_exit
                  _
              $region63: #{ms_ssa_conv_forward.1} parent=47 // pred_fallthru
                _
              // Predicated region
              $region71: #{ms_ssa_conv_forward.1} parent=47 // pred_check
                _
              $region72: #{ms_ssa_conv_forward.1} parent=47 // pred_check_branch
                %335 = sbr.rel target = $region74
              $region73: #{ms_ssa_conv_forward.1} parent=47 // pred_region
                _
              $region74: #{ms_ssa_conv_forward.1} parent=47 // pred_fallthru
                _
            $region48: #{ms_ssa_conv_forward.1} parent=43 // pred_fallthru
              _
            // Predicated region
            $region49: #{ms_ssa_conv_forward.1} parent=43 // pred_check
              _
            $region50: #{ms_ssa_conv_forward.1} parent=43 // pred_check_branch
              %249 = sbr.rel target = $region52
            $region51: #{ms_ssa_conv_forward.1} parent=43 // pred_region
              %s251 = ssub.s32 256, 1
              loop: start=0, step=1, limit=1
              $region53: #{ms_ssa_conv_forward.1} parent=51 // loop_pre_header
                _
              $region54: #{ms_ssa_conv_forward.1} parent=51 // loop_header
                %s253 = sphi 0, %s257
                %p254 = scmp.ge.s32.totalorder %s253, 1
                %s258 = sphi %s243, %s243
                %s259 = sphi %s240, %s240
              $region55: #{ms_ssa_conv_forward.1} parent=51 // loop_header_branch
                %256 = sbr.rel (%p254) target = $region59
              $region56: #{ms_ssa_conv_forward.1} parent=51 // loop_body
                %v260 = vld [vmem:[%s258] sm:%s251]
                %261 = vst [vmem:[%s259] sm:%s251] %v260
                %v262 = vld [vmem:[%s258 + $0x8] sm:%s251]
                %263 = vst [vmem:[%s259 + $0x8] sm:%s251] %v262
                %v264 = vld [vmem:[%s258 + $0x10] sm:%s251]
                %265 = vst [vmem:[%s259 + $0x10] sm:%s251] %v264
                %v266 = vld [vmem:[%s258 + $0x18] sm:%s251]
                %267 = vst [vmem:[%s259 + $0x18] sm:%s251] %v266
                %v268 = vld [vmem:[%s258 + $0x40] sm:%s251]
                %269 = vst [vmem:[%s259 + $0x20] sm:%s251] %v268
                %v270 = vld [vmem:[%s258 + $0x48] sm:%s251]
                %271 = vst [vmem:[%s259 + $0x28] sm:%s251] %v270
                %v272 = vld [vmem:[%s258 + $0x50] sm:%s251]
                %273 = vst [vmem:[%s259 + $0x30] sm:%s251] %v272
                %v274 = vld [vmem:[%s258 + $0x58] sm:%s251]
                %275 = vst [vmem:[%s259 + $0x38] sm:%s251] %v274
                %v276 = vld [vmem:[%s258 + $0x80] sm:%s251]
                %277 = vst [vmem:[%s259 + $0x40] sm:%s251] %v276
                %v278 = vld [vmem:[%s258 + $0x88] sm:%s251]
                %279 = vst [vmem:[%s259 + $0x48] sm:%s251] %v278
                %v280 = vld [vmem:[%s258 + $0x90] sm:%s251]
                %281 = vst [vmem:[%s259 + $0x50] sm:%s251] %v280
                %v282 = vld [vmem:[%s258 + $0x98] sm:%s251]
                %283 = vst [vmem:[%s259 + $0x58] sm:%s251] %v282
                %v284 = vld [vmem:[%s258 + $0xc0] sm:%s251]
                %285 = vst [vmem:[%s259 + $0x60] sm:%s251] %v284
                %v286 = vld [vmem:[%s258 + $0xc8] sm:%s251]
                %287 = vst [vmem:[%s259 + $0x68] sm:%s251] %v286
                %v288 = vld [vmem:[%s258 + $0xd0] sm:%s251]
                %289 = vst [vmem:[%s259 + $0x70] sm:%s251] %v288
                %v290 = vld [vmem:[%s258 + $0xd8] sm:%s251]
                %291 = vst [vmem:[%s259 + $0x78] sm:%s251] %v290
              $region57: #{ms_ssa_conv_forward.1} parent=51 // loop_footer
                %s257 = sadd.s32 1, %s253
              $region58: #{ms_ssa_conv_forward.1} parent=51 // loop_footer_branch
                %252 = sbr.rel target = $region54
              $region59: #{ms_ssa_conv_forward.1} parent=51 // loop_exit
                _
            $region52: #{ms_ssa_conv_forward.1} parent=43 // pred_fallthru
              _
          $region44: #{ms_ssa_conv_forward.1} parent=39 // pred_fallthru
            _
          %336 = vnop
        $region40: #{ms_ssa_conv_forward.1} parent=35 // pred_fallthru
          _
      $region36: #{ms_ssa_conv_forward.1} parent=5 // pred_fallthru
        _
      %p337 = scmp.le.s32.totalorder 1, %s17
      %p338 = scmp.lt.s32.totalorder %s17, 3
      %p339 = pnand %p337, %p338
      %p340 = pneg %p339
      // Predicated region
      $region75: #{ms_ssa_conv_forward.1} parent=5 // pred_check
        _
      $region76: #{ms_ssa_conv_forward.1} parent=5 // pred_check_branch
        %342 = sbr.rel (%p339) target = $region78
      $region77: #{ms_ssa_conv_forward.1} parent=5 // pred_region
        %s343 = ssub.s32 %s17, 1
        %s344 = sand.u32 %s30, 1
        %s345 = sand.u32 %s30, 1
        %s346 = smul.addr %s345, 128
        %s347 = scalar_lea.vmem [#allocation4], %s346
        // Predicated region
        $region79: #{ms_ssa_conv_forward.1} parent=77 // pred_check
          %p348 = pneg %p43
        $region80: #{ms_ssa_conv_forward.1} parent=77 // pred_check_branch
          %350 = sbr.rel (%p348) target = $region82
        $region81: #{ms_ssa_conv_forward.1} parent=77 // pred_region
          _
        $region82: #{ms_ssa_conv_forward.1} parent=77 // pred_fallthru
          _
        %s351 = sand.u32 %s30, 1
        %s352 = sand.u32 %s30, 1
        %s353 = smul.addr %s352, 128
        %s354 = scalar_lea.vmem [#allocation4], %s353
        %p355 = pneg %p43
        %p356 = pneg %p40
        %p357 = pneg %p64
        %p358 = pneg %p61
        %p359 = pneg %p85
        %p360 = pneg %p82
        %p361 = pneg %p106
        %p362 = pneg %p103
        %p363 = pneg %p127
        %p364 = pneg %p124
        %p365 = pneg %p148
        %p366 = pneg %p145
        %p367 = pneg %p174
        %p368 = pneg %p171
        %s369 = sand.u32 %s161, 1
        %s370 = sand.u32 %s161, 1
        %s371 = smul.addr %s370, 128
        %s372 = scalar_lea.vmem [#allocation5], %s371
        %p373 = pneg %p200
        %p374 = pneg %p197
        %s375 = sand.u32 %s187, 1
        %s376 = scalar_lea.sflag [#allocation7], %s375
        %s377 = sand.u32 %s187, 1
        %s378 = smul.addr %s377, 128
        %s379 = scalar_lea.vmem [#allocation6], %s378
        %v380 = vld [vmem:[%s347] sm:$0xff]
        %v381 = vld [vmem:[%s347 + $0x8] sm:$0xff]
        %v382 = vld [vmem:[%s347 + $0x10] sm:$0xff]
        %v383 = vld [vmem:[%s347 + $0x18] sm:$0xff]
        %v384 = vmul.f32 %v380, 0.5
        %v385 = vmul.f32 %v381, 0.5
        %v386 = vmul.f32 %v382, 0.5
        %v387 = vmul.f32 %v383, 0.5
        %v388 = vadd.f32 %v384, 0.0
        %v389 = vadd.f32 %v385, 0.0
        %v390 = vadd.f32 %v386, 0.0
        %v391 = vadd.f32 %v387, 0.0
        %vm392 = vcmp.ge.f32.partialorder %v388, 1.0
        %vm393 = vcmp.ge.f32.partialorder %v389, 1.0
        %vm394 = vcmp.ge.f32.partialorder %v390, 1.0
        %vm395 = vcmp.ge.f32.partialorder %v391, 1.0
        %v396 = vsel %vm392, 1, 0
        %v397 = vsel %vm393, 1, 0
        %v398 = vsel %vm394, 1, 0
        %v399 = vsel %vm395, 1, 0
        %v400 = vcvt.s32.f32 %v396
        %v401 = vcvt.s32.f32 %v397
        %v402 = vcvt.s32.f32 %v398
        %v403 = vcvt.s32.f32 %v399
        %v404 = vsub.f32 1.0, %v400
        %v405 = vsub.f32 1.0, %v401
        %v406 = vsub.f32 1.0, %v402
        %v407 = vsub.f32 1.0, %v403
        %v408 = vmul.f32 %v388, %v404
        %v409 = vmul.f32 %v389, %v405
        %v410 = vmul.f32 %v390, %v406
        %v411 = vmul.f32 %v391, %v407
        %vm412 = vcmask 523264
        %413 = vst.msk [vmem:[#allocation2] sm:$0xff] %vm412, %v400
        %414 = vst.msk [vmem:[#allocation2 + $0x10] sm:$0xff] %vm412, %v401
        %415 = vst.msk [vmem:[#allocation2 + $0x20] sm:$0xff] %vm412, %v402
        %416 = vst.msk [vmem:[#allocation2 + $0x30] sm:$0xff] %vm412, %v403
        %s417 = scalar_lea.vmem %s347, 32 [#allocation4]
        %v418 = vld [vmem:[%s417] sm:$0xff]
        %v419 = vld [vmem:[%s417 + $0x8] sm:$0xff]
        %v420 = vld [vmem:[%s417 + $0x10] sm:$0xff]
        %v421 = vld [vmem:[%s417 + $0x18] sm:$0xff]
        %v422 = vsub.f32 %v418, %v408
        %v423 = vsub.f32 %v419, %v409
        %v424 = vsub.f32 %v420, %v410
        %v425 = vsub.f32 %v421, %v411
        %v426 = vmul.f32 %v422, 0.5
        %v427 = vmul.f32 %v423, 0.5
        %v428 = vmul.f32 %v424, 0.5
        %v429 = vmul.f32 %v425, 0.5
        %v430 = vadd.f32 %v408, %v426
        %v431 = vadd.f32 %v409, %v427
        %v432 = vadd.f32 %v410, %v428
        %v433 = vadd.f32 %v411, %v429
        %vm434 = vcmp.ge.f32.partialorder %v430, 1.0
        %vm435 = vcmp.ge.f32.partialorder %v431, 1.0
        %vm436 = vcmp.ge.f32.partialorder %v432, 1.0
        %vm437 = vcmp.ge.f32.partialorder %v433, 1.0
        %v438 = vsel %vm434, 1, 0
        %v439 = vsel %vm435, 1, 0
        %v440 = vsel %vm436, 1, 0
        %v441 = vsel %vm437, 1, 0
        %v442 = vcvt.s32.f32 %v438
        %v443 = vcvt.s32.f32 %v439
        %v444 = vcvt.s32.f32 %v440
        %v445 = vcvt.s32.f32 %v441
        %v446 = vsub.f32 1.0, %v442
        %v447 = vsub.f32 1.0, %v443
        %v448 = vsub.f32 1.0, %v444
        %v449 = vsub.f32 1.0, %v445
        %v450 = vmul.f32 %v430, %v446
        %v451 = vmul.f32 %v431, %v447
        %v452 = vmul.f32 %v432, %v448
        %v453 = vmul.f32 %v433, %v449
        %458 = vrot.lane.b32.xlu0 %v442, 64
        %v459 = vpop.permute.xlu0 %458
        %460 = vrot.lane.b32.xlu0 %v443, 64
        %v461 = vpop.permute.xlu0 %460
        %462 = vrot.lane.b32.xlu0 %v444, 64
        %v463 = vpop.permute.xlu0 %462
        %464 = vrot.lane.b32.xlu0 %v445, 64
        %v465 = vpop.permute.xlu0 %464
        %vm470 = vcmask 1048064
        %471 = vst.msk [vmem:[#allocation2] sm:$0xff] %vm470, %v459
        %472 = vst.msk [vmem:[#allocation2 + $0x10] sm:$0xff] %vm470, %v461
        %473 = vst.msk [vmem:[#allocation2 + $0x20] sm:$0xff] %vm470, %v463
        %474 = vst.msk [vmem:[#allocation2 + $0x30] sm:$0xff] %vm470, %v465
        %s475 = scalar_lea.vmem %s347, 64 [#allocation4]
        %v476 = vld [vmem:[%s475] sm:$0xff]
        %v477 = vld [vmem:[%s475 + $0x8] sm:$0xff]
        %v478 = vld [vmem:[%s475 + $0x10] sm:$0xff]
        %v479 = vld [vmem:[%s475 + $0x18] sm:$0xff]
        %v480 = vsub.f32 %v476, %v450
        %v481 = vsub.f32 %v477, %v451
        %v482 = vsub.f32 %v478, %v452
        %v483 = vsub.f32 %v479, %v453
        %v484 = vmul.f32 %v480, 0.5
        %v485 = vmul.f32 %v481, 0.5
        %v486 = vmul.f32 %v482, 0.5
        %v487 = vmul.f32 %v483, 0.5
        %v488 = vadd.f32 %v450, %v484
        %v489 = vadd.f32 %v451, %v485
        %v490 = vadd.f32 %v452, %v486
        %v491 = vadd.f32 %v453, %v487
        %vm492 = vcmp.ge.f32.partialorder %v488, 1.0
        %vm493 = vcmp.ge.f32.partialorder %v489, 1.0
        %vm494 = vcmp.ge.f32.partialorder %v490, 1.0
        %vm495 = vcmp.ge.f32.partialorder %v491, 1.0
        %v496 = vsel %vm492, 1, 0
        %v497 = vsel %vm493, 1, 0
        %v498 = vsel %vm494, 1, 0
        %v499 = vsel %vm495, 1, 0
        %v500 = vcvt.s32.f32 %v496
        %v501 = vcvt.s32.f32 %v497
        %v502 = vcvt.s32.f32 %v498
        %v503 = vcvt.s32.f32 %v499
        %v504 = vsub.f32 1.0, %v500
        %v505 = vsub.f32 1.0, %v501
        %v506 = vsub.f32 1.0, %v502
        %v507 = vsub.f32 1.0, %v503
        %v508 = vmul.f32 %v488, %v504
        %v509 = vmul.f32 %v489, %v505
        %v510 = vmul.f32 %v490, %v506
        %v511 = vmul.f32 %v491, %v507
        %512 = vst.msk [vmem:[#allocation2 + $0x8] sm:$0xff] %vm412, %v500
        %513 = vst.msk [vmem:[#allocation2 + $0x18] sm:$0xff] %vm412, %v501
        %514 = vst.msk [vmem:[#allocation2 + $0x28] sm:$0xff] %vm412, %v502
        %515 = vst.msk [vmem:[#allocation2 + $0x38] sm:$0xff] %vm412, %v503
        %s516 = scalar_lea.vmem %s347, 96 [#allocation4]
        %v517 = vld [vmem:[%s516] sm:$0xff]
        %v518 = vld [vmem:[%s516 + $0x8] sm:$0xff]
        %v519 = vld [vmem:[%s516 + $0x10] sm:$0xff]
        %v520 = vld [vmem:[%s516 + $0x18] sm:$0xff]
        %v521 = vsub.f32 %v517, %v508
        %v522 = vsub.f32 %v518, %v509
        %v523 = vsub.f32 %v519, %v510
        %v524 = vsub.f32 %v520, %v511
        %v525 = vmul.f32 %v521, 0.5
        %v526 = vmul.f32 %v522, 0.5
        %v527 = vmul.f32 %v523, 0.5
        %v528 = vmul.f32 %v524, 0.5
        %v529 = vadd.f32 %v508, %v525
        %v530 = vadd.f32 %v509, %v526
        %v531 = vadd.f32 %v510, %v527
        %v532 = vadd.f32 %v511, %v528
        %vm533 = vcmp.ge.f32.partialorder %v529, 1.0
        %vm534 = vcmp.ge.f32.partialorder %v530, 1.0
        %vm535 = vcmp.ge.f32.partialorder %v531, 1.0
        %vm536 = vcmp.ge.f32.partialorder %v532, 1.0
        %v537 = vsel %vm533, 1, 0
        %v538 = vsel %vm534, 1, 0
        %v539 = vsel %vm535, 1, 0
        %v540 = vsel %vm536, 1, 0
        %v541 = vcvt.s32.f32 %v537
        %v542 = vcvt.s32.f32 %v538
        %v543 = vcvt.s32.f32 %v539
        %v544 = vcvt.s32.f32 %v540
        %549 = vrot.lane.b32.xlu0 %v541, 64
        %v550 = vpop.permute.xlu0 %549
        %551 = vrot.lane.b32.xlu0 %v542, 64
        %v552 = vpop.permute.xlu0 %551
        %553 = vrot.lane.b32.xlu0 %v543, 64
        %v554 = vpop.permute.xlu0 %553
        %555 = vrot.lane.b32.xlu0 %v544, 64
        %v556 = vpop.permute.xlu0 %555
        %561 = vst.msk [vmem:[#allocation2 + $0x8] sm:$0xff] %vm470, %v550
        %562 = vst.msk [vmem:[#allocation2 + $0x18] sm:$0xff] %vm470, %v552
        %563 = vst.msk [vmem:[#allocation2 + $0x28] sm:$0xff] %vm470, %v554
        %564 = vst.msk [vmem:[#allocation2 + $0x38] sm:$0xff] %vm470, %v556
        %v565 = vld [vmem:[%s1] sm:$0xff]
        %v566 = vld [vmem:[%s1 + $0x8] sm:$0xff]
        %v567 = vld [vmem:[%s1 + $0x10] sm:$0xff]
        %v568 = vld [vmem:[%s1 + $0x18] sm:$0xff]
        %v569 = vld [vmem:[%s1 + $0x20] sm:$0xff]
        %v570 = vld [vmem:[%s1 + $0x28] sm:$0xff]
        %v571 = vld [vmem:[%s1 + $0x30] sm:$0xff]
        %v572 = vld [vmem:[%s1 + $0x38] sm:$0xff]
        %v573 = vld [vmem:[%s1 + $0x40] sm:$0xff]
        %v574 = vld [vmem:[%s1 + $0x48] sm:$0xff]
        %v575 = vld [vmem:[%s1 + $0x50] sm:$0xff]
        %v576 = vld [vmem:[%s1 + $0x58] sm:$0xff]
        %v577 = vld [vmem:[#allocation2] sm:$0xff]
        %v578 = vld [vmem:[#allocation2 + $0x8] sm:$0xff]
        %v579 = vld [vmem:[#allocation2 + $0x10] sm:$0xff]
        %v580 = vld [vmem:[#allocation2 + $0x18] sm:$0xff]
        %v581 = vld [vmem:[#allocation2 + $0x20] sm:$0xff]
        %v582 = vld [vmem:[#allocation2 + $0x28] sm:$0xff]
        %v583 = vld [vmem:[#allocation2 + $0x30] sm:$0xff]
        %v584 = vld [vmem:[#allocation2 + $0x38] sm:$0xff]
        %v585 = vld [vmem:[%s2] sm:$0xff]
        %v586 = vld [vmem:[%s2 + $0x8] sm:$0xff]
        %v587 = vld [vmem:[%s2 + $0x10] sm:$0xff]
        %v588 = vld [vmem:[%s2 + $0x18] sm:$0xff]
        %v589 = vld [vmem:[%s2 + $0x20] sm:$0xff]
        %v590 = vld [vmem:[%s2 + $0x28] sm:$0xff]
        %v591 = vld [vmem:[%s2 + $0x30] sm:$0xff]
        %v592 = vld [vmem:[%s2 + $0x38] sm:$0xff]
        %v593 = vld [vmem:[%s2 + $0x40] sm:$0xff]
        %v594 = vld [vmem:[%s2 + $0x48] sm:$0xff]
        %v595 = vld [vmem:[%s2 + $0x50] sm:$0xff]
        %v596 = vld [vmem:[%s2 + $0x58] sm:$0xff]
        %598 = vset.pattern.permute.xlu0 0
        %599 = vperm.xlu0 %598, %v585
        %v600 = vpop.permute.xlu0 %599
        %603 = vset.pattern.permute.xlu0 0
        %604 = vperm.xlu0 %603, %v586
        %v605 = vpop.permute.xlu0 %604
        %608 = vset.pattern.permute.xlu0 0
        %609 = vperm.xlu0 %608, %v587
        %v610 = vpop.permute.xlu0 %609
        %613 = vset.pattern.permute.xlu0 0
        %614 = vperm.xlu0 %613, %v588
        %v615 = vpop.permute.xlu0 %614
        %618 = vset.pattern.permute.xlu0 0
        %619 = vperm.xlu0 %618, %v589
        %v620 = vpop.permute.xlu0 %619
        %623 = vset.pattern.permute.xlu0 0
        %624 = vperm.xlu0 %623, %v590
        %v625 = vpop.permute.xlu0 %624
        %628 = vset.pattern.permute.xlu0 0
        %629 = vperm.xlu0 %628, %v591
        %v630 = vpop.permute.xlu0 %629
        %633 = vset.pattern.permute.xlu0 0
        %634 = vperm.xlu0 %633, %v592
        %v635 = vpop.permute.xlu0 %634
        %638 = vset.pattern.permute.xlu0 0
        %639 = vperm.xlu0 %638, %v593
        %v640 = vpop.permute.xlu0 %639
        %643 = vset.pattern.permute.xlu0 0
        %644 = vperm.xlu0 %643, %v594
        %v645 = vpop.permute.xlu0 %644
        %648 = vset.pattern.permute.xlu0 0
        %649 = vperm.xlu0 %648, %v595
        %v650 = vpop.permute.xlu0 %649
        %653 = vset.pattern.permute.xlu0 0
        %654 = vperm.xlu0 %653, %v596
        %v655 = vpop.permute.xlu0 %654
        %vm657 = vcmask 261120
        %v659 = vsel %vm657, %v565, 0
        %v662 = vsel %vm657, %v566, 0
        %v665 = vsel %vm657, %v567, 0
        %v668 = vsel %vm657, %v568, 0
        %v671 = vsel %vm657, %v569, 0
        %v674 = vsel %vm657, %v570, 0
        %v677 = vsel %vm657, %v571, 0
        %v680 = vsel %vm657, %v572, 0
        %v683 = vsel %vm657, %v573, 0
        %v686 = vsel %vm657, %v574, 0
        %v689 = vsel %vm657, %v575, 0
        %v692 = vsel %vm657, %v576, 0
        %694 = vmatprep.subr.mxu0 0.0
        %695 = vmatpush1.msra.mxu0 0.0
        %696 = vmatprep.subr.mxu0 0.0
        %697 = vmatpush1.msra.mxu0 0.0
        %698 = vmatprep.subr.mxu0 0.0
        %699 = vmatpush1.msra.mxu0 0.0
        %700 = vmatprep.subr.mxu0 0.0
        %701 = vmatpush1.msra.mxu0 0.0
        %702 = vmatprep.subr.mxu0 0.0
        %703 = vmatpush1.msra.mxu0 0.0
        %704 = vmatprep.subr.mxu0 0.0
        %705 = vmatpush1.msra.mxu0 0.0
        %706 = vmatprep.subr.mxu0 0.0
        %707 = vmatpush1.msra.mxu0 0.0
        %708 = vmatprep.subr.mxu0 0.0
        %709 = vmatpush1.msra.mxu0 0.0
        %710 = vmatprep.subr.mxu0 0.0
        %711 = vmatpush1.msra.mxu0 0.0
        %712 = vmatprep.subr.mxu0 0.0
        %713 = vmatpush1.msra.mxu0 0.0
        %714 = vmatprep.subr.mxu0 0.0
        %715 = vmatpush1.msra.mxu0 0.0
        %716 = vmatprep.subr.mxu0 0.0
        %717 = vmatpush1.msra.mxu0 0.0
        %718 = vmatprep.subr.mxu0 %v584
        %719 = vmatpush1.msra.mxu0 %v583
        %720 = vmatprep.subr.mxu0 %v582
        %721 = vmatpush1.msra.mxu0 %v581
        %722 = vmatprep.subr.mxu0 %v580
        %723 = vmatpush1.msra.mxu0 %v579
        %724 = vmatprep.subr.mxu0 %v578
        %725 = vmatpush1.msra.mxu0 %v577
        %726 = vmatprep.subr.mxu0 0.0
        %727 = vmatpush2.msra.mxu0 0.0
        %728 = vmatprep.subr.mxu0 0.0
        %729 = vmatpush2.msra.mxu0 0.0
        %730 = vmatprep.subr.mxu0 0.0
        %731 = vmatpush2.msra.mxu0 0.0
        %732 = vmatprep.subr.mxu0 0.0
        %733 = vmatpush2.msra.mxu0 0.0
        %734 = vmatprep.subr.mxu0 0.0
        %735 = vmatpush2.msra.mxu0 0.0
        %736 = vmatprep.subr.mxu0 0.0
        %737 = vmatpush2.msra.mxu0 0.0
        %738 = vmatprep.subr.mxu0 0.0
        %739 = vmatpush2.msra.mxu0 0.0
        %740 = vmatprep.subr.mxu0 0.0
        %741 = vmatpush2.msra.mxu0 0.0
        %742 = vmatprep.subr.mxu0 0.0
        %743 = vmatpush2.msra.mxu0 0.0
        %744 = vmatprep.subr.mxu0 0.0
        %745 = vmatpush2.msra.mxu0 0.0
        %746 = vmatprep.subr.mxu0 0.0
        %747 = vmatpush2.msra.mxu0 0.0
        %748 = vmatprep.subr.mxu0 0.0
        %749 = vmatpush2.msra.mxu0 0.0
        %750 = vmatprep.subr.mxu0 0.0
        %751 = vmatpush2.msra.mxu0 0.0
        %752 = vmatprep.subr.mxu0 0.0
        %753 = vmatpush2.msra.mxu0 0.0
        %754 = vmatprep.subr.mxu0 0.0
        %755 = vmatpush2.msra.mxu0 0.0
        %756 = vmatprep.subr.mxu0 0.0
        %757 = vmatpush2.msra.mxu0 0.0
        %758 = vmatprep.mubr.f32.mxu0 0.0
        %759 = vmatmul.mubr.f32.gmra.mxu0 %v659
        %v760 = vpop.f32.mrf.mxu0
        %v761 = vadd.f32 %v600, %v760
        %v762 = vpop.f32.mrf.mxu0
        %v763 = vadd.f32 %v600, %v762
        %764 = vmatprep.mubr.f32.mxu0 0.0
        %765 = vmatmul.mubr.f32.gmra.mxu0 %v662
        %v766 = vpop.f32.mrf.mxu0
        %v767 = vadd.f32 %v605, %v766
        %v768 = vpop.f32.mrf.mxu0
        %v769 = vadd.f32 %v605, %v768
        %770 = vmatprep.mubr.f32.mxu0 0.0
        %771 = vmatmul.mubr.f32.gmra.mxu0 %v665
        %v772 = vpop.f32.mrf.mxu0
        %v773 = vadd.f32 %v610, %v772
        %v774 = vpop.f32.mrf.mxu0
        %v775 = vadd.f32 %v610, %v774
        %776 = vmatprep.mubr.f32.mxu0 0.0
        %777 = vmatmul.mubr.f32.gmra.mxu0 %v668
        %v778 = vpop.f32.mrf.mxu0
        %v779 = vadd.f32 %v615, %v778
        %v780 = vpop.f32.mrf.mxu0
        %v781 = vadd.f32 %v615, %v780
        %782 = vmatprep.mubr.f32.mxu0 0.0
        %783 = vmatmul.mubr.f32.gmra.mxu0 %v671
        %v784 = vpop.f32.mrf.mxu0
        %v785 = vadd.f32 %v620, %v784
        %v786 = vpop.f32.mrf.mxu0
        %v787 = vadd.f32 %v620, %v786
        %788 = vmatprep.mubr.f32.mxu0 0.0
        %789 = vmatmul.mubr.f32.gmra.mxu0 %v674
        %v790 = vpop.f32.mrf.mxu0
        %v791 = vadd.f32 %v625, %v790
        %v792 = vpop.f32.mrf.mxu0
        %v793 = vadd.f32 %v625, %v792
        %794 = vmatprep.mubr.f32.mxu0 0.0
        %795 = vmatmul.mubr.f32.gmra.mxu0 %v677
        %v796 = vpop.f32.mrf.mxu0
        %v797 = vadd.f32 %v630, %v796
        %v798 = vpop.f32.mrf.mxu0
        %v799 = vadd.f32 %v630, %v798
        %800 = vmatprep.mubr.f32.mxu0 0.0
        %801 = vmatmul.mubr.f32.gmra.mxu0 %v680
        %v802 = vpop.f32.mrf.mxu0
        %v803 = vadd.f32 %v635, %v802
        %v804 = vpop.f32.mrf.mxu0
        %v805 = vadd.f32 %v635, %v804
        %806 = vmatprep.mubr.f32.mxu0 0.0
        %807 = vmatmul.mubr.f32.gmra.mxu0 %v683
        %v808 = vpop.f32.mrf.mxu0
        %v809 = vadd.f32 %v640, %v808
        %v810 = vpop.f32.mrf.mxu0
        %v811 = vadd.f32 %v640, %v810
        %812 = vmatprep.mubr.f32.mxu0 0.0
        %813 = vmatmul.mubr.f32.gmra.mxu0 %v686
        %v814 = vpop.f32.mrf.mxu0
        %v815 = vadd.f32 %v645, %v814
        %v816 = vpop.f32.mrf.mxu0
        %v817 = vadd.f32 %v645, %v816
        %818 = vmatprep.mubr.f32.mxu0 0.0
        %819 = vmatmul.mubr.f32.gmra.mxu0 %v689
        %v820 = vpop.f32.mrf.mxu0
        %v821 = vadd.f32 %v650, %v820
        %v822 = vpop.f32.mrf.mxu0
        %v823 = vadd.f32 %v650, %v822
        %824 = vmatprep.mubr.f32.mxu0 0.0
        %825 = vmatmul.mubr.f32.gmra.mxu0 %v692
        %v826 = vpop.f32.mrf.mxu0
        %v827 = vadd.f32 %v655, %v826
        %v828 = vpop.f32.mrf.mxu0
        %v829 = vadd.f32 %v655, %v828
        %830 = vdwg.mxu0
        %v831 = vmul.f32 %v761, 0.5
        %v832 = vmul.f32 %v767, 0.5
        %v833 = vmul.f32 %v773, 0.5
        %v834 = vmul.f32 %v779, 0.5
        %v835 = vmul.f32 %v785, 0.5
        %v836 = vmul.f32 %v791, 0.5
        %v837 = vmul.f32 %v797, 0.5
        %v838 = vmul.f32 %v803, 0.5
        %v839 = vmul.f32 %v809, 0.5
        %v840 = vmul.f32 %v815, 0.5
        %v841 = vmul.f32 %v821, 0.5
        %v842 = vmul.f32 %v827, 0.5
        %v843 = vadd.f32 %v831, 0.0
        %v844 = vadd.f32 %v832, 0.0
        %v845 = vadd.f32 %v833, 0.0
        %v846 = vadd.f32 %v834, 0.0
        %v847 = vadd.f32 %v835, 0.0
        %v848 = vadd.f32 %v836, 0.0
        %v849 = vadd.f32 %v837, 0.0
        %v850 = vadd.f32 %v838, 0.0
        %v851 = vadd.f32 %v839, 0.0
        %v852 = vadd.f32 %v840, 0.0
        %v853 = vadd.f32 %v841, 0.0
        %v854 = vadd.f32 %v842, 0.0
        %vm855 = vcmp.ge.f32.partialorder %v843, 1.0
        %vm856 = vcmp.ge.f32.partialorder %v844, 1.0
        %vm857 = vcmp.ge.f32.partialorder %v845, 1.0
        %vm858 = vcmp.ge.f32.partialorder %v846, 1.0
        %vm859 = vcmp.ge.f32.partialorder %v847, 1.0
        %vm860 = vcmp.ge.f32.partialorder %v848, 1.0
        %vm861 = vcmp.ge.f32.partialorder %v849, 1.0
        %vm862 = vcmp.ge.f32.partialorder %v850, 1.0
        %vm863 = vcmp.ge.f32.partialorder %v851, 1.0
        %vm864 = vcmp.ge.f32.partialorder %v852, 1.0
        %vm865 = vcmp.ge.f32.partialorder %v853, 1.0
        %vm866 = vcmp.ge.f32.partialorder %v854, 1.0
        %v867 = vsel %vm855, 1, 0
        %v868 = vsel %vm856, 1, 0
        %v869 = vsel %vm857, 1, 0
        %v870 = vsel %vm858, 1, 0
        %v871 = vsel %vm859, 1, 0
        %v872 = vsel %vm860, 1, 0
        %v873 = vsel %vm861, 1, 0
        %v874 = vsel %vm862, 1, 0
        %v875 = vsel %vm863, 1, 0
        %v876 = vsel %vm864, 1, 0
        %v877 = vsel %vm865, 1, 0
        %v878 = vsel %vm866, 1, 0
        %v879 = vcvt.s32.f32 %v867
        %v880 = vcvt.s32.f32 %v868
        %v881 = vcvt.s32.f32 %v869
        %v882 = vcvt.s32.f32 %v870
        %v883 = vcvt.s32.f32 %v871
        %v884 = vcvt.s32.f32 %v872
        %v885 = vcvt.s32.f32 %v873
        %v886 = vcvt.s32.f32 %v874
        %v887 = vcvt.s32.f32 %v875
        %v888 = vcvt.s32.f32 %v876
        %v889 = vcvt.s32.f32 %v877
        %v890 = vcvt.s32.f32 %v878
        %v891 = vsub.f32 1.0, %v879
        %v892 = vsub.f32 1.0, %v880
        %v893 = vsub.f32 1.0, %v881
        %v894 = vsub.f32 1.0, %v882
        %v895 = vsub.f32 1.0, %v883
        %v896 = vsub.f32 1.0, %v884
        %v897 = vsub.f32 1.0, %v885
        %v898 = vsub.f32 1.0, %v886
        %v899 = vsub.f32 1.0, %v887
        %v900 = vsub.f32 1.0, %v888
        %v901 = vsub.f32 1.0, %v889
        %v902 = vsub.f32 1.0, %v890
        %v903 = vmul.f32 %v843, %v891
        %v904 = vmul.f32 %v844, %v892
        %v905 = vmul.f32 %v845, %v893
        %v906 = vmul.f32 %v846, %v894
        %v907 = vmul.f32 %v847, %v895
        %v908 = vmul.f32 %v848, %v896
        %v909 = vmul.f32 %v849, %v897
        %v910 = vmul.f32 %v850, %v898
        %v911 = vmul.f32 %v851, %v899
        %v912 = vmul.f32 %v852, %v900
        %v913 = vmul.f32 %v853, %v901
        %v914 = vmul.f32 %v854, %v902
        %915 = vst.msk [vmem:[%s379] sm:$0xff] %vm412, %v887
        %916 = vst.msk [vmem:[%s379 + $0x8] sm:$0xff] %vm412, %v888
        %917 = vst.msk [vmem:[%s379 + $0x10] sm:$0xff] %vm412, %v889
        %918 = vst.msk [vmem:[%s379 + $0x18] sm:$0xff] %vm412, %v890
        %931 = vrot.lane.b32.xlu0 %v903, 64
        %v932 = vpop.permute.xlu0 %931
        %933 = vrot.lane.b32.xlu0 %v904, 64
        %v934 = vpop.permute.xlu0 %933
        %935 = vrot.lane.b32.xlu0 %v905, 64
        %v936 = vpop.permute.xlu0 %935
        %937 = vrot.lane.b32.xlu0 %v906, 64
        %v938 = vpop.permute.xlu0 %937
        %939 = vrot.lane.b32.xlu0 %v907, 64
        %v940 = vpop.permute.xlu0 %939
        %941 = vrot.lane.b32.xlu0 %v908, 64
        %v942 = vpop.permute.xlu0 %941
        %943 = vrot.lane.b32.xlu0 %v909, 64
        %v944 = vpop.permute.xlu0 %943
        %945 = vrot.lane.b32.xlu0 %v910, 64
        %v946 = vpop.permute.xlu0 %945
        %947 = vrot.lane.b32.xlu0 %v911, 64
        %v948 = vpop.permute.xlu0 %947
        %949 = vrot.lane.b32.xlu0 %v912, 64
        %v950 = vpop.permute.xlu0 %949
        %951 = vrot.lane.b32.xlu0 %v913, 64
        %v952 = vpop.permute.xlu0 %951
        %953 = vrot.lane.b32.xlu0 %v914, 64
        %v954 = vpop.permute.xlu0 %953
        %v967 = vsub.f32 %v761, %v932
        %v968 = vsub.f32 %v767, %v934
        %v969 = vsub.f32 %v773, %v936
        %v970 = vsub.f32 %v779, %v938
        %v971 = vsub.f32 %v785, %v940
        %v972 = vsub.f32 %v791, %v942
        %v973 = vsub.f32 %v797, %v944
        %v974 = vsub.f32 %v803, %v946
        %v975 = vsub.f32 %v809, %v948
        %v976 = vsub.f32 %v815, %v950
        %v977 = vsub.f32 %v821, %v952
        %v978 = vsub.f32 %v827, %v954
        %v979 = vmul.f32 %v967, 0.5
        %v980 = vmul.f32 %v968, 0.5
        %v981 = vmul.f32 %v969, 0.5
        %v982 = vmul.f32 %v970, 0.5
        %v983 = vmul.f32 %v971, 0.5
        %v984 = vmul.f32 %v972, 0.5
        %v985 = vmul.f32 %v973, 0.5
        %v986 = vmul.f32 %v974, 0.5
        %v987 = vmul.f32 %v975, 0.5
        %v988 = vmul.f32 %v976, 0.5
        %v989 = vmul.f32 %v977, 0.5
        %v990 = vmul.f32 %v978, 0.5
        %1003 = vrot.lane.b32.xlu0 %v979, 64
        %v1004 = vpop.permute.xlu0 %1003
        %1005 = vrot.lane.b32.xlu0 %v980, 64
        %v1006 = vpop.permute.xlu0 %1005
        %1007 = vrot.lane.b32.xlu0 %v981, 64
        %v1008 = vpop.permute.xlu0 %1007
        %1009 = vrot.lane.b32.xlu0 %v982, 64
        %v1010 = vpop.permute.xlu0 %1009
        %1011 = vrot.lane.b32.xlu0 %v983, 64
        %v1012 = vpop.permute.xlu0 %1011
        %1013 = vrot.lane.b32.xlu0 %v984, 64
        %v1014 = vpop.permute.xlu0 %1013
        %1015 = vrot.lane.b32.xlu0 %v985, 64
        %v1016 = vpop.permute.xlu0 %1015
        %1017 = vrot.lane.b32.xlu0 %v986, 64
        %v1018 = vpop.permute.xlu0 %1017
        %1019 = vrot.lane.b32.xlu0 %v987, 64
        %v1020 = vpop.permute.xlu0 %1019
        %1021 = vrot.lane.b32.xlu0 %v988, 64
        %v1022 = vpop.permute.xlu0 %1021
        %1023 = vrot.lane.b32.xlu0 %v989, 64
        %v1024 = vpop.permute.xlu0 %1023
        %1025 = vrot.lane.b32.xlu0 %v990, 64
        %v1026 = vpop.permute.xlu0 %1025
        %v1039 = vadd.f32 %v903, %v1004
        %v1040 = vadd.f32 %v904, %v1006
        %v1041 = vadd.f32 %v905, %v1008
        %v1042 = vadd.f32 %v906, %v1010
        %v1043 = vadd.f32 %v907, %v1012
        %v1044 = vadd.f32 %v908, %v1014
        %v1045 = vadd.f32 %v909, %v1016
        %v1046 = vadd.f32 %v910, %v1018
        %v1047 = vadd.f32 %v911, %v1020
        %v1048 = vadd.f32 %v912, %v1022
        %v1049 = vadd.f32 %v913, %v1024
        %v1050 = vadd.f32 %v914, %v1026
        %vm1051 = vcmp.ge.f32.partialorder %v1039, 1.0
        %vm1052 = vcmp.ge.f32.partialorder %v1040, 1.0
        %vm1053 = vcmp.ge.f32.partialorder %v1041, 1.0
        %vm1054 = vcmp.ge.f32.partialorder %v1042, 1.0
        %vm1055 = vcmp.ge.f32.partialorder %v1043, 1.0
        %vm1056 = vcmp.ge.f32.partialorder %v1044, 1.0
        %vm1057 = vcmp.ge.f32.partialorder %v1045, 1.0
        %vm1058 = vcmp.ge.f32.partialorder %v1046, 1.0
        %vm1059 = vcmp.ge.f32.partialorder %v1047, 1.0
        %vm1060 = vcmp.ge.f32.partialorder %v1048, 1.0
        %vm1061 = vcmp.ge.f32.partialorder %v1049, 1.0
        %vm1062 = vcmp.ge.f32.partialorder %v1050, 1.0
        %v1063 = vsel %vm1051, 1, 0
        %v1064 = vsel %vm1052, 1, 0
        %v1065 = vsel %vm1053, 1, 0
        %v1066 = vsel %vm1054, 1, 0
        %v1067 = vsel %vm1055, 1, 0
        %v1068 = vsel %vm1056, 1, 0
        %v1069 = vsel %vm1057, 1, 0
        %v1070 = vsel %vm1058, 1, 0
        %v1071 = vsel %vm1059, 1, 0
        %v1072 = vsel %vm1060, 1, 0
        %v1073 = vsel %vm1061, 1, 0
        %v1074 = vsel %vm1062, 1, 0
        %v1075 = vcvt.s32.f32 %v1063
        %v1076 = vcvt.s32.f32 %v1064
        %v1077 = vcvt.s32.f32 %v1065
        %v1078 = vcvt.s32.f32 %v1066
        %v1079 = vcvt.s32.f32 %v1067
        %v1080 = vcvt.s32.f32 %v1068
        %v1081 = vcvt.s32.f32 %v1069
        %v1082 = vcvt.s32.f32 %v1070
        %v1083 = vcvt.s32.f32 %v1071
        %v1084 = vcvt.s32.f32 %v1072
        %v1085 = vcvt.s32.f32 %v1073
        %v1086 = vcvt.s32.f32 %v1074
        %v1087 = vsub.f32 1.0, %v1075
        %v1088 = vsub.f32 1.0, %v1076
        %v1089 = vsub.f32 1.0, %v1077
        %v1090 = vsub.f32 1.0, %v1078
        %v1091 = vsub.f32 1.0, %v1079
        %v1092 = vsub.f32 1.0, %v1080
        %v1093 = vsub.f32 1.0, %v1081
        %v1094 = vsub.f32 1.0, %v1082
        %v1095 = vsub.f32 1.0, %v1083
        %v1096 = vsub.f32 1.0, %v1084
        %v1097 = vsub.f32 1.0, %v1085
        %v1098 = vsub.f32 1.0, %v1086
        %v1099 = vmul.f32 %v1039, %v1087
        %v1100 = vmul.f32 %v1040, %v1088
        %v1101 = vmul.f32 %v1041, %v1089
        %v1102 = vmul.f32 %v1042, %v1090
        %v1103 = vmul.f32 %v1043, %v1091
        %v1104 = vmul.f32 %v1044, %v1092
        %v1105 = vmul.f32 %v1045, %v1093
        %v1106 = vmul.f32 %v1046, %v1094
        %v1107 = vmul.f32 %v1047, %v1095
        %v1108 = vmul.f32 %v1048, %v1096
        %v1109 = vmul.f32 %v1049, %v1097
        %v1110 = vmul.f32 %v1050, %v1098
        %s1111 = scalar_lea.vmem %s379, 32 [#allocation6]
        %1112 = vst.msk [vmem:[%s1111] sm:$0xff] %vm412, %v1083
        %1113 = vst.msk [vmem:[%s1111 + $0x8] sm:$0xff] %vm412, %v1084
        %1114 = vst.msk [vmem:[%s1111 + $0x10] sm:$0xff] %vm412, %v1085
        %1115 = vst.msk [vmem:[%s1111 + $0x18] sm:$0xff] %vm412, %v1086
        %v1117 = vsel %vm412, %v1083, 0
        %v1120 = vsel %vm412, %v1084, 0
        %v1123 = vsel %vm412, %v1085, 0
        %v1126 = vsel %vm412, %v1086, 0
        %v1129 = vsel %vm412, %v1079, 0
        %v1132 = vsel %vm412, %v1080, 0
        %v1135 = vsel %vm412, %v1081, 0
        %v1138 = vsel %vm412, %v1082, 0
        %1140 = vmatprep.subr.mxu0 0.0
        %1141 = vmatpush1.xpose.msra.mxu0 0.0
        %1142 = vmatprep.subr.mxu0 0.0
        %1143 = vmatpush1.xpose.msra.mxu0 0.0
        %1144 = vmatprep.subr.mxu0 0.0
        %1145 = vmatpush1.xpose.msra.mxu0 0.0
        %1146 = vmatprep.subr.mxu0 0.0
        %1147 = vmatpush1.xpose.msra.mxu0 0.0
        %1148 = vmatprep.subr.mxu0 0.0
        %1149 = vmatpush1.xpose.msra.mxu0 0.0
        %1150 = vmatprep.subr.mxu0 0.0
        %1151 = vmatpush1.xpose.msra.mxu0 0.0
        %1152 = vmatprep.subr.mxu0 0.0
        %1153 = vmatpush1.xpose.msra.mxu0 0.0
        %1154 = vmatprep.subr.mxu0 0.0
        %1155 = vmatpush1.xpose.msra.mxu0 0.0
        %1156 = vmatprep.subr.mxu0 0.0
        %1157 = vmatpush1.xpose.msra.mxu0 0.0
        %1158 = vmatprep.subr.mxu0 0.0
        %1159 = vmatpush1.xpose.msra.mxu0 0.0
        %1160 = vmatprep.subr.mxu0 0.0
        %1161 = vmatpush1.xpose.msra.mxu0 0.0
        %1162 = vmatprep.subr.mxu0 0.0
        %1163 = vmatpush1.xpose.msra.mxu0 0.0
        %1164 = vmatprep.subr.mxu0 0.0
        %1165 = vmatpush1.xpose.msra.mxu0 %v1138
        %1166 = vmatprep.subr.mxu0 0.0
        %1167 = vmatpush1.xpose.msra.mxu0 %v1135
        %1168 = vmatprep.subr.mxu0 0.0
        %1169 = vmatpush1.xpose.msra.mxu0 %v1132
        %1170 = vmatprep.subr.mxu0 0.0
        %1171 = vmatpush1.xpose.msra.mxu0 %v1129
        %1172 = vmatprep.subr.mxu0 0.0
        %1173 = vmatpush2.xpose.msra.mxu0 0.0
        %1174 = vmatprep.subr.mxu0 0.0
        %1175 = vmatpush2.xpose.msra.mxu0 0.0
        %1176 = vmatprep.subr.mxu0 0.0
        %1177 = vmatpush2.xpose.msra.mxu0 0.0
        %1178 = vmatprep.subr.mxu0 0.0
        %1179 = vmatpush2.xpose.msra.mxu0 0.0
        %1180 = vmatprep.subr.mxu0 0.0
        %1181 = vmatpush2.xpose.msra.mxu0 0.0
        %1182 = vmatprep.subr.mxu0 0.0
        %1183 = vmatpush2.xpose.msra.mxu0 0.0
        %1184 = vmatprep.subr.mxu0 0.0
        %1185 = vmatpush2.xpose.msra.mxu0 0.0
        %1186 = vmatprep.subr.mxu0 0.0
        %1187 = vmatpush2.xpose.msra.mxu0 0.0
        %1188 = vmatprep.subr.mxu0 0.0
        %1189 = vmatpush2.xpose.msra.mxu0 0.0
        %1190 = vmatprep.subr.mxu0 0.0
        %1191 = vmatpush2.xpose.msra.mxu0 0.0
        %1192 = vmatprep.subr.mxu0 0.0
        %1193 = vmatpush2.xpose.msra.mxu0 0.0
        %1194 = vmatprep.subr.mxu0 0.0
        %1195 = vmatpush2.xpose.msra.mxu0 0.0
        %1196 = vmatprep.subr.mxu0 0.0
        %1197 = vmatpush2.xpose.msra.mxu0 0.0
        %1198 = vmatprep.subr.mxu0 0.0
        %1199 = vmatpush2.xpose.msra.mxu0 0.0
        %1200 = vmatprep.subr.mxu0 0.0
        %1201 = vmatpush2.xpose.msra.mxu0 0.0
        %1202 = vmatprep.subr.mxu0 0.0
        %1203 = vmatpush2.xpose.msra.mxu0 0.0
        %1204 = vmatprep.mubr.f32.mxu0 0.0
        %1205 = vmatmul.mubr.f32.gmra.mxu0 %v1117
        %v1206 = vpop.f32.mrf.mxu0
        %v1207 = vadd.f32 0.0, %v1206
        %v1208 = vpop.f32.mrf.mxu0
        %1209 = vmatprep.mubr.f32.mxu0 0.0
        %1210 = vmatmul.mubr.f32.gmra.mxu0 %v1120
        %v1211 = vpop.f32.mrf.mxu0
        %v1212 = vadd.f32 0.0, %v1211
        %v1213 = vpop.f32.mrf.mxu0
        %1214 = vmatprep.mubr.f32.mxu0 0.0
        %1215 = vmatmul.mubr.f32.gmra.mxu0 %v1123
        %v1216 = vpop.f32.mrf.mxu0
        %v1217 = vadd.f32 0.0, %v1216
        %v1218 = vpop.f32.mrf.mxu0
        %1219 = vmatprep.mubr.f32.mxu0 0.0
        %1220 = vmatmul.mubr.f32.gmra.mxu0 %v1126
        %v1221 = vpop.f32.mrf.mxu0
        %v1222 = vadd.f32 0.0, %v1221
        %v1223 = vpop.f32.mrf.mxu0
        %1224 = vdwg.mxu0
        %v1226 = vsel %vm412, %v887, 0
        %v1229 = vsel %vm412, %v888, 0
        %v1232 = vsel %vm412, %v889, 0
        %v1235 = vsel %vm412, %v890, 0
        %v1238 = vsel %vm412, %v883, 0
        %v1241 = vsel %vm412, %v884, 0
        %v1244 = vsel %vm412, %v885, 0
        %v1247 = vsel %vm412, %v886, 0
        %1249 = vmatprep.subr.mxu0 0.0
        %1250 = vmatpush1.xpose.msra.mxu0 0.0
        %1251 = vmatprep.subr.mxu0 0.0
        %1252 = vmatpush1.xpose.msra.mxu0 0.0
        %1253 = vmatprep.subr.mxu0 0.0
        %1254 = vmatpush1.xpose.msra.mxu0 0.0
        %1255 = vmatprep.subr.mxu0 0.0
        %1256 = vmatpush1.xpose.msra.mxu0 0.0
        %1257 = vmatprep.subr.mxu0 0.0
        %1258 = vmatpush1.xpose.msra.mxu0 0.0
        %1259 = vmatprep.subr.mxu0 0.0
        %1260 = vmatpush1.xpose.msra.mxu0 0.0
        %1261 = vmatprep.subr.mxu0 0.0
        %1262 = vmatpush1.xpose.msra.mxu0 0.0
        %1263 = vmatprep.subr.mxu0 0.0
        %1264 = vmatpush1.xpose.msra.mxu0 0.0
        %1265 = vmatprep.subr.mxu0 0.0
        %1266 = vmatpush1.xpose.msra.mxu0 0.0
        %1267 = vmatprep.subr.mxu0 0.0
        %1268 = vmatpush1.xpose.msra.mxu0 0.0
        %1269 = vmatprep.subr.mxu0 0.0
        %1270 = vmatpush1.xpose.msra.mxu0 0.0
        %1271 = vmatprep.subr.mxu0 0.0
        %1272 = vmatpush1.xpose.msra.mxu0 0.0
        %1273 = vmatprep.subr.mxu0 0.0
        %1274 = vmatpush1.xpose.msra.mxu0 %v1247
        %1275 = vmatprep.subr.mxu0 0.0
        %1276 = vmatpush1.xpose.msra.mxu0 %v1244
        %1277 = vmatprep.subr.mxu0 0.0
        %1278 = vmatpush1.xpose.msra.mxu0 %v1241
        %1279 = vmatprep.subr.mxu0 0.0
        %1280 = vmatpush1.xpose.msra.mxu0 %v1238
        %1281 = vmatprep.subr.mxu0 0.0
        %1282 = vmatpush2.xpose.msra.mxu0 0.0
        %1283 = vmatprep.subr.mxu0 0.0
        %1284 = vmatpush2.xpose.msra.mxu0 0.0
        %1285 = vmatprep.subr.mxu0 0.0
        %1286 = vmatpush2.xpose.msra.mxu0 0.0
        %1287 = vmatprep.subr.mxu0 0.0
        %1288 = vmatpush2.xpose.msra.mxu0 0.0
        %1289 = vmatprep.subr.mxu0 0.0
        %1290 = vmatpush2.xpose.msra.mxu0 0.0
        %1291 = vmatprep.subr.mxu0 0.0
        %1292 = vmatpush2.xpose.msra.mxu0 0.0
        %1293 = vmatprep.subr.mxu0 0.0
        %1294 = vmatpush2.xpose.msra.mxu0 0.0
        %1295 = vmatprep.subr.mxu0 0.0
        %1296 = vmatpush2.xpose.msra.mxu0 0.0
        %1297 = vmatprep.subr.mxu0 0.0
        %1298 = vmatpush2.xpose.msra.mxu0 0.0
        %1299 = vmatprep.subr.mxu0 0.0
        %1300 = vmatpush2.xpose.msra.mxu0 0.0
        %1301 = vmatprep.subr.mxu0 0.0
        %1302 = vmatpush2.xpose.msra.mxu0 0.0
        %1303 = vmatprep.subr.mxu0 0.0
        %1304 = vmatpush2.xpose.msra.mxu0 0.0
        %1305 = vmatprep.subr.mxu0 0.0
        %1306 = vmatpush2.xpose.msra.mxu0 0.0
        %1307 = vmatprep.subr.mxu0 0.0
        %1308 = vmatpush2.xpose.msra.mxu0 0.0
        %1309 = vmatprep.subr.mxu0 0.0
        %1310 = vmatpush2.xpose.msra.mxu0 0.0
        %1311 = vmatprep.subr.mxu0 0.0
        %1312 = vmatpush2.xpose.msra.mxu0 0.0
        %1313 = vmatprep.mubr.f32.mxu0 0.0
        %1314 = vmatmul.mubr.f32.gmra.mxu0 %v1226
        %v1315 = vpop.f32.mrf.mxu0
        %v1316 = vadd.f32 %v1207, %v1315
        %v1317 = vpop.f32.mrf.mxu0
        %1318 = vmatprep.mubr.f32.mxu0 0.0
        %1319 = vmatmul.mubr.f32.gmra.mxu0 %v1229
        %v1320 = vpop.f32.mrf.mxu0
        %v1321 = vadd.f32 %v1212, %v1320
        %v1322 = vpop.f32.mrf.mxu0
        %1323 = vmatprep.mubr.f32.mxu0 0.0
        %1324 = vmatmul.mubr.f32.gmra.mxu0 %v1232
        %v1325 = vpop.f32.mrf.mxu0
        %v1326 = vadd.f32 %v1217, %v1325
        %v1327 = vpop.f32.mrf.mxu0
        %1328 = vmatprep.mubr.f32.mxu0 0.0
        %1329 = vmatmul.mubr.f32.gmra.mxu0 %v1235
        %v1330 = vpop.f32.mrf.mxu0
        %v1331 = vadd.f32 %v1222, %v1330
        %v1332 = vpop.f32.mrf.mxu0
        %1333 = vdwg.mxu0
        %v1334 = vld [vmem:[%s3] sm:$0xff]
        %v1335 = vld [vmem:[%s3 + $0x8] sm:$0xff]
        %v1336 = vld [vmem:[%s3 + $0x10] sm:$0xff]
        %v1337 = vld [vmem:[%s3 + $0x18] sm:$0xff]
        %v1338 = vmul.f32 %v1316, %v1334
        %v1339 = vmul.f32 %v1321, %v1335
        %v1340 = vmul.f32 %v1326, %v1336
        %v1341 = vmul.f32 %v1331, %v1337
        %v1343 = vsel %vm657, %v1338, 0
        %v1346 = vsel %vm657, %v1339, 0
        %v1349 = vsel %vm657, %v1340, 0
        %v1352 = vsel %vm657, %v1341, 0
        %1354 = vmatprep.subr.mxu0 0.0
        %1355 = vmatpush1.msra.mxu0 0.0
        %1356 = vmatprep.subr.mxu0 0.0
        %1357 = vmatpush1.msra.mxu0 0.0
        %1358 = vmatprep.subr.mxu0 0.0
        %1359 = vmatpush1.msra.mxu0 0.0
        %1360 = vmatprep.subr.mxu0 0.0
        %1361 = vmatpush1.msra.mxu0 0.0
        %1362 = vmatprep.subr.mxu0 0.0
        %1363 = vmatpush1.msra.mxu0 0.0
        %1364 = vmatprep.subr.mxu0 0.0
        %1365 = vmatpush1.msra.mxu0 0.0
        %1366 = vmatprep.subr.mxu0 0.0
        %1367 = vmatpush1.msra.mxu0 0.0
        %1368 = vmatprep.subr.mxu0 0.0
        %1369 = vmatpush1.msra.mxu0 0.0
        %1370 = vmatprep.subr.mxu0 0.0
        %1371 = vmatpush1.msra.mxu0 0.0
        %1372 = vmatprep.subr.mxu0 0.0
        %1373 = vmatpush1.msra.mxu0 0.0
        %1374 = vmatprep.subr.mxu0 0.0
        %1375 = vmatpush1.msra.mxu0 0.0
        %1376 = vmatprep.subr.mxu0 0.0
        %1377 = vmatpush1.msra.mxu0 0.0
        %1378 = vmatprep.subr.mxu0 0.0
        %1379 = vmatpush1.msra.mxu0 %v882
        %1380 = vmatprep.subr.mxu0 0.0
        %1381 = vmatpush1.msra.mxu0 %v881
        %1382 = vmatprep.subr.mxu0 0.0
        %1383 = vmatpush1.msra.mxu0 %v880
        %1384 = vmatprep.subr.mxu0 0.0
        %1385 = vmatpush1.msra.mxu0 %v879
        %1386 = vmatprep.subr.mxu0 0.0
        %1387 = vmatpush2.msra.mxu0 0.0
        %1388 = vmatprep.subr.mxu0 0.0
        %1389 = vmatpush2.msra.mxu0 0.0
        %1390 = vmatprep.subr.mxu0 0.0
        %1391 = vmatpush2.msra.mxu0 0.0
        %1392 = vmatprep.subr.mxu0 0.0
        %1393 = vmatpush2.msra.mxu0 0.0
        %1394 = vmatprep.subr.mxu0 0.0
        %1395 = vmatpush2.msra.mxu0 0.0
        %1396 = vmatprep.subr.mxu0 0.0
        %1397 = vmatpush2.msra.mxu0 0.0
        %1398 = vmatprep.subr.mxu0 0.0
        %1399 = vmatpush2.msra.mxu0 0.0
        %1400 = vmatprep.subr.mxu0 0.0
        %1401 = vmatpush2.msra.mxu0 0.0
        %1402 = vmatprep.subr.mxu0 0.0
        %1403 = vmatpush2.msra.mxu0 0.0
        %1404 = vmatprep.subr.mxu0 0.0
        %1405 = vmatpush2.msra.mxu0 0.0
        %1406 = vmatprep.subr.mxu0 0.0
        %1407 = vmatpush2.msra.mxu0 0.0
        %1408 = vmatprep.subr.mxu0 0.0
        %1409 = vmatpush2.msra.mxu0 0.0
        %1410 = vmatprep.subr.mxu0 0.0
        %1411 = vmatpush2.msra.mxu0 0.0
        %1412 = vmatprep.subr.mxu0 0.0
        %1413 = vmatpush2.msra.mxu0 0.0
        %1414 = vmatprep.subr.mxu0 0.0
        %1415 = vmatpush2.msra.mxu0 0.0
        %1416 = vmatprep.subr.mxu0 0.0
        %1417 = vmatpush2.msra.mxu0 0.0
        %1418 = vmatprep.mubr.f32.mxu0 0.0
        %1419 = vmatmul.mubr.f32.gmra.mxu0 %v1343
        %v1420 = vpop.f32.mrf.mxu0
        %v1421 = vadd.f32 0.0, %v1420
        %v1422 = vpop.f32.mrf.mxu0
        %1423 = vmatprep.mubr.f32.mxu0 0.0
        %1424 = vmatmul.mubr.f32.gmra.mxu0 %v1346
        %v1425 = vpop.f32.mrf.mxu0
        %v1426 = vadd.f32 0.0, %v1425
        %v1427 = vpop.f32.mrf.mxu0
        %1428 = vmatprep.mubr.f32.mxu0 0.0
        %1429 = vmatmul.mubr.f32.gmra.mxu0 %v1349
        %v1430 = vpop.f32.mrf.mxu0
        %v1431 = vadd.f32 0.0, %v1430
        %v1432 = vpop.f32.mrf.mxu0
        %1433 = vmatprep.mubr.f32.mxu0 0.0
        %1434 = vmatmul.mubr.f32.gmra.mxu0 %v1352
        %v1435 = vpop.f32.mrf.mxu0
        %v1436 = vadd.f32 0.0, %v1435
        %v1437 = vpop.f32.mrf.mxu0
        %1438 = vdwg.mxu0
        %v1439 = vmul.f32 %v1421, 0.5
        %v1440 = vmul.f32 %v1426, 0.5
        %v1441 = vmul.f32 %v1431, 0.5
        %v1442 = vmul.f32 %v1436, 0.5
        %v1443 = vadd.f32 %v1439, 0.0
        %v1444 = vadd.f32 %v1440, 0.0
        %v1445 = vadd.f32 %v1441, 0.0
        %v1446 = vadd.f32 %v1442, 0.0
        %vm1447 = vcmp.ge.f32.partialorder %v1443, 0.5
        %vm1448 = vcmp.ge.f32.partialorder %v1444, 0.5
        %vm1449 = vcmp.ge.f32.partialorder %v1445, 0.5
        %vm1450 = vcmp.ge.f32.partialorder %v1446, 0.5
        %v1451 = vsel %vm1447, 1, 0
        %v1452 = vsel %vm1448, 1, 0
        %v1453 = vsel %vm1449, 1, 0
        %v1454 = vsel %vm1450, 1, 0
        %v1455 = vcvt.s32.f32 %v1451
        %v1456 = vcvt.s32.f32 %v1452
        %v1457 = vcvt.s32.f32 %v1453
        %v1458 = vcvt.s32.f32 %v1454
        %v1459 = vsub.f32 1.0, %v1455
        %v1460 = vsub.f32 1.0, %v1456
        %v1461 = vsub.f32 1.0, %v1457
        %v1462 = vsub.f32 1.0, %v1458
        %v1463 = vmul.f32 %v1443, %v1459
        %v1464 = vmul.f32 %v1444, %v1460
        %v1465 = vmul.f32 %v1445, %v1461
        %v1466 = vmul.f32 %v1446, %v1462
        %1467 = vst.msk [vmem:[#allocation3] sm:$0xff] %vm412, %v1455
        %1468 = vst.msk [vmem:[#allocation3 + $0x10] sm:$0xff] %vm412, %v1456
        %1469 = vst.msk [vmem:[#allocation3 + $0x20] sm:$0xff] %vm412, %v1457
        %1470 = vst.msk [vmem:[#allocation3 + $0x30] sm:$0xff] %vm412, %v1458
        %1471 = vmatprep.subr.mxu0 0.0
        %1472 = vmatpush1.msra.mxu0 0.0
        %1473 = vmatprep.subr.mxu0 0.0
        %1474 = vmatpush1.msra.mxu0 0.0
        %1475 = vmatprep.subr.mxu0 0.0
        %1476 = vmatpush1.msra.mxu0 0.0
        %1477 = vmatprep.subr.mxu0 0.0
        %1478 = vmatpush1.msra.mxu0 0.0
        %1479 = vmatprep.subr.mxu0 0.0
        %1480 = vmatpush1.msra.mxu0 0.0
        %1481 = vmatprep.subr.mxu0 0.0
        %1482 = vmatpush1.msra.mxu0 0.0
        %1483 = vmatprep.subr.mxu0 0.0
        %1484 = vmatpush1.msra.mxu0 0.0
        %1485 = vmatprep.subr.mxu0 0.0
        %1486 = vmatpush1.msra.mxu0 0.0
        %1487 = vmatprep.subr.mxu0 0.0
        %1488 = vmatpush1.msra.mxu0 0.0
        %1489 = vmatprep.subr.mxu0 0.0
        %1490 = vmatpush1.msra.mxu0 0.0
        %1491 = vmatprep.subr.mxu0 0.0
        %1492 = vmatpush1.msra.mxu0 0.0
        %1493 = vmatprep.subr.mxu0 0.0
        %1494 = vmatpush1.msra.mxu0 0.0
        %1495 = vmatprep.subr.mxu0 0.0
        %1496 = vmatpush1.msra.mxu0 %v1078
        %1497 = vmatprep.subr.mxu0 0.0
        %1498 = vmatpush1.msra.mxu0 %v1077
        %1499 = vmatprep.subr.mxu0 0.0
        %1500 = vmatpush1.msra.mxu0 %v1076
        %1501 = vmatprep.subr.mxu0 0.0
        %1502 = vmatpush1.msra.mxu0 %v1075
        %1503 = vmatprep.subr.mxu0 0.0
        %1504 = vmatpush2.msra.mxu0 0.0
        %1505 = vmatprep.subr.mxu0 0.0
        %1506 = vmatpush2.msra.mxu0 0.0
        %1507 = vmatprep.subr.mxu0 0.0
        %1508 = vmatpush2.msra.mxu0 0.0
        %1509 = vmatprep.subr.mxu0 0.0
        %1510 = vmatpush2.msra.mxu0 0.0
        %1511 = vmatprep.subr.mxu0 0.0
        %1512 = vmatpush2.msra.mxu0 0.0
        %1513 = vmatprep.subr.mxu0 0.0
        %1514 = vmatpush2.msra.mxu0 0.0
        %1515 = vmatprep.subr.mxu0 0.0
        %1516 = vmatpush2.msra.mxu0 0.0
        %1517 = vmatprep.subr.mxu0 0.0
        %1518 = vmatpush2.msra.mxu0 0.0
        %1519 = vmatprep.subr.mxu0 0.0
        %1520 = vmatpush2.msra.mxu0 0.0
        %1521 = vmatprep.subr.mxu0 0.0
        %1522 = vmatpush2.msra.mxu0 0.0
        %1523 = vmatprep.subr.mxu0 0.0
        %1524 = vmatpush2.msra.mxu0 0.0
        %1525 = vmatprep.subr.mxu0 0.0
        %1526 = vmatpush2.msra.mxu0 0.0
        %1527 = vmatprep.subr.mxu0 0.0
        %1528 = vmatpush2.msra.mxu0 0.0
        %1529 = vmatprep.subr.mxu0 0.0
        %1530 = vmatpush2.msra.mxu0 0.0
        %1531 = vmatprep.subr.mxu0 0.0
        %1532 = vmatpush2.msra.mxu0 0.0
        %1533 = vmatprep.subr.mxu0 0.0
        %1534 = vmatpush2.msra.mxu0 0.0
        %1535 = vmatprep.mubr.f32.mxu0 0.0
        %1536 = vmatmul.mubr.f32.gmra.mxu0 %v1343
        %v1537 = vpop.f32.mrf.mxu0
        %v1538 = vadd.f32 0.0, %v1537
        %v1539 = vpop.f32.mrf.mxu0
        %1540 = vmatprep.mubr.f32.mxu0 0.0
        %1541 = vmatmul.mubr.f32.gmra.mxu0 %v1346
        %v1542 = vpop.f32.mrf.mxu0
        %v1543 = vadd.f32 0.0, %v1542
        %v1544 = vpop.f32.mrf.mxu0
        %1545 = vmatprep.mubr.f32.mxu0 0.0
        %1546 = vmatmul.mubr.f32.gmra.mxu0 %v1349
        %v1547 = vpop.f32.mrf.mxu0
        %v1548 = vadd.f32 0.0, %v1547
        %v1549 = vpop.f32.mrf.mxu0
        %1550 = vmatprep.mubr.f32.mxu0 0.0
        %1551 = vmatmul.mubr.f32.gmra.mxu0 %v1352
        %v1552 = vpop.f32.mrf.mxu0
        %v1553 = vadd.f32 0.0, %v1552
        %v1554 = vpop.f32.mrf.mxu0
        %1555 = vdwg.mxu0
        %v1556 = vsub.f32 %v1538, %v1463
        %v1557 = vsub.f32 %v1543, %v1464
        %v1558 = vsub.f32 %v1548, %v1465
        %v1559 = vsub.f32 %v1553, %v1466
        %v1560 = vmul.f32 %v1556, 0.5
        %v1561 = vmul.f32 %v1557, 0.5
        %v1562 = vmul.f32 %v1558, 0.5
        %v1563 = vmul.f32 %v1559, 0.5
        %v1564 = vadd.f32 %v1463, %v1560
        %v1565 = vadd.f32 %v1464, %v1561
        %v1566 = vadd.f32 %v1465, %v1562
        %v1567 = vadd.f32 %v1466, %v1563
        %vm1568 = vcmp.ge.f32.partialorder %v1564, 0.5
        %vm1569 = vcmp.ge.f32.partialorder %v1565, 0.5
        %vm1570 = vcmp.ge.f32.partialorder %v1566, 0.5
        %vm1571 = vcmp.ge.f32.partialorder %v1567, 0.5
        %v1572 = vsel %vm1568, 1, 0
        %v1573 = vsel %vm1569, 1, 0
        %v1574 = vsel %vm1570, 1, 0
        %v1575 = vsel %vm1571, 1, 0
        %v1576 = vcvt.s32.f32 %v1572
        %v1577 = vcvt.s32.f32 %v1573
        %v1578 = vcvt.s32.f32 %v1574
        %v1579 = vcvt.s32.f32 %v1575
        %v1580 = vsub.f32 1.0, %v1576
        %v1581 = vsub.f32 1.0, %v1577
        %v1582 = vsub.f32 1.0, %v1578
        %v1583 = vsub.f32 1.0, %v1579
        %v1584 = vmul.f32 %v1564, %v1580
        %v1585 = vmul.f32 %v1565, %v1581
        %v1586 = vmul.f32 %v1566, %v1582
        %v1587 = vmul.f32 %v1567, %v1583
        %1592 = vrot.lane.b32.xlu0 %v1576, 64
        %v1593 = vpop.permute.xlu0 %1592
        %1594 = vrot.lane.b32.xlu0 %v1577, 64
        %v1595 = vpop.permute.xlu0 %1594
        %1596 = vrot.lane.b32.xlu0 %v1578, 64
        %v1597 = vpop.permute.xlu0 %1596
        %1598 = vrot.lane.b32.xlu0 %v1579, 64
        %v1599 = vpop.permute.xlu0 %1598
        %1604 = vst.msk [vmem:[#allocation3] sm:$0xff] %vm470, %v1593
        %1605 = vst.msk [vmem:[#allocation3 + $0x10] sm:$0xff] %vm470, %v1595
        %1606 = vst.msk [vmem:[#allocation3 + $0x20] sm:$0xff] %vm470, %v1597
        %1607 = vst.msk [vmem:[#allocation3 + $0x30] sm:$0xff] %vm470, %v1599
        %v1608 = vsub.f32 %v763, %v1099
        %v1609 = vsub.f32 %v769, %v1100
        %v1610 = vsub.f32 %v775, %v1101
        %v1611 = vsub.f32 %v781, %v1102
        %v1612 = vsub.f32 %v787, %v1103
        %v1613 = vsub.f32 %v793, %v1104
        %v1614 = vsub.f32 %v799, %v1105
        %v1615 = vsub.f32 %v805, %v1106
        %v1616 = vsub.f32 %v811, %v1107
        %v1617 = vsub.f32 %v817, %v1108
        %v1618 = vsub.f32 %v823, %v1109
        %v1619 = vsub.f32 %v829, %v1110
        %v1620 = vmul.f32 %v1608, 0.5
        %v1621 = vmul.f32 %v1609, 0.5
        %v1622 = vmul.f32 %v1610, 0.5
        %v1623 = vmul.f32 %v1611, 0.5
        %v1624 = vmul.f32 %v1612, 0.5
        %v1625 = vmul.f32 %v1613, 0.5
        %v1626 = vmul.f32 %v1614, 0.5
        %v1627 = vmul.f32 %v1615, 0.5
        %v1628 = vmul.f32 %v1616, 0.5
        %v1629 = vmul.f32 %v1617, 0.5
        %v1630 = vmul.f32 %v1618, 0.5
        %v1631 = vmul.f32 %v1619, 0.5
        %v1632 = vadd.f32 %v1099, %v1620
        %v1633 = vadd.f32 %v1100, %v1621
        %v1634 = vadd.f32 %v1101, %v1622
        %v1635 = vadd.f32 %v1102, %v1623
        %v1636 = vadd.f32 %v1103, %v1624
        %v1637 = vadd.f32 %v1104, %v1625
        %v1638 = vadd.f32 %v1105, %v1626
        %v1639 = vadd.f32 %v1106, %v1627
        %v1640 = vadd.f32 %v1107, %v1628
        %v1641 = vadd.f32 %v1108, %v1629
        %v1642 = vadd.f32 %v1109, %v1630
        %v1643 = vadd.f32 %v1110, %v1631
        %vm1644 = vcmp.ge.f32.partialorder %v1632, 1.0
        %vm1645 = vcmp.ge.f32.partialorder %v1633, 1.0
        %vm1646 = vcmp.ge.f32.partialorder %v1634, 1.0
        %vm1647 = vcmp.ge.f32.partialorder %v1635, 1.0
        %vm1648 = vcmp.ge.f32.partialorder %v1636, 1.0
        %vm1649 = vcmp.ge.f32.partialorder %v1637, 1.0
        %vm1650 = vcmp.ge.f32.partialorder %v1638, 1.0
        %vm1651 = vcmp.ge.f32.partialorder %v1639, 1.0
        %vm1652 = vcmp.ge.f32.partialorder %v1640, 1.0
        %vm1653 = vcmp.ge.f32.partialorder %v1641, 1.0
        %vm1654 = vcmp.ge.f32.partialorder %v1642, 1.0
        %vm1655 = vcmp.ge.f32.partialorder %v1643, 1.0
        %v1656 = vsel %vm1644, 1, 0
        %v1657 = vsel %vm1645, 1, 0
        %v1658 = vsel %vm1646, 1, 0
        %v1659 = vsel %vm1647, 1, 0
        %v1660 = vsel %vm1648, 1, 0
        %v1661 = vsel %vm1649, 1, 0
        %v1662 = vsel %vm1650, 1, 0
        %v1663 = vsel %vm1651, 1, 0
        %v1664 = vsel %vm1652, 1, 0
        %v1665 = vsel %vm1653, 1, 0
        %v1666 = vsel %vm1654, 1, 0
        %v1667 = vsel %vm1655, 1, 0
        %v1668 = vcvt.s32.f32 %v1656
        %v1669 = vcvt.s32.f32 %v1657
        %v1670 = vcvt.s32.f32 %v1658
        %v1671 = vcvt.s32.f32 %v1659
        %v1672 = vcvt.s32.f32 %v1660
        %v1673 = vcvt.s32.f32 %v1661
        %v1674 = vcvt.s32.f32 %v1662
        %v1675 = vcvt.s32.f32 %v1663
        %v1676 = vcvt.s32.f32 %v1664
        %v1677 = vcvt.s32.f32 %v1665
        %v1678 = vcvt.s32.f32 %v1666
        %v1679 = vcvt.s32.f32 %v1667
        %v1680 = vsub.f32 1.0, %v1668
        %v1681 = vsub.f32 1.0, %v1669
        %v1682 = vsub.f32 1.0, %v1670
        %v1683 = vsub.f32 1.0, %v1671
        %v1684 = vsub.f32 1.0, %v1672
        %v1685 = vsub.f32 1.0, %v1673
        %v1686 = vsub.f32 1.0, %v1674
        %v1687 = vsub.f32 1.0, %v1675
        %v1688 = vsub.f32 1.0, %v1676
        %v1689 = vsub.f32 1.0, %v1677
        %v1690 = vsub.f32 1.0, %v1678
        %v1691 = vsub.f32 1.0, %v1679
        %v1692 = vmul.f32 %v1632, %v1680
        %v1693 = vmul.f32 %v1633, %v1681
        %v1694 = vmul.f32 %v1634, %v1682
        %v1695 = vmul.f32 %v1635, %v1683
        %v1696 = vmul.f32 %v1636, %v1684
        %v1697 = vmul.f32 %v1637, %v1685
        %v1698 = vmul.f32 %v1638, %v1686
        %v1699 = vmul.f32 %v1639, %v1687
        %v1700 = vmul.f32 %v1640, %v1688
        %v1701 = vmul.f32 %v1641, %v1689
        %v1702 = vmul.f32 %v1642, %v1690
        %v1703 = vmul.f32 %v1643, %v1691
        %s1704 = scalar_lea.vmem %s379, 64 [#allocation6]
        %1705 = vst.msk [vmem:[%s1704] sm:$0xff] %vm412, %v1676
        %1706 = vst.msk [vmem:[%s1704 + $0x8] sm:$0xff] %vm412, %v1677
        %1707 = vst.msk [vmem:[%s1704 + $0x10] sm:$0xff] %vm412, %v1678
        %1708 = vst.msk [vmem:[%s1704 + $0x18] sm:$0xff] %vm412, %v1679
        %1721 = vrot.lane.b32.xlu0 %v1692, 64
        %v1722 = vpop.permute.xlu0 %1721
        %1723 = vrot.lane.b32.xlu0 %v1693, 64
        %v1724 = vpop.permute.xlu0 %1723
        %1725 = vrot.lane.b32.xlu0 %v1694, 64
        %v1726 = vpop.permute.xlu0 %1725
        %1727 = vrot.lane.b32.xlu0 %v1695, 64
        %v1728 = vpop.permute.xlu0 %1727
        %1729 = vrot.lane.b32.xlu0 %v1696, 64
        %v1730 = vpop.permute.xlu0 %1729
        %1731 = vrot.lane.b32.xlu0 %v1697, 64
        %v1732 = vpop.permute.xlu0 %1731
        %1733 = vrot.lane.b32.xlu0 %v1698, 64
        %v1734 = vpop.permute.xlu0 %1733
        %1735 = vrot.lane.b32.xlu0 %v1699, 64
        %v1736 = vpop.permute.xlu0 %1735
        %1737 = vrot.lane.b32.xlu0 %v1700, 64
        %v1738 = vpop.permute.xlu0 %1737
        %1739 = vrot.lane.b32.xlu0 %v1701, 64
        %v1740 = vpop.permute.xlu0 %1739
        %1741 = vrot.lane.b32.xlu0 %v1702, 64
        %v1742 = vpop.permute.xlu0 %1741
        %1743 = vrot.lane.b32.xlu0 %v1703, 64
        %v1744 = vpop.permute.xlu0 %1743
        %v1757 = vsub.f32 %v763, %v1722
        %v1758 = vsub.f32 %v769, %v1724
        %v1759 = vsub.f32 %v775, %v1726
        %v1760 = vsub.f32 %v781, %v1728
        %v1761 = vsub.f32 %v787, %v1730
        %v1762 = vsub.f32 %v793, %v1732
        %v1763 = vsub.f32 %v799, %v1734
        %v1764 = vsub.f32 %v805, %v1736
        %v1765 = vsub.f32 %v811, %v1738
        %v1766 = vsub.f32 %v817, %v1740
        %v1767 = vsub.f32 %v823, %v1742
        %v1768 = vsub.f32 %v829, %v1744
        %v1769 = vmul.f32 %v1757, 0.5
        %v1770 = vmul.f32 %v1758, 0.5
        %v1771 = vmul.f32 %v1759, 0.5
        %v1772 = vmul.f32 %v1760, 0.5
        %v1773 = vmul.f32 %v1761, 0.5
        %v1774 = vmul.f32 %v1762, 0.5
        %v1775 = vmul.f32 %v1763, 0.5
        %v1776 = vmul.f32 %v1764, 0.5
        %v1777 = vmul.f32 %v1765, 0.5
        %v1778 = vmul.f32 %v1766, 0.5
        %v1779 = vmul.f32 %v1767, 0.5
        %v1780 = vmul.f32 %v1768, 0.5
        %1793 = vrot.lane.b32.xlu0 %v1769, 64
        %v1794 = vpop.permute.xlu0 %1793
        %1795 = vrot.lane.b32.xlu0 %v1770, 64
        %v1796 = vpop.permute.xlu0 %1795
        %1797 = vrot.lane.b32.xlu0 %v1771, 64
        %v1798 = vpop.permute.xlu0 %1797
        %1799 = vrot.lane.b32.xlu0 %v1772, 64
        %v1800 = vpop.permute.xlu0 %1799
        %1801 = vrot.lane.b32.xlu0 %v1773, 64
        %v1802 = vpop.permute.xlu0 %1801
        %1803 = vrot.lane.b32.xlu0 %v1774, 64
        %v1804 = vpop.permute.xlu0 %1803
        %1805 = vrot.lane.b32.xlu0 %v1775, 64
        %v1806 = vpop.permute.xlu0 %1805
        %1807 = vrot.lane.b32.xlu0 %v1776, 64
        %v1808 = vpop.permute.xlu0 %1807
        %1809 = vrot.lane.b32.xlu0 %v1777, 64
        %v1810 = vpop.permute.xlu0 %1809
        %1811 = vrot.lane.b32.xlu0 %v1778, 64
        %v1812 = vpop.permute.xlu0 %1811
        %1813 = vrot.lane.b32.xlu0 %v1779, 64
        %v1814 = vpop.permute.xlu0 %1813
        %1815 = vrot.lane.b32.xlu0 %v1780, 64
        %v1816 = vpop.permute.xlu0 %1815
        %v1829 = vadd.f32 %v1692, %v1794
        %v1830 = vadd.f32 %v1693, %v1796
        %v1831 = vadd.f32 %v1694, %v1798
        %v1832 = vadd.f32 %v1695, %v1800
        %v1833 = vadd.f32 %v1696, %v1802
        %v1834 = vadd.f32 %v1697, %v1804
        %v1835 = vadd.f32 %v1698, %v1806
        %v1836 = vadd.f32 %v1699, %v1808
        %v1837 = vadd.f32 %v1700, %v1810
        %v1838 = vadd.f32 %v1701, %v1812
        %v1839 = vadd.f32 %v1702, %v1814
        %v1840 = vadd.f32 %v1703, %v1816
        %vm1841 = vcmp.ge.f32.partialorder %v1829, 1.0
        %vm1842 = vcmp.ge.f32.partialorder %v1830, 1.0
        %vm1843 = vcmp.ge.f32.partialorder %v1831, 1.0
        %vm1844 = vcmp.ge.f32.partialorder %v1832, 1.0
        %vm1845 = vcmp.ge.f32.partialorder %v1833, 1.0
        %vm1846 = vcmp.ge.f32.partialorder %v1834, 1.0
        %vm1847 = vcmp.ge.f32.partialorder %v1835, 1.0
        %vm1848 = vcmp.ge.f32.partialorder %v1836, 1.0
        %vm1849 = vcmp.ge.f32.partialorder %v1837, 1.0
        %vm1850 = vcmp.ge.f32.partialorder %v1838, 1.0
        %vm1851 = vcmp.ge.f32.partialorder %v1839, 1.0
        %vm1852 = vcmp.ge.f32.partialorder %v1840, 1.0
        %v1853 = vsel %vm1841, 1, 0
        %v1854 = vsel %vm1842, 1, 0
        %v1855 = vsel %vm1843, 1, 0
        %v1856 = vsel %vm1844, 1, 0
        %v1857 = vsel %vm1845, 1, 0
        %v1858 = vsel %vm1846, 1, 0
        %v1859 = vsel %vm1847, 1, 0
        %v1860 = vsel %vm1848, 1, 0
        %v1861 = vsel %vm1849, 1, 0
        %v1862 = vsel %vm1850, 1, 0
        %v1863 = vsel %vm1851, 1, 0
        %v1864 = vsel %vm1852, 1, 0
        %v1865 = vcvt.s32.f32 %v1853
        %v1866 = vcvt.s32.f32 %v1854
        %v1867 = vcvt.s32.f32 %v1855
        %v1868 = vcvt.s32.f32 %v1856
        %v1869 = vcvt.s32.f32 %v1857
        %v1870 = vcvt.s32.f32 %v1858
        %v1871 = vcvt.s32.f32 %v1859
        %v1872 = vcvt.s32.f32 %v1860
        %v1873 = vcvt.s32.f32 %v1861
        %v1874 = vcvt.s32.f32 %v1862
        %v1875 = vcvt.s32.f32 %v1863
        %v1876 = vcvt.s32.f32 %v1864
        %s1877 = scalar_lea.vmem %s379, 96 [#allocation6]
        %1878 = vst.msk [vmem:[%s1877] sm:$0xff] %vm412, %v1873
        %1879 = vst.msk [vmem:[%s1877 + $0x8] sm:$0xff] %vm412, %v1874
        %1880 = vst.msk [vmem:[%s1877 + $0x10] sm:$0xff] %vm412, %v1875
        %1881 = vst.msk [vmem:[%s1877 + $0x18] sm:$0xff] %vm412, %v1876
        %v1883 = vsel %vm412, %v1873, 0
        %v1886 = vsel %vm412, %v1874, 0
        %v1889 = vsel %vm412, %v1875, 0
        %v1892 = vsel %vm412, %v1876, 0
        %v1895 = vsel %vm412, %v1869, 0
        %v1898 = vsel %vm412, %v1870, 0
        %v1901 = vsel %vm412, %v1871, 0
        %v1904 = vsel %vm412, %v1872, 0
        %1906 = vmatprep.subr.mxu0 0.0
        %1907 = vmatpush1.xpose.msra.mxu0 0.0
        %1908 = vmatprep.subr.mxu0 0.0
        %1909 = vmatpush1.xpose.msra.mxu0 0.0
        %1910 = vmatprep.subr.mxu0 0.0
        %1911 = vmatpush1.xpose.msra.mxu0 0.0
        %1912 = vmatprep.subr.mxu0 0.0
        %1913 = vmatpush1.xpose.msra.mxu0 0.0
        %1914 = vmatprep.subr.mxu0 0.0
        %1915 = vmatpush1.xpose.msra.mxu0 0.0
        %1916 = vmatprep.subr.mxu0 0.0
        %1917 = vmatpush1.xpose.msra.mxu0 0.0
        %1918 = vmatprep.subr.mxu0 0.0
        %1919 = vmatpush1.xpose.msra.mxu0 0.0
        %1920 = vmatprep.subr.mxu0 0.0
        %1921 = vmatpush1.xpose.msra.mxu0 0.0
        %1922 = vmatprep.subr.mxu0 0.0
        %1923 = vmatpush1.xpose.msra.mxu0 0.0
        %1924 = vmatprep.subr.mxu0 0.0
        %1925 = vmatpush1.xpose.msra.mxu0 0.0
        %1926 = vmatprep.subr.mxu0 0.0
        %1927 = vmatpush1.xpose.msra.mxu0 0.0
        %1928 = vmatprep.subr.mxu0 0.0
        %1929 = vmatpush1.xpose.msra.mxu0 0.0
        %1930 = vmatprep.subr.mxu0 0.0
        %1931 = vmatpush1.xpose.msra.mxu0 %v1904
        %1932 = vmatprep.subr.mxu0 0.0
        %1933 = vmatpush1.xpose.msra.mxu0 %v1901
        %1934 = vmatprep.subr.mxu0 0.0
        %1935 = vmatpush1.xpose.msra.mxu0 %v1898
        %1936 = vmatprep.subr.mxu0 0.0
        %1937 = vmatpush1.xpose.msra.mxu0 %v1895
        %1938 = vmatprep.subr.mxu0 0.0
        %1939 = vmatpush2.xpose.msra.mxu0 0.0
        %1940 = vmatprep.subr.mxu0 0.0
        %1941 = vmatpush2.xpose.msra.mxu0 0.0
        %1942 = vmatprep.subr.mxu0 0.0
        %1943 = vmatpush2.xpose.msra.mxu0 0.0
        %1944 = vmatprep.subr.mxu0 0.0
        %1945 = vmatpush2.xpose.msra.mxu0 0.0
        %1946 = vmatprep.subr.mxu0 0.0
        %1947 = vmatpush2.xpose.msra.mxu0 0.0
        %1948 = vmatprep.subr.mxu0 0.0
        %1949 = vmatpush2.xpose.msra.mxu0 0.0
        %1950 = vmatprep.subr.mxu0 0.0
        %1951 = vmatpush2.xpose.msra.mxu0 0.0
        %1952 = vmatprep.subr.mxu0 0.0
        %1953 = vmatpush2.xpose.msra.mxu0 0.0
        %1954 = vmatprep.subr.mxu0 0.0
        %1955 = vmatpush2.xpose.msra.mxu0 0.0
        %1956 = vmatprep.subr.mxu0 0.0
        %1957 = vmatpush2.xpose.msra.mxu0 0.0
        %1958 = vmatprep.subr.mxu0 0.0
        %1959 = vmatpush2.xpose.msra.mxu0 0.0
        %1960 = vmatprep.subr.mxu0 0.0
        %1961 = vmatpush2.xpose.msra.mxu0 0.0
        %1962 = vmatprep.subr.mxu0 0.0
        %1963 = vmatpush2.xpose.msra.mxu0 0.0
        %1964 = vmatprep.subr.mxu0 0.0
        %1965 = vmatpush2.xpose.msra.mxu0 0.0
        %1966 = vmatprep.subr.mxu0 0.0
        %1967 = vmatpush2.xpose.msra.mxu0 0.0
        %1968 = vmatprep.subr.mxu0 0.0
        %1969 = vmatpush2.xpose.msra.mxu0 0.0
        %1970 = vmatprep.mubr.f32.mxu0 0.0
        %1971 = vmatmul.mubr.f32.gmra.mxu0 %v1883
        %v1972 = vpop.f32.mrf.mxu0
        %v1973 = vadd.f32 0.0, %v1972
        %v1974 = vpop.f32.mrf.mxu0
        %1975 = vmatprep.mubr.f32.mxu0 0.0
        %1976 = vmatmul.mubr.f32.gmra.mxu0 %v1886
        %v1977 = vpop.f32.mrf.mxu0
        %v1978 = vadd.f32 0.0, %v1977
        %v1979 = vpop.f32.mrf.mxu0
        %1980 = vmatprep.mubr.f32.mxu0 0.0
        %1981 = vmatmul.mubr.f32.gmra.mxu0 %v1889
        %v1982 = vpop.f32.mrf.mxu0
        %v1983 = vadd.f32 0.0, %v1982
        %v1984 = vpop.f32.mrf.mxu0
        %1985 = vmatprep.mubr.f32.mxu0 0.0
        %1986 = vmatmul.mubr.f32.gmra.mxu0 %v1892
        %v1987 = vpop.f32.mrf.mxu0
        %v1988 = vadd.f32 0.0, %v1987
        %v1989 = vpop.f32.mrf.mxu0
        %1990 = vdwg.mxu0
        %v1992 = vsel %vm412, %v1676, 0
        %v1995 = vsel %vm412, %v1677, 0
        %v1998 = vsel %vm412, %v1678, 0
        %v2001 = vsel %vm412, %v1679, 0
        %v2004 = vsel %vm412, %v1672, 0
        %v2007 = vsel %vm412, %v1673, 0
        %v2010 = vsel %vm412, %v1674, 0
        %v2013 = vsel %vm412, %v1675, 0
        %2015 = vmatprep.subr.mxu0 0.0
        %2016 = vmatpush1.xpose.msra.mxu0 0.0
        %2017 = vmatprep.subr.mxu0 0.0
        %2018 = vmatpush1.xpose.msra.mxu0 0.0
        %2019 = vmatprep.subr.mxu0 0.0
        %2020 = vmatpush1.xpose.msra.mxu0 0.0
        %2021 = vmatprep.subr.mxu0 0.0
        %2022 = vmatpush1.xpose.msra.mxu0 0.0
        %2023 = vmatprep.subr.mxu0 0.0
        %2024 = vmatpush1.xpose.msra.mxu0 0.0
        %2025 = vmatprep.subr.mxu0 0.0
        %2026 = vmatpush1.xpose.msra.mxu0 0.0
        %2027 = vmatprep.subr.mxu0 0.0
        %2028 = vmatpush1.xpose.msra.mxu0 0.0
        %2029 = vmatprep.subr.mxu0 0.0
        %2030 = vmatpush1.xpose.msra.mxu0 0.0
        %2031 = vmatprep.subr.mxu0 0.0
        %2032 = vmatpush1.xpose.msra.mxu0 0.0
        %2033 = vmatprep.subr.mxu0 0.0
        %2034 = vmatpush1.xpose.msra.mxu0 0.0
        %2035 = vmatprep.subr.mxu0 0.0
        %2036 = vmatpush1.xpose.msra.mxu0 0.0
        %2037 = vmatprep.subr.mxu0 0.0
        %2038 = vmatpush1.xpose.msra.mxu0 0.0
        %2039 = vmatprep.subr.mxu0 0.0
        %2040 = vmatpush1.xpose.msra.mxu0 %v2013
        %2041 = vmatprep.subr.mxu0 0.0
        %2042 = vmatpush1.xpose.msra.mxu0 %v2010
        %2043 = vmatprep.subr.mxu0 0.0
        %2044 = vmatpush1.xpose.msra.mxu0 %v2007
        %2045 = vmatprep.subr.mxu0 0.0
        %2046 = vmatpush1.xpose.msra.mxu0 %v2004
        %2047 = vmatprep.subr.mxu0 0.0
        %2048 = vmatpush2.xpose.msra.mxu0 0.0
        %2049 = vmatprep.subr.mxu0 0.0
        %2050 = vmatpush2.xpose.msra.mxu0 0.0
        %2051 = vmatprep.subr.mxu0 0.0
        %2052 = vmatpush2.xpose.msra.mxu0 0.0
        %2053 = vmatprep.subr.mxu0 0.0
        %2054 = vmatpush2.xpose.msra.mxu0 0.0
        %2055 = vmatprep.subr.mxu0 0.0
        %2056 = vmatpush2.xpose.msra.mxu0 0.0
        %2057 = vmatprep.subr.mxu0 0.0
        %2058 = vmatpush2.xpose.msra.mxu0 0.0
        %2059 = vmatprep.subr.mxu0 0.0
        %2060 = vmatpush2.xpose.msra.mxu0 0.0
        %2061 = vmatprep.subr.mxu0 0.0
        %2062 = vmatpush2.xpose.msra.mxu0 0.0
        %2063 = vmatprep.subr.mxu0 0.0
        %2064 = vmatpush2.xpose.msra.mxu0 0.0
        %2065 = vmatprep.subr.mxu0 0.0
        %2066 = vmatpush2.xpose.msra.mxu0 0.0
        %2067 = vmatprep.subr.mxu0 0.0
        %2068 = vmatpush2.xpose.msra.mxu0 0.0
        %2069 = vmatprep.subr.mxu0 0.0
        %2070 = vmatpush2.xpose.msra.mxu0 0.0
        %2071 = vmatprep.subr.mxu0 0.0
        %2072 = vmatpush2.xpose.msra.mxu0 0.0
        %2073 = vmatprep.subr.mxu0 0.0
        %2074 = vmatpush2.xpose.msra.mxu0 0.0
        %2075 = vmatprep.subr.mxu0 0.0
        %2076 = vmatpush2.xpose.msra.mxu0 0.0
        %2077 = vmatprep.subr.mxu0 0.0
        %2078 = vmatpush2.xpose.msra.mxu0 0.0
        %2079 = vmatprep.mubr.f32.mxu0 0.0
        %2080 = vmatmul.mubr.f32.gmra.mxu0 %v1992
        %v2081 = vpop.f32.mrf.mxu0
        %v2082 = vadd.f32 %v1973, %v2081
        %v2083 = vpop.f32.mrf.mxu0
        %2084 = vmatprep.mubr.f32.mxu0 0.0
        %2085 = vmatmul.mubr.f32.gmra.mxu0 %v1995
        %v2086 = vpop.f32.mrf.mxu0
        %v2087 = vadd.f32 %v1978, %v2086
        %v2088 = vpop.f32.mrf.mxu0
        %2089 = vmatprep.mubr.f32.mxu0 0.0
        %2090 = vmatmul.mubr.f32.gmra.mxu0 %v1998
        %v2091 = vpop.f32.mrf.mxu0
        %v2092 = vadd.f32 %v1983, %v2091
        %v2093 = vpop.f32.mrf.mxu0
        %2094 = vmatprep.mubr.f32.mxu0 0.0
        %2095 = vmatmul.mubr.f32.gmra.mxu0 %v2001
        %v2096 = vpop.f32.mrf.mxu0
        %v2097 = vadd.f32 %v1988, %v2096
        %v2098 = vpop.f32.mrf.mxu0
        %2099 = vdwg.mxu0
        %v2100 = vld [vmem:[%s3] sm:$0xff]
        %v2101 = vld [vmem:[%s3 + $0x8] sm:$0xff]
        %v2102 = vld [vmem:[%s3 + $0x10] sm:$0xff]
        %v2103 = vld [vmem:[%s3 + $0x18] sm:$0xff]
        %v2104 = vmul.f32 %v2082, %v2100
        %v2105 = vmul.f32 %v2087, %v2101
        %v2106 = vmul.f32 %v2092, %v2102
        %v2107 = vmul.f32 %v2097, %v2103
        %v2109 = vsel %vm657, %v2104, 0
        %v2112 = vsel %vm657, %v2105, 0
        %v2115 = vsel %vm657, %v2106, 0
        %v2118 = vsel %vm657, %v2107, 0
        %2120 = vmatprep.subr.mxu0 0.0
        %2121 = vmatpush1.msra.mxu0 0.0
        %2122 = vmatprep.subr.mxu0 0.0
        %2123 = vmatpush1.msra.mxu0 0.0
        %2124 = vmatprep.subr.mxu0 0.0
        %2125 = vmatpush1.msra.mxu0 0.0
        %2126 = vmatprep.subr.mxu0 0.0
        %2127 = vmatpush1.msra.mxu0 0.0
        %2128 = vmatprep.subr.mxu0 0.0
        %2129 = vmatpush1.msra.mxu0 0.0
        %2130 = vmatprep.subr.mxu0 0.0
        %2131 = vmatpush1.msra.mxu0 0.0
        %2132 = vmatprep.subr.mxu0 0.0
        %2133 = vmatpush1.msra.mxu0 0.0
        %2134 = vmatprep.subr.mxu0 0.0
        %2135 = vmatpush1.msra.mxu0 0.0
        %2136 = vmatprep.subr.mxu0 0.0
        %2137 = vmatpush1.msra.mxu0 0.0
        %2138 = vmatprep.subr.mxu0 0.0
        %2139 = vmatpush1.msra.mxu0 0.0
        %2140 = vmatprep.subr.mxu0 0.0
        %2141 = vmatpush1.msra.mxu0 0.0
        %2142 = vmatprep.subr.mxu0 0.0
        %2143 = vmatpush1.msra.mxu0 0.0
        %2144 = vmatprep.subr.mxu0 0.0
        %2145 = vmatpush1.msra.mxu0 %v1671
        %2146 = vmatprep.subr.mxu0 0.0
        %2147 = vmatpush1.msra.mxu0 %v1670
        %2148 = vmatprep.subr.mxu0 0.0
        %2149 = vmatpush1.msra.mxu0 %v1669
        %2150 = vmatprep.subr.mxu0 0.0
        %2151 = vmatpush1.msra.mxu0 %v1668
        %2152 = vmatprep.subr.mxu0 0.0
        %2153 = vmatpush2.msra.mxu0 0.0
        %2154 = vmatprep.subr.mxu0 0.0
        %2155 = vmatpush2.msra.mxu0 0.0
        %2156 = vmatprep.subr.mxu0 0.0
        %2157 = vmatpush2.msra.mxu0 0.0
        %2158 = vmatprep.subr.mxu0 0.0
        %2159 = vmatpush2.msra.mxu0 0.0
        %2160 = vmatprep.subr.mxu0 0.0
        %2161 = vmatpush2.msra.mxu0 0.0
        %2162 = vmatprep.subr.mxu0 0.0
        %2163 = vmatpush2.msra.mxu0 0.0
        %2164 = vmatprep.subr.mxu0 0.0
        %2165 = vmatpush2.msra.mxu0 0.0
        %2166 = vmatprep.subr.mxu0 0.0
        %2167 = vmatpush2.msra.mxu0 0.0
        %2168 = vmatprep.subr.mxu0 0.0
        %2169 = vmatpush2.msra.mxu0 0.0
        %2170 = vmatprep.subr.mxu0 0.0
        %2171 = vmatpush2.msra.mxu0 0.0
        %2172 = vmatprep.subr.mxu0 0.0
        %2173 = vmatpush2.msra.mxu0 0.0
        %2174 = vmatprep.subr.mxu0 0.0
        %2175 = vmatpush2.msra.mxu0 0.0
        %2176 = vmatprep.subr.mxu0 0.0
        %2177 = vmatpush2.msra.mxu0 0.0
        %2178 = vmatprep.subr.mxu0 0.0
        %2179 = vmatpush2.msra.mxu0 0.0
        %2180 = vmatprep.subr.mxu0 0.0
        %2181 = vmatpush2.msra.mxu0 0.0
        %2182 = vmatprep.subr.mxu0 0.0
        %2183 = vmatpush2.msra.mxu0 0.0
        %2184 = vmatprep.mubr.f32.mxu0 0.0
        %2185 = vmatmul.mubr.f32.gmra.mxu0 %v2109
        %v2186 = vpop.f32.mrf.mxu0
        %v2187 = vadd.f32 0.0, %v2186
        %v2188 = vpop.f32.mrf.mxu0
        %2189 = vmatprep.mubr.f32.mxu0 0.0
        %2190 = vmatmul.mubr.f32.gmra.mxu0 %v2112
        %v2191 = vpop.f32.mrf.mxu0
        %v2192 = vadd.f32 0.0, %v2191
        %v2193 = vpop.f32.mrf.mxu0
        %2194 = vmatprep.mubr.f32.mxu0 0.0
        %2195 = vmatmul.mubr.f32.gmra.mxu0 %v2115
        %v2196 = vpop.f32.mrf.mxu0
        %v2197 = vadd.f32 0.0, %v2196
        %v2198 = vpop.f32.mrf.mxu0
        %2199 = vmatprep.mubr.f32.mxu0 0.0
        %2200 = vmatmul.mubr.f32.gmra.mxu0 %v2118
        %v2201 = vpop.f32.mrf.mxu0
        %v2202 = vadd.f32 0.0, %v2201
        %v2203 = vpop.f32.mrf.mxu0
        %2204 = vdwg.mxu0
        %v2205 = vsub.f32 %v2187, %v1584
        %v2206 = vsub.f32 %v2192, %v1585
        %v2207 = vsub.f32 %v2197, %v1586
        %v2208 = vsub.f32 %v2202, %v1587
        %v2209 = vmul.f32 %v2205, 0.5
        %v2210 = vmul.f32 %v2206, 0.5
        %v2211 = vmul.f32 %v2207, 0.5
        %v2212 = vmul.f32 %v2208, 0.5
        %v2213 = vadd.f32 %v1584, %v2209
        %v2214 = vadd.f32 %v1585, %v2210
        %v2215 = vadd.f32 %v1586, %v2211
        %v2216 = vadd.f32 %v1587, %v2212
        %vm2217 = vcmp.ge.f32.partialorder %v2213, 0.5
        %vm2218 = vcmp.ge.f32.partialorder %v2214, 0.5
        %vm2219 = vcmp.ge.f32.partialorder %v2215, 0.5
        %vm2220 = vcmp.ge.f32.partialorder %v2216, 0.5
        %v2221 = vsel %vm2217, 1, 0
        %v2222 = vsel %vm2218, 1, 0
        %v2223 = vsel %vm2219, 1, 0
        %v2224 = vsel %vm2220, 1, 0
        %v2225 = vcvt.s32.f32 %v2221
        %v2226 = vcvt.s32.f32 %v2222
        %v2227 = vcvt.s32.f32 %v2223
        %v2228 = vcvt.s32.f32 %v2224
        %v2229 = vsub.f32 1.0, %v2225
        %v2230 = vsub.f32 1.0, %v2226
        %v2231 = vsub.f32 1.0, %v2227
        %v2232 = vsub.f32 1.0, %v2228
        %v2233 = vmul.f32 %v2213, %v2229
        %v2234 = vmul.f32 %v2214, %v2230
        %v2235 = vmul.f32 %v2215, %v2231
        %v2236 = vmul.f32 %v2216, %v2232
        %2237 = vst.msk [vmem:[#allocation3 + $0x8] sm:$0xff] %vm412, %v2225
        %2238 = vst.msk [vmem:[#allocation3 + $0x18] sm:$0xff] %vm412, %v2226
        %2239 = vst.msk [vmem:[#allocation3 + $0x28] sm:$0xff] %vm412, %v2227
        %2240 = vst.msk [vmem:[#allocation3 + $0x38] sm:$0xff] %vm412, %v2228
        %2241 = vmatprep.subr.mxu0 0.0
        %2242 = vmatpush1.msra.mxu0 0.0
        %2243 = vmatprep.subr.mxu0 0.0
        %2244 = vmatpush1.msra.mxu0 0.0
        %2245 = vmatprep.subr.mxu0 0.0
        %2246 = vmatpush1.msra.mxu0 0.0
        %2247 = vmatprep.subr.mxu0 0.0
        %2248 = vmatpush1.msra.mxu0 0.0
        %2249 = vmatprep.subr.mxu0 0.0
        %2250 = vmatpush1.msra.mxu0 0.0
        %2251 = vmatprep.subr.mxu0 0.0
        %2252 = vmatpush1.msra.mxu0 0.0
        %2253 = vmatprep.subr.mxu0 0.0
        %2254 = vmatpush1.msra.mxu0 0.0
        %2255 = vmatprep.subr.mxu0 0.0
        %2256 = vmatpush1.msra.mxu0 0.0
        %2257 = vmatprep.subr.mxu0 0.0
        %2258 = vmatpush1.msra.mxu0 0.0
        %2259 = vmatprep.subr.mxu0 0.0
        %2260 = vmatpush1.msra.mxu0 0.0
        %2261 = vmatprep.subr.mxu0 0.0
        %2262 = vmatpush1.msra.mxu0 0.0
        %2263 = vmatprep.subr.mxu0 0.0
        %2264 = vmatpush1.msra.mxu0 0.0
        %2265 = vmatprep.subr.mxu0 0.0
        %2266 = vmatpush1.msra.mxu0 %v1868
        %2267 = vmatprep.subr.mxu0 0.0
        %2268 = vmatpush1.msra.mxu0 %v1867
        %2269 = vmatprep.subr.mxu0 0.0
        %2270 = vmatpush1.msra.mxu0 %v1866
        %2271 = vmatprep.subr.mxu0 0.0
        %2272 = vmatpush1.msra.mxu0 %v1865
        %2273 = vmatprep.subr.mxu0 0.0
        %2274 = vmatpush2.msra.mxu0 0.0
        %2275 = vmatprep.subr.mxu0 0.0
        %2276 = vmatpush2.msra.mxu0 0.0
        %2277 = vmatprep.subr.mxu0 0.0
        %2278 = vmatpush2.msra.mxu0 0.0
        %2279 = vmatprep.subr.mxu0 0.0
        %2280 = vmatpush2.msra.mxu0 0.0
        %2281 = vmatprep.subr.mxu0 0.0
        %2282 = vmatpush2.msra.mxu0 0.0
        %2283 = vmatprep.subr.mxu0 0.0
        %2284 = vmatpush2.msra.mxu0 0.0
        %2285 = vmatprep.subr.mxu0 0.0
        %2286 = vmatpush2.msra.mxu0 0.0
        %2287 = vmatprep.subr.mxu0 0.0
        %2288 = vmatpush2.msra.mxu0 0.0
        %2289 = vmatprep.subr.mxu0 0.0
        %2290 = vmatpush2.msra.mxu0 0.0
        %2291 = vmatprep.subr.mxu0 0.0
        %2292 = vmatpush2.msra.mxu0 0.0
        %2293 = vmatprep.subr.mxu0 0.0
        %2294 = vmatpush2.msra.mxu0 0.0
        %2295 = vmatprep.subr.mxu0 0.0
        %2296 = vmatpush2.msra.mxu0 0.0
        %2297 = vmatprep.subr.mxu0 0.0
        %2298 = vmatpush2.msra.mxu0 0.0
        %2299 = vmatprep.subr.mxu0 0.0
        %2300 = vmatpush2.msra.mxu0 0.0
        %2301 = vmatprep.subr.mxu0 0.0
        %2302 = vmatpush2.msra.mxu0 0.0
        %2303 = vmatprep.subr.mxu0 0.0
        %2304 = vmatpush2.msra.mxu0 0.0
        %2305 = vmatprep.mubr.f32.mxu0 0.0
        %2306 = vmatmul.mubr.f32.gmra.mxu0 %v2109
        %v2307 = vpop.f32.mrf.mxu0
        %v2308 = vadd.f32 0.0, %v2307
        %v2309 = vpop.f32.mrf.mxu0
        %2310 = vmatprep.mubr.f32.mxu0 0.0
        %2311 = vmatmul.mubr.f32.gmra.mxu0 %v2112
        %v2312 = vpop.f32.mrf.mxu0
        %v2313 = vadd.f32 0.0, %v2312
        %v2314 = vpop.f32.mrf.mxu0
        %2315 = vmatprep.mubr.f32.mxu0 0.0
        %2316 = vmatmul.mubr.f32.gmra.mxu0 %v2115
        %v2317 = vpop.f32.mrf.mxu0
        %v2318 = vadd.f32 0.0, %v2317
        %v2319 = vpop.f32.mrf.mxu0
        %2320 = vmatprep.mubr.f32.mxu0 0.0
        %2321 = vmatmul.mubr.f32.gmra.mxu0 %v2118
        %v2322 = vpop.f32.mrf.mxu0
        %v2323 = vadd.f32 0.0, %v2322
        %v2324 = vpop.f32.mrf.mxu0
        %2325 = vdwg.mxu0
        %v2326 = vsub.f32 %v2308, %v2233
        %v2327 = vsub.f32 %v2313, %v2234
        %v2328 = vsub.f32 %v2318, %v2235
        %v2329 = vsub.f32 %v2323, %v2236
        %v2330 = vmul.f32 %v2326, 0.5
        %v2331 = vmul.f32 %v2327, 0.5
        %v2332 = vmul.f32 %v2328, 0.5
        %v2333 = vmul.f32 %v2329, 0.5
        %v2334 = vadd.f32 %v2233, %v2330
        %v2335 = vadd.f32 %v2234, %v2331
        %v2336 = vadd.f32 %v2235, %v2332
        %v2337 = vadd.f32 %v2236, %v2333
        %vm2338 = vcmp.ge.f32.partialorder %v2334, 0.5
        %vm2339 = vcmp.ge.f32.partialorder %v2335, 0.5
        %vm2340 = vcmp.ge.f32.partialorder %v2336, 0.5
        %vm2341 = vcmp.ge.f32.partialorder %v2337, 0.5
        %v2342 = vsel %vm2338, 1, 0
        %v2343 = vsel %vm2339, 1, 0
        %v2344 = vsel %vm2340, 1, 0
        %v2345 = vsel %vm2341, 1, 0
        %v2346 = vcvt.s32.f32 %v2342
        %v2347 = vcvt.s32.f32 %v2343
        %v2348 = vcvt.s32.f32 %v2344
        %v2349 = vcvt.s32.f32 %v2345
        %2354 = vrot.lane.b32.xlu0 %v2346, 64
        %v2355 = vpop.permute.xlu0 %2354
        %2356 = vrot.lane.b32.xlu0 %v2347, 64
        %v2357 = vpop.permute.xlu0 %2356
        %2358 = vrot.lane.b32.xlu0 %v2348, 64
        %v2359 = vpop.permute.xlu0 %2358
        %2360 = vrot.lane.b32.xlu0 %v2349, 64
        %v2361 = vpop.permute.xlu0 %2360
        %2366 = vst.msk [vmem:[#allocation3 + $0x8] sm:$0xff] %vm470, %v2355
        %2367 = vst.msk [vmem:[#allocation3 + $0x18] sm:$0xff] %vm470, %v2357
        %2368 = vst.msk [vmem:[#allocation3 + $0x28] sm:$0xff] %vm470, %v2359
        %2369 = vst.msk [vmem:[#allocation3 + $0x38] sm:$0xff] %vm470, %v2361
        %v2370 = vld [vmem:[%s4] sm:$0xff]
        %v2371 = vld [vmem:[%s4 + $0x8] sm:$0xff]
        %v2372 = vld [vmem:[%s4 + $0x10] sm:$0xff]
        %v2373 = vld [vmem:[%s4 + $0x18] sm:$0xff]
        %v2374 = vld [vmem:[#allocation3] sm:$0xff]
        %v2375 = vld [vmem:[#allocation3 + $0x8] sm:$0xff]
        %v2376 = vld [vmem:[#allocation3 + $0x10] sm:$0xff]
        %v2377 = vld [vmem:[#allocation3 + $0x18] sm:$0xff]
        %v2378 = vld [vmem:[#allocation3 + $0x20] sm:$0xff]
        %v2379 = vld [vmem:[#allocation3 + $0x28] sm:$0xff]
        %v2380 = vld [vmem:[#allocation3 + $0x30] sm:$0xff]
        %v2381 = vld [vmem:[#allocation3 + $0x38] sm:$0xff]
        %v2382 = vld [vmem:[%s5] sm:$0xff]
        %v2383 = vld [vmem:[%s5 + $0x8] sm:$0xff]
        %v2384 = vld [vmem:[%s5 + $0x10] sm:$0xff]
        %v2385 = vld [vmem:[%s5 + $0x18] sm:$0xff]
        %2387 = vset.pattern.permute.xlu0 0
        %2388 = vperm.xlu0 %2387, %v2382
        %v2389 = vpop.permute.xlu0 %2388
        %2392 = vset.pattern.permute.xlu0 0
        %2393 = vperm.xlu0 %2392, %v2383
        %v2394 = vpop.permute.xlu0 %2393
        %2397 = vset.pattern.permute.xlu0 0
        %2398 = vperm.xlu0 %2397, %v2384
        %v2399 = vpop.permute.xlu0 %2398
        %2402 = vset.pattern.permute.xlu0 0
        %2403 = vperm.xlu0 %2402, %v2385
        %v2404 = vpop.permute.xlu0 %2403
        %v2407 = vsel %vm657, %v2370, 0
        %v2410 = vsel %vm657, %v2371, 0
        %v2413 = vsel %vm657, %v2372, 0
        %v2416 = vsel %vm657, %v2373, 0
        %2418 = vmatprep.subr.mxu0 0.0
        %2419 = vmatpush1.msra.mxu0 0.0
        %2420 = vmatprep.subr.mxu0 0.0
        %2421 = vmatpush1.msra.mxu0 0.0
        %2422 = vmatprep.subr.mxu0 0.0
        %2423 = vmatpush1.msra.mxu0 0.0
        %2424 = vmatprep.subr.mxu0 0.0
        %2425 = vmatpush1.msra.mxu0 0.0
        %2426 = vmatprep.subr.mxu0 0.0
        %2427 = vmatpush1.msra.mxu0 0.0
        %2428 = vmatprep.subr.mxu0 0.0
        %2429 = vmatpush1.msra.mxu0 0.0
        %2430 = vmatprep.subr.mxu0 0.0
        %2431 = vmatpush1.msra.mxu0 0.0
        %2432 = vmatprep.subr.mxu0 0.0
        %2433 = vmatpush1.msra.mxu0 0.0
        %2434 = vmatprep.subr.mxu0 0.0
        %2435 = vmatpush1.msra.mxu0 0.0
        %2436 = vmatprep.subr.mxu0 0.0
        %2437 = vmatpush1.msra.mxu0 0.0
        %2438 = vmatprep.subr.mxu0 0.0
        %2439 = vmatpush1.msra.mxu0 0.0
        %2440 = vmatprep.subr.mxu0 0.0
        %2441 = vmatpush1.msra.mxu0 0.0
        %2442 = vmatprep.subr.mxu0 %v2381
        %2443 = vmatpush1.msra.mxu0 %v2380
        %2444 = vmatprep.subr.mxu0 %v2379
        %2445 = vmatpush1.msra.mxu0 %v2378
        %2446 = vmatprep.subr.mxu0 %v2377
        %2447 = vmatpush1.msra.mxu0 %v2376
        %2448 = vmatprep.subr.mxu0 %v2375
        %2449 = vmatpush1.msra.mxu0 %v2374
        %2450 = vmatprep.subr.mxu0 0.0
        %2451 = vmatpush2.msra.mxu0 0.0
        %2452 = vmatprep.subr.mxu0 0.0
        %2453 = vmatpush2.msra.mxu0 0.0
        %2454 = vmatprep.subr.mxu0 0.0
        %2455 = vmatpush2.msra.mxu0 0.0
        %2456 = vmatprep.subr.mxu0 0.0
        %2457 = vmatpush2.msra.mxu0 0.0
        %2458 = vmatprep.subr.mxu0 0.0
        %2459 = vmatpush2.msra.mxu0 0.0
        %2460 = vmatprep.subr.mxu0 0.0
        %2461 = vmatpush2.msra.mxu0 0.0
        %2462 = vmatprep.subr.mxu0 0.0
        %2463 = vmatpush2.msra.mxu0 0.0
        %2464 = vmatprep.subr.mxu0 0.0
        %2465 = vmatpush2.msra.mxu0 0.0
        %2466 = vmatprep.subr.mxu0 0.0
        %2467 = vmatpush2.msra.mxu0 0.0
        %2468 = vmatprep.subr.mxu0 0.0
        %2469 = vmatpush2.msra.mxu0 0.0
        %2470 = vmatprep.subr.mxu0 0.0
        %2471 = vmatpush2.msra.mxu0 0.0
        %2472 = vmatprep.subr.mxu0 0.0
        %2473 = vmatpush2.msra.mxu0 0.0
        %2474 = vmatprep.subr.mxu0 0.0
        %2475 = vmatpush2.msra.mxu0 0.0
        %2476 = vmatprep.subr.mxu0 0.0
        %2477 = vmatpush2.msra.mxu0 0.0
        %2478 = vmatprep.subr.mxu0 0.0
        %2479 = vmatpush2.msra.mxu0 0.0
        %2480 = vmatprep.subr.mxu0 0.0
        %2481 = vmatpush2.msra.mxu0 0.0
        %2482 = vmatprep.mubr.f32.mxu0 0.0
        %2483 = vmatmul.mubr.f32.gmra.mxu0 %v2407
        %v2484 = vpop.f32.mrf.mxu0
        %v2485 = vadd.f32 %v2389, %v2484
        %v2486 = vpop.f32.mrf.mxu0
        %v2487 = vadd.f32 %v2389, %v2486
        %2488 = vmatprep.mubr.f32.mxu0 0.0
        %2489 = vmatmul.mubr.f32.gmra.mxu0 %v2410
        %v2490 = vpop.f32.mrf.mxu0
        %v2491 = vadd.f32 %v2394, %v2490
        %v2492 = vpop.f32.mrf.mxu0
        %v2493 = vadd.f32 %v2394, %v2492
        %2494 = vmatprep.mubr.f32.mxu0 0.0
        %2495 = vmatmul.mubr.f32.gmra.mxu0 %v2413
        %v2496 = vpop.f32.mrf.mxu0
        %v2497 = vadd.f32 %v2399, %v2496
        %v2498 = vpop.f32.mrf.mxu0
        %v2499 = vadd.f32 %v2399, %v2498
        %2500 = vmatprep.mubr.f32.mxu0 0.0
        %2501 = vmatmul.mubr.f32.gmra.mxu0 %v2416
        %v2502 = vpop.f32.mrf.mxu0
        %v2503 = vadd.f32 %v2404, %v2502
        %v2504 = vpop.f32.mrf.mxu0
        %v2505 = vadd.f32 %v2404, %v2504
        %2506 = vdwg.mxu0
        %v2507 = vld [vmem:[%s347] sm:$0xff]
        %v2508 = vld [vmem:[%s347 + $0x8] sm:$0xff]
        %v2509 = vld [vmem:[%s347 + $0x10] sm:$0xff]
        %v2510 = vld [vmem:[%s347 + $0x18] sm:$0xff]
        %v2511 = vadd.f32 %v2485, %v2507
        %v2512 = vadd.f32 %v2491, %v2508
        %v2513 = vadd.f32 %v2497, %v2509
        %v2514 = vadd.f32 %v2503, %v2510
        %2515 = vst.msk [vmem:[%s372] sm:$0xff] %vm412, %v2511
        %2516 = vst.msk [vmem:[%s372 + $0x8] sm:$0xff] %vm412, %v2512
        %2517 = vst.msk [vmem:[%s372 + $0x10] sm:$0xff] %vm412, %v2513
        %2518 = vst.msk [vmem:[%s372 + $0x18] sm:$0xff] %vm412, %v2514
        %v2519 = vld [vmem:[%s417] sm:$0xff]
        %v2520 = vld [vmem:[%s417 + $0x8] sm:$0xff]
        %v2521 = vld [vmem:[%s417 + $0x10] sm:$0xff]
        %v2522 = vld [vmem:[%s417 + $0x18] sm:$0xff]
        %2527 = vrot.lane.b32.xlu0 %v2519, 64
        %v2528 = vpop.permute.xlu0 %2527
        %2529 = vrot.lane.b32.xlu0 %v2520, 64
        %v2530 = vpop.permute.xlu0 %2529
        %2531 = vrot.lane.b32.xlu0 %v2521, 64
        %v2532 = vpop.permute.xlu0 %2531
        %2533 = vrot.lane.b32.xlu0 %v2522, 64
        %v2534 = vpop.permute.xlu0 %2533
        %v2539 = vadd.f32 %v2485, %v2528
        %v2540 = vadd.f32 %v2491, %v2530
        %v2541 = vadd.f32 %v2497, %v2532
        %v2542 = vadd.f32 %v2503, %v2534
        %2547 = vrot.lane.b32.xlu0 %v2539, 64
        %v2548 = vpop.permute.xlu0 %2547
        %2549 = vrot.lane.b32.xlu0 %v2540, 64
        %v2550 = vpop.permute.xlu0 %2549
        %2551 = vrot.lane.b32.xlu0 %v2541, 64
        %v2552 = vpop.permute.xlu0 %2551
        %2553 = vrot.lane.b32.xlu0 %v2542, 64
        %v2554 = vpop.permute.xlu0 %2553
        %s2559 = scalar_lea.vmem %s372, 32 [#allocation5]
        %2560 = vst.msk [vmem:[%s2559] sm:$0xff] %vm412, %v2548
        %2561 = vst.msk [vmem:[%s2559 + $0x8] sm:$0xff] %vm412, %v2550
        %2562 = vst.msk [vmem:[%s2559 + $0x10] sm:$0xff] %vm412, %v2552
        %2563 = vst.msk [vmem:[%s2559 + $0x18] sm:$0xff] %vm412, %v2554
        %v2564 = vld [vmem:[%s475] sm:$0xff]
        %v2565 = vld [vmem:[%s475 + $0x8] sm:$0xff]
        %v2566 = vld [vmem:[%s475 + $0x10] sm:$0xff]
        %v2567 = vld [vmem:[%s475 + $0x18] sm:$0xff]
        %v2568 = vadd.f32 %v2487, %v2564
        %v2569 = vadd.f32 %v2493, %v2565
        %v2570 = vadd.f32 %v2499, %v2566
        %v2571 = vadd.f32 %v2505, %v2567
        %s2572 = scalar_lea.vmem %s372, 64 [#allocation5]
        %2573 = vst.msk [vmem:[%s2572] sm:$0xff] %vm412, %v2568
        %2574 = vst.msk [vmem:[%s2572 + $0x8] sm:$0xff] %vm412, %v2569
        %2575 = vst.msk [vmem:[%s2572 + $0x10] sm:$0xff] %vm412, %v2570
        %2576 = vst.msk [vmem:[%s2572 + $0x18] sm:$0xff] %vm412, %v2571
        %v2577 = vld [vmem:[%s516] sm:$0xff]
        %v2578 = vld [vmem:[%s516 + $0x8] sm:$0xff]
        %v2579 = vld [vmem:[%s516 + $0x10] sm:$0xff]
        %v2580 = vld [vmem:[%s516 + $0x18] sm:$0xff]
        %2585 = vrot.lane.b32.xlu0 %v2577, 64
        %v2586 = vpop.permute.xlu0 %2585
        %2587 = vrot.lane.b32.xlu0 %v2578, 64
        %v2588 = vpop.permute.xlu0 %2587
        %2589 = vrot.lane.b32.xlu0 %v2579, 64
        %v2590 = vpop.permute.xlu0 %2589
        %2591 = vrot.lane.b32.xlu0 %v2580, 64
        %v2592 = vpop.permute.xlu0 %2591
        %v2597 = vadd.f32 %v2487, %v2586
        %v2598 = vadd.f32 %v2493, %v2588
        %v2599 = vadd.f32 %v2499, %v2590
        %v2600 = vadd.f32 %v2505, %v2592
        %2605 = vrot.lane.b32.xlu0 %v2597, 64
        %v2606 = vpop.permute.xlu0 %2605
        %2607 = vrot.lane.b32.xlu0 %v2598, 64
        %v2608 = vpop.permute.xlu0 %2607
        %2609 = vrot.lane.b32.xlu0 %v2599, 64
        %v2610 = vpop.permute.xlu0 %2609
        %2611 = vrot.lane.b32.xlu0 %v2600, 64
        %v2612 = vpop.permute.xlu0 %2611
        %s2617 = scalar_lea.vmem %s372, 96 [#allocation5]
        %2618 = vst.msk [vmem:[%s2617] sm:$0xff] %vm412, %v2606
        %2619 = vst.msk [vmem:[%s2617 + $0x8] sm:$0xff] %vm412, %v2608
        %2620 = vst.msk [vmem:[%s2617 + $0x10] sm:$0xff] %vm412, %v2610
        %2621 = vst.msk [vmem:[%s2617 + $0x18] sm:$0xff] %vm412, %v2612
        %s2622 = sand.u32 %s161, 1
        %s2623 = sand.u32 %s161, 1
        %s2624 = smul.addr %s2623, 128
        %s2625 = scalar_lea.vmem [#allocation5], %s2624
        %s2626 = sand.u32 %s187, 1
        %s2627 = scalar_lea.sflag [#allocation7], %s2626
        %s2628 = sand.u32 %s187, 1
        %s2629 = smul.addr %s2628, 128
        %s2630 = scalar_lea.vmem [#allocation6], %s2629
        // Predicated region
        $region83: #{ms_ssa_conv_forward.1} parent=77 // pred_check
          %p2631 = pneg %p171
        $region84: #{ms_ssa_conv_forward.1} parent=77 // pred_check_branch
          %2633 = sbr.rel (%p2631) target = $region86
        $region85: #{ms_ssa_conv_forward.1} parent=77 // pred_region
          %s2634 = smul.addr %s22, 4
          %s2635 = smul.addr %s2634, 8
          %s2636 = scalar_lea.vmem %s6, %s2635
          // Predicated region
          $region87: #{ms_ssa_conv_forward.1} parent=85 // pred_check
            _
          $region88: #{ms_ssa_conv_forward.1} parent=85 // pred_check_branch
            %2638 = sbr.rel (0) target = $region90
          $region89: #{ms_ssa_conv_forward.1} parent=85 // pred_region
            // Predicated region
            $region91: #{ms_ssa_conv_forward.1} parent=89 // pred_check
              _
            $region92: #{ms_ssa_conv_forward.1} parent=89 // pred_check_branch
              %2640 = sbr.rel (0) target = $region94
            $region93: #{ms_ssa_conv_forward.1} parent=89 // pred_region
              // Predicated region
              $region106: #{ms_ssa_conv_forward.1} parent=93 // pred_check
                _
              $region107: #{ms_ssa_conv_forward.1} parent=93 // pred_check_branch
                %2686 = sbr.rel (0) target = $region109
              $region108: #{ms_ssa_conv_forward.1} parent=93 // pred_region
                loop: start=0, step=1, limit=1
                $region110: #{ms_ssa_conv_forward.1} parent=108 // loop_pre_header
                  _
                $region111: #{ms_ssa_conv_forward.1} parent=108 // loop_header
                  %s2688 = sphi 0, %s2692
                  %p2689 = scmp.ge.s32.totalorder %s2688, 1
                  %s2693 = sphi %s2625, %s2625
                  %s2694 = sphi %s2636, %s2636
                $region112: #{ms_ssa_conv_forward.1} parent=108 // loop_header_branch
                  %2691 = sbr.rel (%p2689) target = $region116
                $region113: #{ms_ssa_conv_forward.1} parent=108 // loop_body
                  %v2695 = vld [vmem:[%s2693] sm:$0xff]
                  %2696 = vst [vmem:[%s2694] sm:$0xff] %v2695
                  %v2697 = vld [vmem:[%s2693 + $0x8] sm:$0xff]
                  %2698 = vst [vmem:[%s2694 + $0x8] sm:$0xff] %v2697
                  %v2699 = vld [vmem:[%s2693 + $0x10] sm:$0xff]
                  %2700 = vst [vmem:[%s2694 + $0x10] sm:$0xff] %v2699
                  %v2701 = vld [vmem:[%s2693 + $0x18] sm:$0xff]
                  %2702 = vst [vmem:[%s2694 + $0x18] sm:$0xff] %v2701
                  %v2703 = vld [vmem:[%s2693 + $0x20] sm:$0xff]
                  %2704 = vst [vmem:[%s2694 + $0x40] sm:$0xff] %v2703
                  %v2705 = vld [vmem:[%s2693 + $0x28] sm:$0xff]
                  %2706 = vst [vmem:[%s2694 + $0x48] sm:$0xff] %v2705
                  %v2707 = vld [vmem:[%s2693 + $0x30] sm:$0xff]
                  %2708 = vst [vmem:[%s2694 + $0x50] sm:$0xff] %v2707
                  %v2709 = vld [vmem:[%s2693 + $0x38] sm:$0xff]
                  %2710 = vst [vmem:[%s2694 + $0x58] sm:$0xff] %v2709
                  %v2711 = vld [vmem:[%s2693 + $0x40] sm:$0xff]
                  %2712 = vst [vmem:[%s2694 + $0x80] sm:$0xff] %v2711
                  %v2713 = vld [vmem:[%s2693 + $0x48] sm:$0xff]
                  %2714 = vst [vmem:[%s2694 + $0x88] sm:$0xff] %v2713
                  %v2715 = vld [vmem:[%s2693 + $0x50] sm:$0xff]
                  %2716 = vst [vmem:[%s2694 + $0x90] sm:$0xff] %v2715
                  %v2717 = vld [vmem:[%s2693 + $0x58] sm:$0xff]
                  %2718 = vst [vmem:[%s2694 + $0x98] sm:$0xff] %v2717
                  %v2719 = vld [vmem:[%s2693 + $0x60] sm:$0xff]
                  %2720 = vst [vmem:[%s2694 + $0xc0] sm:$0xff] %v2719
                  %v2721 = vld [vmem:[%s2693 + $0x68] sm:$0xff]
                  %2722 = vst [vmem:[%s2694 + $0xc8] sm:$0xff] %v2721
                  %v2723 = vld [vmem:[%s2693 + $0x70] sm:$0xff]
                  %2724 = vst [vmem:[%s2694 + $0xd0] sm:$0xff] %v2723
                  %v2725 = vld [vmem:[%s2693 + $0x78] sm:$0xff]
                  %2726 = vst [vmem:[%s2694 + $0xd8] sm:$0xff] %v2725
                $region114: #{ms_ssa_conv_forward.1} parent=108 // loop_footer
                  %s2692 = sadd.s32 1, %s2688
                $region115: #{ms_ssa_conv_forward.1} parent=108 // loop_footer_branch
                  %2687 = sbr.rel target = $region111
                $region116: #{ms_ssa_conv_forward.1} parent=108 // loop_exit
                  _
              $region109: #{ms_ssa_conv_forward.1} parent=93 // pred_fallthru
                _
              // Predicated region
              $region117: #{ms_ssa_conv_forward.1} parent=93 // pred_check
                _
              $region118: #{ms_ssa_conv_forward.1} parent=93 // pred_check_branch
                %2728 = sbr.rel target = $region120
              $region119: #{ms_ssa_conv_forward.1} parent=93 // pred_region
                _
              $region120: #{ms_ssa_conv_forward.1} parent=93 // pred_fallthru
                _
            $region94: #{ms_ssa_conv_forward.1} parent=89 // pred_fallthru
              _
            // Predicated region
            $region95: #{ms_ssa_conv_forward.1} parent=89 // pred_check
              _
            $region96: #{ms_ssa_conv_forward.1} parent=89 // pred_check_branch
              %2642 = sbr.rel target = $region98
            $region97: #{ms_ssa_conv_forward.1} parent=89 // pred_region
              %s2644 = ssub.s32 256, 1
              loop: start=0, step=1, limit=1
              $region99: #{ms_ssa_conv_forward.1} parent=97 // loop_pre_header
                _
              $region100: #{ms_ssa_conv_forward.1} parent=97 // loop_header
                %s2646 = sphi 0, %s2650
                %p2647 = scmp.ge.s32.totalorder %s2646, 1
                %s2651 = sphi %s2625, %s2625
                %s2652 = sphi %s2636, %s2636
              $region101: #{ms_ssa_conv_forward.1} parent=97 // loop_header_branch
                %2649 = sbr.rel (%p2647) target = $region105
              $region102: #{ms_ssa_conv_forward.1} parent=97 // loop_body
                %v2653 = vld [vmem:[%s2651] sm:%s2644]
                %2654 = vst [vmem:[%s2652] sm:%s2644] %v2653
                %v2655 = vld [vmem:[%s2651 + $0x8] sm:%s2644]
                %2656 = vst [vmem:[%s2652 + $0x8] sm:%s2644] %v2655
                %v2657 = vld [vmem:[%s2651 + $0x10] sm:%s2644]
                %2658 = vst [vmem:[%s2652 + $0x10] sm:%s2644] %v2657
                %v2659 = vld [vmem:[%s2651 + $0x18] sm:%s2644]
                %2660 = vst [vmem:[%s2652 + $0x18] sm:%s2644] %v2659
                %v2661 = vld [vmem:[%s2651 + $0x20] sm:%s2644]
                %2662 = vst [vmem:[%s2652 + $0x40] sm:%s2644] %v2661
                %v2663 = vld [vmem:[%s2651 + $0x28] sm:%s2644]
                %2664 = vst [vmem:[%s2652 + $0x48] sm:%s2644] %v2663
                %v2665 = vld [vmem:[%s2651 + $0x30] sm:%s2644]
                %2666 = vst [vmem:[%s2652 + $0x50] sm:%s2644] %v2665
                %v2667 = vld [vmem:[%s2651 + $0x38] sm:%s2644]
                %2668 = vst [vmem:[%s2652 + $0x58] sm:%s2644] %v2667
                %v2669 = vld [vmem:[%s2651 + $0x40] sm:%s2644]
                %2670 = vst [vmem:[%s2652 + $0x80] sm:%s2644] %v2669
                %v2671 = vld [vmem:[%s2651 + $0x48] sm:%s2644]
                %2672 = vst [vmem:[%s2652 + $0x88] sm:%s2644] %v2671
                %v2673 = vld [vmem:[%s2651 + $0x50] sm:%s2644]
                %2674 = vst [vmem:[%s2652 + $0x90] sm:%s2644] %v2673
                %v2675 = vld [vmem:[%s2651 + $0x58] sm:%s2644]
                %2676 = vst [vmem:[%s2652 + $0x98] sm:%s2644] %v2675
                %v2677 = vld [vmem:[%s2651 + $0x60] sm:%s2644]
                %2678 = vst [vmem:[%s2652 + $0xc0] sm:%s2644] %v2677
                %v2679 = vld [vmem:[%s2651 + $0x68] sm:%s2644]
                %2680 = vst [vmem:[%s2652 + $0xc8] sm:%s2644] %v2679
                %v2681 = vld [vmem:[%s2651 + $0x70] sm:%s2644]
                %2682 = vst [vmem:[%s2652 + $0xd0] sm:%s2644] %v2681
                %v2683 = vld [vmem:[%s2651 + $0x78] sm:%s2644]
                %2684 = vst [vmem:[%s2652 + $0xd8] sm:%s2644] %v2683
              $region103: #{ms_ssa_conv_forward.1} parent=97 // loop_footer
                %s2650 = sadd.s32 1, %s2646
              $region104: #{ms_ssa_conv_forward.1} parent=97 // loop_footer_branch
                %2645 = sbr.rel target = $region100
              $region105: #{ms_ssa_conv_forward.1} parent=97 // loop_exit
                _
            $region98: #{ms_ssa_conv_forward.1} parent=89 // pred_fallthru
              _
          $region90: #{ms_ssa_conv_forward.1} parent=85 // pred_fallthru
            _
          %2729 = vnop
        $region86: #{ms_ssa_conv_forward.1} parent=77 // pred_fallthru
          _
        // Predicated region
        $region121: #{ms_ssa_conv_forward.1} parent=77 // pred_check
          %p2730 = pneg %p197
        $region122: #{ms_ssa_conv_forward.1} parent=77 // pred_check_branch
          %2732 = sbr.rel (%p2730) target = $region124
        $region123: #{ms_ssa_conv_forward.1} parent=77 // pred_region
          #allocation9 [shape = 'u32[6]{0}', space=smem, size = 0x18, scoped, tag = 'DMA stride descriptor']
          %s2734 = ssub.s32 2048, 2048
          %2735 = vsyncadd %s2627, %s2734
          %s2736 = smul.addr %s22, 4
          %s2737 = smul.addr %s2736, 128
          %s2738 = scalar_lea.hbm %s7, %s2737
          %s2740 = sshll.u32 1, 14
          %s2741 = sxor.u32 4294967295, %s2740
          %s2744 = sshll.u32 7, 18
          %s2745 = sxor.u32 4294967295, %s2744
          %s2746 = sand.u32 0, %s2745
          %s2748 = sor.u32 %s2746, 0
          %s2749 = sshll.u32 %s2630, 4
          %s2750 = int_to_ptr.vmem [resolvable:$true] %s2749
          %2756 = sst [smem:[#allocation9]] 512
          %s2757 = scalar_lea.smem [#allocation9], 1
          %2758 = sst [smem:[%s2757]] 1024
          %s2759 = scalar_lea.smem [#allocation9], 2
          %2760 = sst [smem:[%s2759]] 4
          %s2761 = scalar_lea.smem [#allocation9], 3
          %2762 = sst [smem:[%s2761]] 128
          %s2763 = scalar_lea.smem [#allocation9], 4
          %2764 = sst [smem:[%s2763]] 128
          %s2765 = scalar_lea.smem [#allocation9], 5
          %2766 = sst [smem:[%s2765]] 8
          %2768 = dma.general %s2750, 2048, %s2738, %s2627, 131072, [#allocation9], %s2748, 0
        $region124: #{ms_ssa_conv_forward.1} parent=77 // pred_fallthru
          _
      $region78: #{ms_ssa_conv_forward.1} parent=5 // pred_fallthru
        _
      %p2769 = scmp.le.s32.totalorder 2, %s17
      // Predicated region
      $region125: #{ms_ssa_conv_forward.1} parent=5 // pred_check
        %p2770 = pneg %p2769
      $region126: #{ms_ssa_conv_forward.1} parent=5 // pred_check_branch
        %2772 = sbr.rel (%p2770) target = $region128
      $region127: #{ms_ssa_conv_forward.1} parent=5 // pred_region
        %s2773 = ssub.s32 %s17, 2
        // Predicated region
        $region129: #{ms_ssa_conv_forward.1} parent=127 // pred_check
          %p2774 = pneg %p177
        $region130: #{ms_ssa_conv_forward.1} parent=127 // pred_check_branch
          %2776 = sbr.rel (%p2774) target = $region132
        $region131: #{ms_ssa_conv_forward.1} parent=127 // pred_region
          %s2777 = sand.u32 %s162, 1
          %s2778 = sand.u32 %s162, 1
          %s2779 = smul.addr %s2778, 128
          %s2780 = scalar_lea.vmem [#allocation5], %s2779
        $region132: #{ms_ssa_conv_forward.1} parent=127 // pred_fallthru
          _
        // Predicated region
        $region133: #{ms_ssa_conv_forward.1} parent=127 // pred_check
          %p2781 = pneg %p203
        $region134: #{ms_ssa_conv_forward.1} parent=127 // pred_check_branch
          %2783 = sbr.rel (%p2781) target = $region136
        $region135: #{ms_ssa_conv_forward.1} parent=127 // pred_region
          %s2784 = sand.u32 %s188, 1
          %s2785 = scalar_lea.sflag [#allocation7], %s2784
          %s2786 = sand.u32 %s188, 1
          %s2787 = smul.addr %s2786, 128
          %s2788 = scalar_lea.vmem [#allocation6], %s2787
          %2789 = dma.done %s2785, 2048
        $region136: #{ms_ssa_conv_forward.1} parent=127 // pred_fallthru
          _
      $region128: #{ms_ssa_conv_forward.1} parent=5 // pred_fallthru
        _
    $region6: #{ms_ssa_conv_forward.1} parent=1 // loop_footer
      %s21 = sadd.s32 1, %s17
    $region7: #{ms_ssa_conv_forward.1} parent=1 // loop_footer_branch
      %16 = sbr.rel target = $region3
    $region8: #{ms_ssa_conv_forward.1} parent=1 // loop_exit
      _
    %2790 = vsyncpa [#allocation7], 1
    %s2791 = scalar_lea.sflag [#allocation7], 1
    %2792 = vsyncpa %s2791, 1

</llo_original>
